<compile_context>
chip_gen: v7x
topology: tpu7x:2x2x1
jax: 0.10.0
libtpu: 0.0.40
codegen_flags: <defaults>
</compile_context>

<pallas_src>
import jax
import jax.numpy as jnp
from jax.experimental import pallas as pl
from jax.experimental.pallas import tpu as pltpu

FILTERED_GENES = 256   # "fliteredGenes" in the original module (chosen small)
CODE_SIZE = 100
CODE_PAD = 128         # code/mu/logvar padded to a full 128-lane width
H1, H2, H3 = 1000, 400, 500
H1P, H2P, H3P = 1024, 512, 512   # lane/MXU-aligned hidden widths


def _vae_kernel(x_ref, eps_ref,
                w1_ref, b1_ref, w2_ref, b2_ref,
                wml_ref, bml_ref,
                w3_ref, b3_ref, w4_ref, b4_ref,
                code_ref, recon_ref, ml_ref):
    # ---- encode (bf16 operands on the MXU, f32 accumulation & elementwise) ----
    x = x_ref[...]                                                     # bf16
    h1 = jnp.maximum(
        jnp.dot(x, w1_ref[...], preferred_element_type=jnp.float32) + b1_ref[...],
        0.0)                                                           # (tb, 1024)
    h2 = jnp.maximum(
        jnp.dot(h1.astype(jnp.bfloat16), w2_ref[...],
                preferred_element_type=jnp.float32) + b2_ref[...],
        0.0)                                                           # (tb, 512)

    # fused fc21|fc22: one (tile_b, 2*CODE_PAD) matmul; cols [0:128)=mu(padded),
    # cols [128:256)=logvar(padded).  Padded lanes are exactly zero.
    ml = jnp.dot(h2.astype(jnp.bfloat16), wml_ref[...],
                 preferred_element_type=jnp.float32) + bml_ref[...]    # (tb, 256)
    mu = ml[:, :CODE_PAD]
    logvar = ml[:, CODE_PAD:]

    # ---- reparametrize (f32; eps padded lanes are zero -> code padding stays 0) ----
    std = jnp.exp(0.5 * logvar)
    code = eps_ref[...] * std + mu

    # ---- decode ----
    h3 = jnp.maximum(
        jnp.dot(code.astype(jnp.bfloat16), w3_ref[...],
                preferred_element_type=jnp.float32) + b3_ref[...],
        0.0)                                                           # (tb, 512)
    recon = jnp.maximum(
        jnp.dot(h3.astype(jnp.bfloat16), w4_ref[...],
                preferred_element_type=jnp.float32) + b4_ref[...],
        0.0)                                                           # (tb, 256)

    code_ref[...] = code
    recon_ref[...] = recon
    ml_ref[...] = ml


def _pad2(a, rows, cols):
    r, c = a.shape
    return jnp.pad(a, ((0, rows - r), (0, cols - c)))


def _pack_params(p):
    """Zero-pad all hidden dims to 128/256 multiples, pad code dim to 128 lanes,
    fuse fc21|fc22 into one matmul, and cast weights to bf16 (biases stay f32)."""
    bf = lambda a: a.astype(jnp.bfloat16)

    wml = jnp.concatenate([_pad2(p["w21"], H2P, CODE_PAD),
                           _pad2(p["w22"], H2P, CODE_PAD)], axis=1)    # (512, 256)
    bml = jnp.concatenate([_pad2(p["b21"], 1, CODE_PAD),
                           _pad2(p["b22"], 1, CODE_PAD)], axis=1)      # (1, 256)

    return dict(
        w1=bf(_pad2(p["w1"], FILTERED_GENES, H1P)), b1=_pad2(p["b1"], 1, H1P),
        w2=bf(_pad2(p["w2"], H1P, H2P)),            b2=_pad2(p["b2"], 1, H2P),
        wml=bf(wml),                                bml=bml,
        w3=bf(_pad2(p["w3"], CODE_PAD, H3P)),       b3=_pad2(p["b3"], 1, H3P),
        w4=bf(_pad2(p["w4"], H3P, FILTERED_GENES)), b4=_pad2(p["b4"], 1, FILTERED_GENES),
    )


def vae_forward(x, eps, params, *, tile_b=256):
    """x: (batch, FILTERED_GENES) f32, eps: (batch, CODE_SIZE) f32.
    params: dict of pre-transposed f32 weights (in,out) and biases (1,out)."""
    batch = x.shape[0]
    kp = _pack_params(params)

    # --- grid shaping ---
    # tile_b=256 fills the 256-row MXU pass (v6e/v7x) and amortizes per-step
    # overhead; cap so that any batch > 128 yields >= 2 grid steps so the
    # "parallel" axis can shard across v7x's two TensorCores.
    rup = lambda a, m: ((a + m - 1) // m) * m
    tile_b = min(tile_b, rup(batch, 8))
    if batch > 128:
        tile_b = min(tile_b, rup((batch + 1) // 2, 128))
    tile_b = max(tile_b, 8)
    n_tiles = (batch + tile_b - 1) // tile_b
    batch_pad = n_tiles * tile_b

    # pad batch to a multiple of tile_b; pad eps to 128 lanes (zeros — required
    # so padded code lanes stay zero, see header note)
    xp = jnp.pad(x, ((0, batch_pad - batch), (0, 0))).astype(jnp.bfloat16)
    epsp = jnp.pad(eps, ((0, batch_pad - batch), (0, CODE_PAD - CODE_SIZE)))

    row_spec = lambda n: pl.BlockSpec((tile_b, n), lambda i: (i, 0))
    # full-array block with a constant index_map: weights/biases stay VMEM
    # resident across all batch tiles (no re-DMA per grid step).
    const_spec = lambda a: pl.BlockSpec(a.shape, lambda i: (0, 0))

    in_specs = [
        row_spec(FILTERED_GENES),          # x tile
        row_spec(CODE_PAD),                # eps tile
        const_spec(kp["w1"]), const_spec(kp["b1"]),
        const_spec(kp["w2"]), const_spec(kp["b2"]),
        const_spec(kp["wml"]), const_spec(kp["bml"]),
        const_spec(kp["w3"]), const_spec(kp["b3"]),
        const_spec(kp["w4"]), const_spec(kp["b4"]),
    ]
    out_specs = (
        row_spec(CODE_PAD),                # code (padded)
        row_spec(FILTERED_GENES),          # recon
        row_spec(2 * CODE_PAD),            # fused mu|logvar block
    )
    out_shapes = (
        jax.ShapeDtypeStruct((batch_pad, CODE_PAD), jnp.float32),
        jax.ShapeDtypeStruct((batch_pad, FILTERED_GENES), jnp.float32),
        jax.ShapeDtypeStruct((batch_pad, 2 * CODE_PAD), jnp.float32),
    )

    code_p, recon_p, ml_p = pl.pallas_call(
        _vae_kernel,
        grid=(n_tiles,),
        out_shape=out_shapes,
        in_specs=in_specs,
        out_specs=out_specs,
        compiler_params=pltpu.CompilerParams(
            dimension_semantics=("parallel",)),
    )(xp, epsp,
      kp["w1"], kp["b1"], kp["w2"], kp["b2"],
      kp["wml"], kp["bml"],
      kp["w3"], kp["b3"], kp["w4"], kp["b4"])

    # TODO(synk): outputs could be stored as bf16 to halve writeback bytes at
    # large batch (v6e roofline), but f32 is kept to match module semantics.
    code = code_p[:batch, :CODE_SIZE]
    recon = recon_p[:batch]
    mu = ml_p[:batch, :CODE_SIZE]
    logvar = ml_p[:batch, CODE_PAD:CODE_PAD + CODE_SIZE]
    return code, recon, mu, logvar


def init_params(key):
    """Deterministic synthetic init, nn.Linear-style scaling (1/sqrt(fan_in))."""
    def linear(k, fan_in, fan_out):
        kw, kb = jax.random.split(k)
        scale = 1.0 / jnp.sqrt(jnp.float32(fan_in))
        w = jax.random.uniform(kw, (fan_in, fan_out), jnp.float32, -scale, scale)
        b = jax.random.uniform(kb, (1, fan_out), jnp.float32, -scale, scale)
        return w, b

    keys = jax.random.split(key, 6)
    p = {}
    p["w1"],  p["b1"]  = linear(keys[0], FILTERED_GENES, H1)
    p["w2"],  p["b2"]  = linear(keys[1], H1, H2)
    p["w21"], p["b21"] = linear(keys[2], H2, CODE_SIZE)
    p["w22"], p["b22"] = linear(keys[3], H2, CODE_SIZE)
    p["w3"],  p["b3"]  = linear(keys[4], CODE_SIZE, H3)
    p["w4"],  p["b4"]  = linear(keys[5], H3, FILTERED_GENES)
    return p


def vae_forward_ref(x, eps, p):
    relu = lambda a: jnp.maximum(a, 0.0)
    h1 = relu(x @ p["w1"] + p["b1"])
    h2 = relu(h1 @ p["w2"] + p["b2"])
    mu = h2 @ p["w21"] + p["b21"]
    logvar = h2 @ p["w22"] + p["b22"]
    code = eps * jnp.exp(0.5 * logvar) + mu
    h3 = relu(code @ p["w3"] + p["b3"])
    recon = relu(h3 @ p["w4"] + p["b4"])
    return code, recon, mu, logvar


if __name__ == "__main__":
    key = jax.random.PRNGKey(0)
    k_params, k_x, k_eps = jax.random.split(key, 3)

    batch = 256   # -> tile_b=128, 2 grid steps (exercises the parallel axis)
    params = init_params(k_params)
    x = jax.random.normal(k_x, (batch, FILTERED_GENES), jnp.float32)
    eps = jax.random.normal(k_eps, (batch, CODE_SIZE), jnp.float32)

    code, recon, mu, logvar = jax.block_until_ready(
        jax.jit(vae_forward)(x, eps, params))

    # sanity check against a pure-JAX f32 reference (bf16 matmuls -> looser tol)
    code_r, recon_r, mu_r, logvar_r = vae_forward_ref(x, eps, params)
    for got, ref in ((code, code_r), (recon, recon_r), (mu, mu_r), (logvar, logvar_r)):
        assert got.shape == ref.shape, (got.shape, ref.shape)
        assert jnp.allclose(got, ref, atol=3e-2, rtol=3e-2), \
            float(jnp.max(jnp.abs(got - ref)))

    print("KERNEL_OK")
</pallas_src>

<mosaic_0001>
module attributes {stable_mosaic.version = 11 : i64} {
  func.func @_vae_kernel(%arg0: i32, %arg1: memref<128x256xbf16, #tpu.memory_space<vmem>>, %arg2: memref<128x128xf32, #tpu.memory_space<vmem>>, %arg3: memref<256x1024xbf16, #tpu.memory_space<vmem>>, %arg4: memref<1x1024xf32, #tpu.memory_space<vmem>>, %arg5: memref<1024x512xbf16, #tpu.memory_space<vmem>>, %arg6: memref<1x512xf32, #tpu.memory_space<vmem>>, %arg7: memref<512x256xbf16, #tpu.memory_space<vmem>>, %arg8: memref<1x256xf32, #tpu.memory_space<vmem>>, %arg9: memref<128x512xbf16, #tpu.memory_space<vmem>>, %arg10: memref<1x512xf32, #tpu.memory_space<vmem>>, %arg11: memref<512x256xbf16, #tpu.memory_space<vmem>>, %arg12: memref<1x256xf32, #tpu.memory_space<vmem>>, %arg13: memref<128x128xf32, #tpu.memory_space<vmem>>, %arg14: memref<128x256xf32, #tpu.memory_space<vmem>>, %arg15: memref<128x256xf32, #tpu.memory_space<vmem>>) attributes {dimension_semantics = [#tpu.dimension_semantics<parallel>], iteration_bounds = array<i64: 2>, scalar_prefetch = 0 : i64, scratch_operands = 0 : i64, tpu.core_type = #tpu.core_type<tc>, window_params = [{transform_indices = @transform_0, window_bounds = array<i64: 128, 256>}, {transform_indices = @transform_1, window_bounds = array<i64: 128, 128>}, {pipeline_mode = #tpu.pipeline_mode<synchronous>, transform_indices = @transform_2, window_bounds = array<i64: 256, 1024>}, {pipeline_mode = #tpu.pipeline_mode<synchronous>, transform_indices = @transform_3, window_bounds = array<i64: 1, 1024>}, {pipeline_mode = #tpu.pipeline_mode<synchronous>, transform_indices = @transform_4, window_bounds = array<i64: 1024, 512>}, {pipeline_mode = #tpu.pipeline_mode<synchronous>, transform_indices = @transform_5, window_bounds = array<i64: 1, 512>}, {pipeline_mode = #tpu.pipeline_mode<synchronous>, transform_indices = @transform_6, window_bounds = array<i64: 512, 256>}, {pipeline_mode = #tpu.pipeline_mode<synchronous>, transform_indices = @transform_7, window_bounds = array<i64: 1, 256>}, {pipeline_mode = #tpu.pipeline_mode<synchronous>, transform_indices = @transform_8, window_bounds = array<i64: 128, 512>}, {pipeline_mode = #tpu.pipeline_mode<synchronous>, transform_indices = @transform_9, window_bounds = array<i64: 1, 512>}, {pipeline_mode = #tpu.pipeline_mode<synchronous>, transform_indices = @transform_10, window_bounds = array<i64: 512, 256>}, {pipeline_mode = #tpu.pipeline_mode<synchronous>, transform_indices = @transform_11, window_bounds = array<i64: 1, 256>}, {transform_indices = @transform_12, window_bounds = array<i64: 128, 128>}, {transform_indices = @transform_13, window_bounds = array<i64: 128, 256>}, {transform_indices = @transform_14, window_bounds = array<i64: 128, 256>}]} {
    %c0 = arith.constant 0 : index
    %c0_0 = arith.constant 0 : index
    %0 = vector.load %arg1[%c0, %c0_0] : memref<128x256xbf16, #tpu.memory_space<vmem>>, vector<128x256xbf16>
    %c0_1 = arith.constant 0 : index
    %c0_2 = arith.constant 0 : index
    %1 = vector.load %arg3[%c0_1, %c0_2] : memref<256x1024xbf16, #tpu.memory_space<vmem>>, vector<256x1024xbf16>
    %cst = arith.constant dense<0.000000e+00> : vector<128x1024xf32>
    %2 = tpu.matmul %0, %1, %cst {dimension_numbers = #tpu.dot_dimension_numbers<[1], [0], [0], [1], [0, 0, 1, 1], [], []>} : vector<128x256xbf16>, vector<256x1024xbf16>, vector<128x1024xf32> -> vector<128x1024xf32>
    %c0_3 = arith.constant 0 : index
    %c0_4 = arith.constant 0 : index
    %3 = vector.load %arg4[%c0_3, %c0_4] : memref<1x1024xf32, #tpu.memory_space<vmem>>, vector<1x1024xf32>
    %4 = vector.broadcast %3 : vector<1x1024xf32> to vector<128x1024xf32>
    %5 = arith.addf %2, %4 : vector<128x1024xf32>
    %cst_5 = arith.constant 0.000000e+00 : f32
    %6 = vector.broadcast %cst_5 : f32 to vector<128x1024xf32>
    %7 = arith.maximumf %5, %6 : vector<128x1024xf32>
    %8 = arith.truncf %7 : vector<128x1024xf32> to vector<128x1024xbf16>
    %c0_6 = arith.constant 0 : index
    %c0_7 = arith.constant 0 : index
    %9 = vector.load %arg5[%c0_6, %c0_7] : memref<1024x512xbf16, #tpu.memory_space<vmem>>, vector<1024x512xbf16>
    %cst_8 = arith.constant dense<0.000000e+00> : vector<128x512xf32>
    %10 = tpu.matmul %8, %9, %cst_8 {dimension_numbers = #tpu.dot_dimension_numbers<[1], [0], [0], [1], [0, 0, 1, 1], [], []>} : vector<128x1024xbf16>, vector<1024x512xbf16>, vector<128x512xf32> -> vector<128x512xf32>
    %c0_9 = arith.constant 0 : index
    %c0_10 = arith.constant 0 : index
    %11 = vector.load %arg6[%c0_9, %c0_10] : memref<1x512xf32, #tpu.memory_space<vmem>>, vector<1x512xf32>
    %12 = vector.broadcast %11 : vector<1x512xf32> to vector<128x512xf32>
    %13 = arith.addf %10, %12 : vector<128x512xf32>
    %cst_11 = arith.constant 0.000000e+00 : f32
    %14 = vector.broadcast %cst_11 : f32 to vector<128x512xf32>
    %15 = arith.maximumf %13, %14 : vector<128x512xf32>
    %16 = arith.truncf %15 : vector<128x512xf32> to vector<128x512xbf16>
    %c0_12 = arith.constant 0 : index
    %c0_13 = arith.constant 0 : index
    %17 = vector.load %arg7[%c0_12, %c0_13] : memref<512x256xbf16, #tpu.memory_space<vmem>>, vector<512x256xbf16>
    %cst_14 = arith.constant dense<0.000000e+00> : vector<128x256xf32>
    %18 = tpu.matmul %16, %17, %cst_14 {dimension_numbers = #tpu.dot_dimension_numbers<[1], [0], [0], [1], [0, 0, 1, 1], [], []>} : vector<128x512xbf16>, vector<512x256xbf16>, vector<128x256xf32> -> vector<128x256xf32>
    %c0_15 = arith.constant 0 : index
    %c0_16 = arith.constant 0 : index
    %19 = vector.load %arg8[%c0_15, %c0_16] : memref<1x256xf32, #tpu.memory_space<vmem>>, vector<1x256xf32>
    %20 = vector.broadcast %19 : vector<1x256xf32> to vector<128x256xf32>
    %21 = arith.addf %18, %20 : vector<128x256xf32>
    %22 = vector.extract_strided_slice %21 {offsets = [0, 0], sizes = [128, 128], strides = [1, 1]} : vector<128x256xf32> to vector<128x128xf32>
    %23 = vector.extract_strided_slice %21 {offsets = [0, 128], sizes = [128, 128], strides = [1, 1]} : vector<128x256xf32> to vector<128x128xf32>
    %cst_17 = arith.constant 5.000000e-01 : f32
    %24 = vector.broadcast %cst_17 : f32 to vector<128x128xf32>
    %25 = arith.mulf %24, %23 : vector<128x128xf32>
    %26 = math.exp %25 : vector<128x128xf32>
    %c0_18 = arith.constant 0 : index
    %c0_19 = arith.constant 0 : index
    %27 = vector.load %arg2[%c0_18, %c0_19] : memref<128x128xf32, #tpu.memory_space<vmem>>, vector<128x128xf32>
    %28 = arith.mulf %27, %26 : vector<128x128xf32>
    %29 = arith.addf %28, %22 : vector<128x128xf32>
    %30 = arith.truncf %29 : vector<128x128xf32> to vector<128x128xbf16>
    %c0_20 = arith.constant 0 : index
    %c0_21 = arith.constant 0 : index
    %31 = vector.load %arg9[%c0_20, %c0_21] : memref<128x512xbf16, #tpu.memory_space<vmem>>, vector<128x512xbf16>
    %cst_22 = arith.constant dense<0.000000e+00> : vector<128x512xf32>
    %32 = tpu.matmul %30, %31, %cst_22 {dimension_numbers = #tpu.dot_dimension_numbers<[1], [0], [0], [1], [0, 0, 1, 1], [], []>} : vector<128x128xbf16>, vector<128x512xbf16>, vector<128x512xf32> -> vector<128x512xf32>
    %c0_23 = arith.constant 0 : index
    %c0_24 = arith.constant 0 : index
    %33 = vector.load %arg10[%c0_23, %c0_24] : memref<1x512xf32, #tpu.memory_space<vmem>>, vector<1x512xf32>
    %34 = vector.broadcast %33 : vector<1x512xf32> to vector<128x512xf32>
    %35 = arith.addf %32, %34 : vector<128x512xf32>
    %cst_25 = arith.constant 0.000000e+00 : f32
    %36 = vector.broadcast %cst_25 : f32 to vector<128x512xf32>
    %37 = arith.maximumf %35, %36 : vector<128x512xf32>
    %38 = arith.truncf %37 : vector<128x512xf32> to vector<128x512xbf16>
    %c0_26 = arith.constant 0 : index
    %c0_27 = arith.constant 0 : index
    %39 = vector.load %arg11[%c0_26, %c0_27] : memref<512x256xbf16, #tpu.memory_space<vmem>>, vector<512x256xbf16>
    %cst_28 = arith.constant dense<0.000000e+00> : vector<128x256xf32>
    %40 = tpu.matmul %38, %39, %cst_28 {dimension_numbers = #tpu.dot_dimension_numbers<[1], [0], [0], [1], [0, 0, 1, 1], [], []>} : vector<128x512xbf16>, vector<512x256xbf16>, vector<128x256xf32> -> vector<128x256xf32>
    %c0_29 = arith.constant 0 : index
    %c0_30 = arith.constant 0 : index
    %41 = vector.load %arg12[%c0_29, %c0_30] : memref<1x256xf32, #tpu.memory_space<vmem>>, vector<1x256xf32>
    %42 = vector.broadcast %41 : vector<1x256xf32> to vector<128x256xf32>
    %43 = arith.addf %40, %42 : vector<128x256xf32>
    %cst_31 = arith.constant 0.000000e+00 : f32
    %44 = vector.broadcast %cst_31 : f32 to vector<128x256xf32>
    %45 = arith.maximumf %43, %44 : vector<128x256xf32>
    %c0_32 = arith.constant 0 : index
    %c0_33 = arith.constant 0 : index
    %46 = vector.load %arg13[%c0_32, %c0_33] : memref<128x128xf32, #tpu.memory_space<vmem>>, vector<128x128xf32>
    tpu.vector_store %arg13[%c0_32, %c0_33], %29 {strides = array<i32>} : memref<128x128xf32, #tpu.memory_space<vmem>>, vector<128x128xf32>,
    %c0_34 = arith.constant 0 : index
    %c0_35 = arith.constant 0 : index
    %47 = vector.load %arg14[%c0_34, %c0_35] : memref<128x256xf32, #tpu.memory_space<vmem>>, vector<128x256xf32>
    tpu.vector_store %arg14[%c0_34, %c0_35], %45 {strides = array<i32>} : memref<128x256xf32, #tpu.memory_space<vmem>>, vector<128x256xf32>,
    %c0_36 = arith.constant 0 : index
    %c0_37 = arith.constant 0 : index
    %48 = vector.load %arg15[%c0_36, %c0_37] : memref<128x256xf32, #tpu.memory_space<vmem>>, vector<128x256xf32>
    tpu.vector_store %arg15[%c0_36, %c0_37], %21 {strides = array<i32>} : memref<128x256xf32, #tpu.memory_space<vmem>>, vector<128x256xf32>,
    return
  }
  func.func @transform_0(%arg0: i32) -> (i32, i32) {
    %c0_i32 = arith.constant 0 : i32
    %c0_i32_0 = arith.constant 0 : i32
    return %arg0, %c0_i32 : i32, i32
  }
  func.func @transform_1(%arg0: i32) -> (i32, i32) {
    %c0_i32 = arith.constant 0 : i32
    %c0_i32_0 = arith.constant 0 : i32
    return %arg0, %c0_i32 : i32, i32
  }
  func.func @transform_2(%arg0: i32) -> (i32, i32) {
    %c0_i32 = arith.constant 0 : i32
    %c0_i32_0 = arith.constant 0 : i32
    %c0_i32_1 = arith.constant 0 : i32
    return %c0_i32, %c0_i32_0 : i32, i32
  }
  func.func @transform_3(%arg0: i32) -> (i32, i32) {
    %c0_i32 = arith.constant 0 : i32
    %c0_i32_0 = arith.constant 0 : i32
    %c0_i32_1 = arith.constant 0 : i32
    return %c0_i32, %c0_i32_0 : i32, i32
  }
  func.func @transform_4(%arg0: i32) -> (i32, i32) {
    %c0_i32 = arith.constant 0 : i32
    %c0_i32_0 = arith.constant 0 : i32
    %c0_i32_1 = arith.constant 0 : i32
    return %c0_i32, %c0_i32_0 : i32, i32
  }
  func.func @transform_5(%arg0: i32) -> (i32, i32) {
    %c0_i32 = arith.constant 0 : i32
    %c0_i32_0 = arith.constant 0 : i32
    %c0_i32_1 = arith.constant 0 : i32
    return %c0_i32, %c0_i32_0 : i32, i32
  }
  func.func @transform_6(%arg0: i32) -> (i32, i32) {
    %c0_i32 = arith.constant 0 : i32
    %c0_i32_0 = arith.constant 0 : i32
    %c0_i32_1 = arith.constant 0 : i32
    return %c0_i32, %c0_i32_0 : i32, i32
  }
  func.func @transform_7(%arg0: i32) -> (i32, i32) {
    %c0_i32 = arith.constant 0 : i32
    %c0_i32_0 = arith.constant 0 : i32
    %c0_i32_1 = arith.constant 0 : i32
    return %c0_i32, %c0_i32_0 : i32, i32
  }
  func.func @transform_8(%arg0: i32) -> (i32, i32) {
    %c0_i32 = arith.constant 0 : i32
    %c0_i32_0 = arith.constant 0 : i32
    %c0_i32_1 = arith.constant 0 : i32
    return %c0_i32, %c0_i32_0 : i32, i32
  }
  func.func @transform_9(%arg0: i32) -> (i32, i32) {
    %c0_i32 = arith.constant 0 : i32
    %c0_i32_0 = arith.constant 0 : i32
    %c0_i32_1 = arith.constant 0 : i32
    return %c0_i32, %c0_i32_0 : i32, i32
  }
  func.func @transform_10(%arg0: i32) -> (i32, i32) {
    %c0_i32 = arith.constant 0 : i32
    %c0_i32_0 = arith.constant 0 : i32
    %c0_i32_1 = arith.constant 0 : i32
    return %c0_i32, %c0_i32_0 : i32, i32
  }
  func.func @transform_11(%arg0: i32) -> (i32, i32) {
    %c0_i32 = arith.constant 0 : i32
    %c0_i32_0 = arith.constant 0 : i32
    %c0_i32_1 = arith.constant 0 : i32
    return %c0_i32, %c0_i32_0 : i32, i32
  }
  func.func @transform_12(%arg0: i32) -> (i32, i32) {
    %c0_i32 = arith.constant 0 : i32
    %c0_i32_0 = arith.constant 0 : i32
    return %arg0, %c0_i32 : i32, i32
  }
  func.func @transform_13(%arg0: i32) -> (i32, i32) {
    %c0_i32 = arith.constant 0 : i32
    %c0_i32_0 = arith.constant 0 : i32
    return %arg0, %c0_i32 : i32, i32
  }
  func.func @transform_14(%arg0: i32) -> (i32, i32) {
    %c0_i32 = arith.constant 0 : i32
    %c0_i32_0 = arith.constant 0 : i32
    return %arg0, %c0_i32 : i32, i32
  }
}

</mosaic_0001>

<llo_original>
// kernel: vae_forward.1
$region0: #{vae_forward.1}
  #allocation0 [shape = 'u32[]', space=smem, size = 0x4, offset = 0x4, fixed_abs, tag = 'smem constant byte address 0x4 - core index']
  #allocation1 [shape = 'u32[144,128]{1,0:T(1,128)}', space=vmem, size = 0x12000, scoped, tag = 'internal scratch']
  %s0 = inlined_call_operand.vmem [shape: bf16[256,256], index: 0, kind: input, shape index: {}]
  %s1 = inlined_call_operand.vmem [shape: f32[256,128], index: 1, kind: input, shape index: {}]
  %s2 = inlined_call_operand.vmem [shape: bf16[256,1024], index: 2, kind: input, shape index: {}]
  %s3 = inlined_call_operand.vmem [shape: f32[1,1024], index: 3, kind: input, shape index: {}]
  %s4 = inlined_call_operand.vmem [shape: bf16[1024,512], index: 4, kind: input, shape index: {}]
  %s5 = inlined_call_operand.vmem [shape: f32[1,512], index: 5, kind: input, shape index: {}]
  %s6 = inlined_call_operand.vmem [shape: bf16[512,256], index: 6, kind: input, shape index: {}]
  %s7 = inlined_call_operand.vmem [shape: f32[1,256], index: 7, kind: input, shape index: {}]
  %s8 = inlined_call_operand.vmem [shape: bf16[128,512], index: 8, kind: input, shape index: {}]
  %s9 = inlined_call_operand.vmem [shape: f32[1,512], index: 9, kind: input, shape index: {}]
  %s10 = inlined_call_operand.vmem [shape: bf16[512,256], index: 10, kind: input, shape index: {}]
  %s11 = inlined_call_operand.vmem [shape: f32[1,256], index: 11, kind: input, shape index: {}]
  %s12 = inlined_call_operand.vmem [shape: f32[256,128], index: 12, kind: output, shape index: {0}]
  %s13 = inlined_call_operand.hbm [shape: f32[256,256], index: 13, kind: output, shape index: {1}]
  %s14 = inlined_call_operand.vmem [shape: f32[256,256], index: 14, kind: output, shape index: {2}]
  %15 = xla_tuple %s12, %s13, %s14
  %s16 = sld [smem:[#allocation0]]
  $region97: #{vae_forward.1} parent=0
    _
  %s18 = ssub.s32 1, %s16
  %s19 = scalar_select 0, %s18, %s16
  $region1: #{vae_forward.1} parent=0
    #allocation2 [shape = 'u8[262144]{0}', space=vmem, size = 0x40000, scoped, tag = 'output window, operand 1']
    #allocation3 [shape = 's32[2]{0}', space=sflag, size = 0x8, scoped, tag = 'scoped memory for vae_forward.1']
    %20 = vsyncpa [#allocation3], 0
    %s21 = scalar_lea.sflag [#allocation3], 1
    %22 = vsyncpa %s21, 0
    loop: start=0, step=1, limit=4
    $region2: #{vae_forward.1} parent=1 // loop_pre_header
      _
    $region3: #{vae_forward.1} parent=1 // loop_header
      %s24 = sphi 0, %s28
      %p25 = scmp.ge.s32.totalorder %s24, 4
      %s34 = sphi 0, %s36
      %s37 = sphi 0, %s34
      %s38 = sphi 0, %s37
      %s54 = sphi 0, %s38
      %s60 = sphi 0, %s62
      %s63 = sphi 0, %s60
      %s64 = sphi 0, %s63
      %s80 = sphi 0, %s64
      %s84 = sphi 0, %s84
      %s86 = sphi 0, %s84
      %s87 = sphi 0, %s86
      %s101 = sphi 0, %s87
      %s105 = sphi 0, %s105
      %s107 = sphi 0, %s105
      %s108 = sphi 0, %s107
      %s122 = sphi 0, %s108
      %s126 = sphi 0, %s126
      %s128 = sphi 0, %s126
      %s129 = sphi 0, %s128
      %s143 = sphi 0, %s129
      %s147 = sphi 0, %s147
      %s149 = sphi 0, %s147
      %s150 = sphi 0, %s149
      %s164 = sphi 0, %s150
      %s168 = sphi 0, %s168
      %s170 = sphi 0, %s168
      %s171 = sphi 0, %s170
      %s185 = sphi 0, %s171
      %s189 = sphi 0, %s189
      %s191 = sphi 0, %s189
      %s192 = sphi 0, %s191
      %s206 = sphi 0, %s192
      %s210 = sphi 0, %s210
      %s212 = sphi 0, %s210
      %s213 = sphi 0, %s212
      %s227 = sphi 0, %s213
      %s231 = sphi 0, %s231
      %s233 = sphi 0, %s231
      %s234 = sphi 0, %s233
      %s248 = sphi 0, %s234
      %s252 = sphi 0, %s252
      %s254 = sphi 0, %s252
      %s255 = sphi 0, %s254
      %s269 = sphi 0, %s255
      %s273 = sphi 0, %s273
      %s275 = sphi 0, %s273
      %s276 = sphi 0, %s275
      %s290 = sphi 0, %s276
      %s296 = sphi 0, %s298
      %s299 = sphi 0, %s296
      %s300 = sphi 0, %s299
      %s316 = sphi 0, %s300
      %s322 = sphi 0, %s324
      %s325 = sphi 0, %s322
      %s326 = sphi 0, %s325
      %s342 = sphi 0, %s326
      %s348 = sphi 0, %s350
      %s351 = sphi 0, %s348
      %s352 = sphi 0, %s351
      %s368 = sphi 0, %s352
    $region4: #{vae_forward.1} parent=1 // loop_header_branch
      %27 = sbr.rel (%p25) target = $region8
    $region5: #{vae_forward.1} parent=1 // loop_body
      %s29 = ssub.s32 %s24, 1
      %s30 = ssub.s32 %s24, 2
      %s31 = sadd.s32 %s24, 1
      %s32 = ssub.s32 %s24, %s31
      %p33 = scmp.eq.s32.totalorder %s32, 0
      %s35 = sadd.s32 %s34, 1
      %s36 = scalar_select %p33, %s34, %s35
      %p39 = pneg %p33
      %p40 = scmp.eq.s32.totalorder %s24, 1
      %p41 = por %p39, %p40
      %p42 = scmp.ne.s32.totalorder %s34, %s37
      %p43 = scmp.eq.s32.totalorder %s24, 0
      %p44 = por %p42, %p43
      %p45 = scmp.ne.s32.totalorder %s34, %s37
      %p46 = scmp.eq.s32.totalorder %s29, 1
      %p47 = por %p45, %p46
      %p48 = scmp.ne.s32.totalorder %s37, %s38
      %p49 = scmp.eq.s32.totalorder %s29, 0
      %p50 = por %p48, %p49
      %p51 = scmp.ne.s32.totalorder %s37, %s38
      %p52 = scmp.eq.s32.totalorder %s30, 1
      %p53 = por %p51, %p52
      %p55 = scmp.ne.s32.totalorder %s38, %s54
      %p56 = scmp.eq.s32.totalorder %s30, 0
      %p57 = por %p55, %p56
      %s58 = ssub.s32 %s24, %s31
      %p59 = scmp.eq.s32.totalorder %s58, 0
      %s61 = sadd.s32 %s60, 1
      %s62 = scalar_select %p59, %s60, %s61
      %p65 = pneg %p59
      %p66 = scmp.eq.s32.totalorder %s24, 1
      %p67 = por %p65, %p66
      %p68 = scmp.ne.s32.totalorder %s60, %s63
      %p69 = scmp.eq.s32.totalorder %s24, 0
      %p70 = por %p68, %p69
      %p71 = scmp.ne.s32.totalorder %s60, %s63
      %p72 = scmp.eq.s32.totalorder %s29, 1
      %p73 = por %p71, %p72
      %p74 = scmp.ne.s32.totalorder %s63, %s64
      %p75 = scmp.eq.s32.totalorder %s29, 0
      %p76 = por %p74, %p75
      %p77 = scmp.ne.s32.totalorder %s63, %s64
      %p78 = scmp.eq.s32.totalorder %s30, 1
      %p79 = por %p77, %p78
      %p81 = scmp.ne.s32.totalorder %s64, %s80
      %p82 = scmp.eq.s32.totalorder %s30, 0
      %p83 = por %p81, %p82
      %s85 = sadd.s32 %s84, 1
      %p88 = scmp.eq.s32.totalorder %s24, 1
      %p89 = scmp.ne.s32.totalorder %s84, %s86
      %p90 = scmp.eq.s32.totalorder %s24, 0
      %p91 = por %p89, %p90
      %p92 = scmp.ne.s32.totalorder %s84, %s86
      %p93 = scmp.eq.s32.totalorder %s29, 1
      %p94 = por %p92, %p93
      %p95 = scmp.ne.s32.totalorder %s86, %s87
      %p96 = scmp.eq.s32.totalorder %s29, 0
      %p97 = por %p95, %p96
      %p98 = scmp.ne.s32.totalorder %s86, %s87
      %p99 = scmp.eq.s32.totalorder %s30, 1
      %p100 = por %p98, %p99
      %p102 = scmp.ne.s32.totalorder %s87, %s101
      %p103 = scmp.eq.s32.totalorder %s30, 0
      %p104 = por %p102, %p103
      %s106 = sadd.s32 %s105, 1
      %p109 = scmp.eq.s32.totalorder %s24, 1
      %p110 = scmp.ne.s32.totalorder %s105, %s107
      %p111 = scmp.eq.s32.totalorder %s24, 0
      %p112 = por %p110, %p111
      %p113 = scmp.ne.s32.totalorder %s105, %s107
      %p114 = scmp.eq.s32.totalorder %s29, 1
      %p115 = por %p113, %p114
      %p116 = scmp.ne.s32.totalorder %s107, %s108
      %p117 = scmp.eq.s32.totalorder %s29, 0
      %p118 = por %p116, %p117
      %p119 = scmp.ne.s32.totalorder %s107, %s108
      %p120 = scmp.eq.s32.totalorder %s30, 1
      %p121 = por %p119, %p120
      %p123 = scmp.ne.s32.totalorder %s108, %s122
      %p124 = scmp.eq.s32.totalorder %s30, 0
      %p125 = por %p123, %p124
      %s127 = sadd.s32 %s126, 1
      %p130 = scmp.eq.s32.totalorder %s24, 1
      %p131 = scmp.ne.s32.totalorder %s126, %s128
      %p132 = scmp.eq.s32.totalorder %s24, 0
      %p133 = por %p131, %p132
      %p134 = scmp.ne.s32.totalorder %s126, %s128
      %p135 = scmp.eq.s32.totalorder %s29, 1
      %p136 = por %p134, %p135
      %p137 = scmp.ne.s32.totalorder %s128, %s129
      %p138 = scmp.eq.s32.totalorder %s29, 0
      %p139 = por %p137, %p138
      %p140 = scmp.ne.s32.totalorder %s128, %s129
      %p141 = scmp.eq.s32.totalorder %s30, 1
      %p142 = por %p140, %p141
      %p144 = scmp.ne.s32.totalorder %s129, %s143
      %p145 = scmp.eq.s32.totalorder %s30, 0
      %p146 = por %p144, %p145
      %s148 = sadd.s32 %s147, 1
      %p151 = scmp.eq.s32.totalorder %s24, 1
      %p152 = scmp.ne.s32.totalorder %s147, %s149
      %p153 = scmp.eq.s32.totalorder %s24, 0
      %p154 = por %p152, %p153
      %p155 = scmp.ne.s32.totalorder %s147, %s149
      %p156 = scmp.eq.s32.totalorder %s29, 1
      %p157 = por %p155, %p156
      %p158 = scmp.ne.s32.totalorder %s149, %s150
      %p159 = scmp.eq.s32.totalorder %s29, 0
      %p160 = por %p158, %p159
      %p161 = scmp.ne.s32.totalorder %s149, %s150
      %p162 = scmp.eq.s32.totalorder %s30, 1
      %p163 = por %p161, %p162
      %p165 = scmp.ne.s32.totalorder %s150, %s164
      %p166 = scmp.eq.s32.totalorder %s30, 0
      %p167 = por %p165, %p166
      %s169 = sadd.s32 %s168, 1
      %p172 = scmp.eq.s32.totalorder %s24, 1
      %p173 = scmp.ne.s32.totalorder %s168, %s170
      %p174 = scmp.eq.s32.totalorder %s24, 0
      %p175 = por %p173, %p174
      %p176 = scmp.ne.s32.totalorder %s168, %s170
      %p177 = scmp.eq.s32.totalorder %s29, 1
      %p178 = por %p176, %p177
      %p179 = scmp.ne.s32.totalorder %s170, %s171
      %p180 = scmp.eq.s32.totalorder %s29, 0
      %p181 = por %p179, %p180
      %p182 = scmp.ne.s32.totalorder %s170, %s171
      %p183 = scmp.eq.s32.totalorder %s30, 1
      %p184 = por %p182, %p183
      %p186 = scmp.ne.s32.totalorder %s171, %s185
      %p187 = scmp.eq.s32.totalorder %s30, 0
      %p188 = por %p186, %p187
      %s190 = sadd.s32 %s189, 1
      %p193 = scmp.eq.s32.totalorder %s24, 1
      %p194 = scmp.ne.s32.totalorder %s189, %s191
      %p195 = scmp.eq.s32.totalorder %s24, 0
      %p196 = por %p194, %p195
      %p197 = scmp.ne.s32.totalorder %s189, %s191
      %p198 = scmp.eq.s32.totalorder %s29, 1
      %p199 = por %p197, %p198
      %p200 = scmp.ne.s32.totalorder %s191, %s192
      %p201 = scmp.eq.s32.totalorder %s29, 0
      %p202 = por %p200, %p201
      %p203 = scmp.ne.s32.totalorder %s191, %s192
      %p204 = scmp.eq.s32.totalorder %s30, 1
      %p205 = por %p203, %p204
      %p207 = scmp.ne.s32.totalorder %s192, %s206
      %p208 = scmp.eq.s32.totalorder %s30, 0
      %p209 = por %p207, %p208
      %s211 = sadd.s32 %s210, 1
      %p214 = scmp.eq.s32.totalorder %s24, 1
      %p215 = scmp.ne.s32.totalorder %s210, %s212
      %p216 = scmp.eq.s32.totalorder %s24, 0
      %p217 = por %p215, %p216
      %p218 = scmp.ne.s32.totalorder %s210, %s212
      %p219 = scmp.eq.s32.totalorder %s29, 1
      %p220 = por %p218, %p219
      %p221 = scmp.ne.s32.totalorder %s212, %s213
      %p222 = scmp.eq.s32.totalorder %s29, 0
      %p223 = por %p221, %p222
      %p224 = scmp.ne.s32.totalorder %s212, %s213
      %p225 = scmp.eq.s32.totalorder %s30, 1
      %p226 = por %p224, %p225
      %p228 = scmp.ne.s32.totalorder %s213, %s227
      %p229 = scmp.eq.s32.totalorder %s30, 0
      %p230 = por %p228, %p229
      %s232 = sadd.s32 %s231, 1
      %p235 = scmp.eq.s32.totalorder %s24, 1
      %p236 = scmp.ne.s32.totalorder %s231, %s233
      %p237 = scmp.eq.s32.totalorder %s24, 0
      %p238 = por %p236, %p237
      %p239 = scmp.ne.s32.totalorder %s231, %s233
      %p240 = scmp.eq.s32.totalorder %s29, 1
      %p241 = por %p239, %p240
      %p242 = scmp.ne.s32.totalorder %s233, %s234
      %p243 = scmp.eq.s32.totalorder %s29, 0
      %p244 = por %p242, %p243
      %p245 = scmp.ne.s32.totalorder %s233, %s234
      %p246 = scmp.eq.s32.totalorder %s30, 1
      %p247 = por %p245, %p246
      %p249 = scmp.ne.s32.totalorder %s234, %s248
      %p250 = scmp.eq.s32.totalorder %s30, 0
      %p251 = por %p249, %p250
      %s253 = sadd.s32 %s252, 1
      %p256 = scmp.eq.s32.totalorder %s24, 1
      %p257 = scmp.ne.s32.totalorder %s252, %s254
      %p258 = scmp.eq.s32.totalorder %s24, 0
      %p259 = por %p257, %p258
      %p260 = scmp.ne.s32.totalorder %s252, %s254
      %p261 = scmp.eq.s32.totalorder %s29, 1
      %p262 = por %p260, %p261
      %p263 = scmp.ne.s32.totalorder %s254, %s255
      %p264 = scmp.eq.s32.totalorder %s29, 0
      %p265 = por %p263, %p264
      %p266 = scmp.ne.s32.totalorder %s254, %s255
      %p267 = scmp.eq.s32.totalorder %s30, 1
      %p268 = por %p266, %p267
      %p270 = scmp.ne.s32.totalorder %s255, %s269
      %p271 = scmp.eq.s32.totalorder %s30, 0
      %p272 = por %p270, %p271
      %s274 = sadd.s32 %s273, 1
      %p277 = scmp.eq.s32.totalorder %s24, 1
      %p278 = scmp.ne.s32.totalorder %s273, %s275
      %p279 = scmp.eq.s32.totalorder %s24, 0
      %p280 = por %p278, %p279
      %p281 = scmp.ne.s32.totalorder %s273, %s275
      %p282 = scmp.eq.s32.totalorder %s29, 1
      %p283 = por %p281, %p282
      %p284 = scmp.ne.s32.totalorder %s275, %s276
      %p285 = scmp.eq.s32.totalorder %s29, 0
      %p286 = por %p284, %p285
      %p287 = scmp.ne.s32.totalorder %s275, %s276
      %p288 = scmp.eq.s32.totalorder %s30, 1
      %p289 = por %p287, %p288
      %p291 = scmp.ne.s32.totalorder %s276, %s290
      %p292 = scmp.eq.s32.totalorder %s30, 0
      %p293 = por %p291, %p292
      %s294 = ssub.s32 %s24, %s31
      %p295 = scmp.eq.s32.totalorder %s294, 0
      %s297 = sadd.s32 %s296, 1
      %s298 = scalar_select %p295, %s296, %s297
      %p301 = pneg %p295
      %p302 = scmp.eq.s32.totalorder %s24, 1
      %p303 = por %p301, %p302
      %p304 = scmp.ne.s32.totalorder %s296, %s299
      %p305 = scmp.eq.s32.totalorder %s24, 0
      %p306 = por %p304, %p305
      %p307 = scmp.ne.s32.totalorder %s296, %s299
      %p308 = scmp.eq.s32.totalorder %s29, 1
      %p309 = por %p307, %p308
      %p310 = scmp.ne.s32.totalorder %s299, %s300
      %p311 = scmp.eq.s32.totalorder %s29, 0
      %p312 = por %p310, %p311
      %p313 = scmp.ne.s32.totalorder %s299, %s300
      %p314 = scmp.eq.s32.totalorder %s30, 1
      %p315 = por %p313, %p314
      %p317 = scmp.ne.s32.totalorder %s300, %s316
      %p318 = scmp.eq.s32.totalorder %s30, 0
      %p319 = por %p317, %p318
      %s320 = ssub.s32 %s24, %s31
      %p321 = scmp.eq.s32.totalorder %s320, 0
      %s323 = sadd.s32 %s322, 1
      %s324 = scalar_select %p321, %s322, %s323
      %p327 = pneg %p321
      %p328 = scmp.eq.s32.totalorder %s24, 1
      %p329 = por %p327, %p328
      %p330 = scmp.ne.s32.totalorder %s322, %s325
      %p331 = scmp.eq.s32.totalorder %s24, 0
      %p332 = por %p330, %p331
      %p333 = scmp.ne.s32.totalorder %s322, %s325
      %p334 = scmp.eq.s32.totalorder %s29, 1
      %p335 = por %p333, %p334
      %p336 = scmp.ne.s32.totalorder %s325, %s326
      %p337 = scmp.eq.s32.totalorder %s29, 0
      %p338 = por %p336, %p337
      %p339 = scmp.ne.s32.totalorder %s325, %s326
      %p340 = scmp.eq.s32.totalorder %s30, 1
      %p341 = por %p339, %p340
      %p343 = scmp.ne.s32.totalorder %s326, %s342
      %p344 = scmp.eq.s32.totalorder %s30, 0
      %p345 = por %p343, %p344
      %s346 = ssub.s32 %s24, %s31
      %p347 = scmp.eq.s32.totalorder %s346, 0
      %s349 = sadd.s32 %s348, 1
      %s350 = scalar_select %p347, %s348, %s349
      %p353 = pneg %p347
      %p354 = scmp.eq.s32.totalorder %s24, 1
      %p355 = por %p353, %p354
      %p356 = scmp.ne.s32.totalorder %s348, %s351
      %p357 = scmp.eq.s32.totalorder %s24, 0
      %p358 = por %p356, %p357
      %p359 = scmp.ne.s32.totalorder %s348, %s351
      %p360 = scmp.eq.s32.totalorder %s29, 1
      %p361 = por %p359, %p360
      %p362 = scmp.ne.s32.totalorder %s351, %s352
      %p363 = scmp.eq.s32.totalorder %s29, 0
      %p364 = por %p362, %p363
      %p365 = scmp.ne.s32.totalorder %s351, %s352
      %p366 = scmp.eq.s32.totalorder %s30, 1
      %p367 = por %p365, %p366
      %p369 = scmp.ne.s32.totalorder %s352, %s368
      %p370 = scmp.eq.s32.totalorder %s30, 0
      %p371 = por %p369, %p370
      %p372 = scmp.le.s32.totalorder 1, %s24
      %p373 = scmp.lt.s32.totalorder %s24, 3
      %p374 = pnand %p372, %p373
      %p375 = pneg %p374
      // Predicated region
      $region9: #{vae_forward.1} parent=5 // pred_check
        _
      $region10: #{vae_forward.1} parent=5 // pred_check_branch
        %377 = sbr.rel (%p374) target = $region12
      $region11: #{vae_forward.1} parent=5 // pred_region
        %s378 = ssub.s32 %s24, 1
        // Predicated region
        $region13: #{vae_forward.1} parent=11 // pred_check
          %p379 = pneg %p97
        $region14: #{vae_forward.1} parent=11 // pred_check_branch
          %381 = sbr.rel (%p379) target = $region16
        $region15: #{vae_forward.1} parent=11 // pred_region
          _
        $region16: #{vae_forward.1} parent=11 // pred_fallthru
          _
        // Predicated region
        $region17: #{vae_forward.1} parent=11 // pred_check
          %p382 = pneg %p118
        $region18: #{vae_forward.1} parent=11 // pred_check_branch
          %384 = sbr.rel (%p382) target = $region20
        $region19: #{vae_forward.1} parent=11 // pred_region
          _
        $region20: #{vae_forward.1} parent=11 // pred_fallthru
          _
        // Predicated region
        $region21: #{vae_forward.1} parent=11 // pred_check
          %p385 = pneg %p139
        $region22: #{vae_forward.1} parent=11 // pred_check_branch
          %387 = sbr.rel (%p385) target = $region24
        $region23: #{vae_forward.1} parent=11 // pred_region
          _
        $region24: #{vae_forward.1} parent=11 // pred_fallthru
          _
        // Predicated region
        $region25: #{vae_forward.1} parent=11 // pred_check
          %p388 = pneg %p160
        $region26: #{vae_forward.1} parent=11 // pred_check_branch
          %390 = sbr.rel (%p388) target = $region28
        $region27: #{vae_forward.1} parent=11 // pred_region
          _
        $region28: #{vae_forward.1} parent=11 // pred_fallthru
          _
        // Predicated region
        $region29: #{vae_forward.1} parent=11 // pred_check
          %p391 = pneg %p181
        $region30: #{vae_forward.1} parent=11 // pred_check_branch
          %393 = sbr.rel (%p391) target = $region32
        $region31: #{vae_forward.1} parent=11 // pred_region
          _
        $region32: #{vae_forward.1} parent=11 // pred_fallthru
          _
        // Predicated region
        $region33: #{vae_forward.1} parent=11 // pred_check
          %p394 = pneg %p202
        $region34: #{vae_forward.1} parent=11 // pred_check_branch
          %396 = sbr.rel (%p394) target = $region36
        $region35: #{vae_forward.1} parent=11 // pred_region
          _
        $region36: #{vae_forward.1} parent=11 // pred_fallthru
          _
        // Predicated region
        $region37: #{vae_forward.1} parent=11 // pred_check
          %p397 = pneg %p223
        $region38: #{vae_forward.1} parent=11 // pred_check_branch
          %399 = sbr.rel (%p397) target = $region40
        $region39: #{vae_forward.1} parent=11 // pred_region
          _
        $region40: #{vae_forward.1} parent=11 // pred_fallthru
          _
        // Predicated region
        $region41: #{vae_forward.1} parent=11 // pred_check
          %p400 = pneg %p244
        $region42: #{vae_forward.1} parent=11 // pred_check_branch
          %402 = sbr.rel (%p400) target = $region44
        $region43: #{vae_forward.1} parent=11 // pred_region
          _
        $region44: #{vae_forward.1} parent=11 // pred_fallthru
          _
        // Predicated region
        $region45: #{vae_forward.1} parent=11 // pred_check
          %p403 = pneg %p265
        $region46: #{vae_forward.1} parent=11 // pred_check_branch
          %405 = sbr.rel (%p403) target = $region48
        $region47: #{vae_forward.1} parent=11 // pred_region
          _
        $region48: #{vae_forward.1} parent=11 // pred_fallthru
          _
        // Predicated region
        $region49: #{vae_forward.1} parent=11 // pred_check
          %p406 = pneg %p286
        $region50: #{vae_forward.1} parent=11 // pred_check_branch
          %408 = sbr.rel (%p406) target = $region52
        $region51: #{vae_forward.1} parent=11 // pred_region
          _
        $region52: #{vae_forward.1} parent=11 // pred_fallthru
          _
      $region12: #{vae_forward.1} parent=5 // pred_fallthru
        _
      %p409 = scmp.lt.s32.totalorder %s24, 2
      // Predicated region
      $region53: #{vae_forward.1} parent=5 // pred_check
        %p410 = pneg %p409
      $region54: #{vae_forward.1} parent=5 // pred_check_branch
        %412 = sbr.rel (%p410) target = $region56
      $region55: #{vae_forward.1} parent=5 // pred_region
        // Predicated region
        $region57: #{vae_forward.1} parent=55 // pred_check
          %p413 = pneg %p44
        $region58: #{vae_forward.1} parent=55 // pred_check_branch
          %415 = sbr.rel (%p413) target = $region60
        $region59: #{vae_forward.1} parent=55 // pred_region
          %s416 = smul.u32 16, %s24
          %p417 = scmp.lt.s32.totalorder %s416, 31
          %s418 = scalar_select %p417, %s416, 31
          %s419 = smul.addr %s418, 2
          %s420 = smul.addr %s419, 4
          %s421 = scalar_lea.vmem %s0, %s420
          %s422 = smul.u32 16, %s24
        $region60: #{vae_forward.1} parent=55 // pred_fallthru
          _
        // Predicated region
        $region61: #{vae_forward.1} parent=55 // pred_check
          %p423 = pneg %p70
        $region62: #{vae_forward.1} parent=55 // pred_check_branch
          %425 = sbr.rel (%p423) target = $region64
        $region63: #{vae_forward.1} parent=55 // pred_region
          %s426 = smul.u32 16, %s24
          %p427 = scmp.lt.s32.totalorder %s426, 31
          %s428 = scalar_select %p427, %s426, 31
          %s429 = smul.addr %s428, 8
          %s430 = scalar_lea.vmem %s1, %s429
          %s431 = smul.u32 16, %s24
        $region64: #{vae_forward.1} parent=55 // pred_fallthru
          _
      $region56: #{vae_forward.1} parent=5 // pred_fallthru
        _
      %p432 = scmp.le.s32.totalorder 1, %s24
      %p433 = scmp.lt.s32.totalorder %s24, 3
      %p434 = pnand %p432, %p433
      %p435 = pneg %p434
      // Predicated region
      $region65: #{vae_forward.1} parent=5 // pred_check
        _
      $region66: #{vae_forward.1} parent=5 // pred_check_branch
        %437 = sbr.rel (%p434) target = $region68
      $region67: #{vae_forward.1} parent=5 // pred_region
        %s438 = ssub.s32 %s24, 1
        %s439 = smul.u32 16, %s29
        %p440 = scmp.lt.s32.totalorder %s439, 31
        %s441 = scalar_select %p440, %s439, 31
        %s442 = smul.addr %s441, 2
        %s443 = smul.addr %s442, 4
        %s444 = scalar_lea.vmem %s0, %s443
        %p445 = pneg %p50
        %p446 = pneg %p47
        %s447 = smul.u32 16, %s29
        %p448 = scmp.lt.s32.totalorder %s447, 31
        %s449 = scalar_select %p448, %s447, 31
        %s450 = smul.addr %s449, 8
        %s451 = scalar_lea.vmem %s1, %s450
        %p452 = pneg %p76
        %p453 = pneg %p73
        %p454 = pneg %p97
        %p455 = pneg %p94
        %p456 = pneg %p118
        %p457 = pneg %p115
        %p458 = pneg %p139
        %p459 = pneg %p136
        %p460 = pneg %p160
        %p461 = pneg %p157
        %p462 = pneg %p181
        %p463 = pneg %p178
        %p464 = pneg %p202
        %p465 = pneg %p199
        %p466 = pneg %p223
        %p467 = pneg %p220
        %p468 = pneg %p244
        %p469 = pneg %p241
        %p470 = pneg %p265
        %p471 = pneg %p262
        %p472 = pneg %p286
        %p473 = pneg %p283
        %p474 = pneg %p312
        %p475 = pneg %p309
        %s476 = smul.u32 16, %s29
        %p477 = scmp.lt.s32.totalorder %s476, 31
        %s478 = scalar_select %p477, %s476, 31
        %s479 = smul.addr %s478, 8
        %s480 = scalar_lea.vmem %s12, %s479
        %p481 = pneg %p338
        %p482 = pneg %p335
        %s483 = sand.u32 %s325, 1
        %s484 = scalar_lea.sflag [#allocation3], %s483
        %s485 = sand.u32 %s325, 1
        %s486 = smul.addr %s485, 256
        %s487 = scalar_lea.vmem [#allocation2], %s486
        %p488 = pneg %p364
        %p489 = pneg %p361
        %s490 = smul.u32 16, %s29
        %p491 = scmp.lt.s32.totalorder %s490, 31
        %s492 = scalar_select %p491, %s490, 31
        %s493 = smul.addr %s492, 2
        %s494 = smul.addr %s493, 8
        %s495 = scalar_lea.vmem %s14, %s494
        %s496 = smul.u32 16, %s29
        %p497 = scmp.lt.s32.totalorder %s496, 31
        %s498 = scalar_select %p497, %s496, 31
        %s499 = smul.addr %s498, 2
        %s500 = smul.addr %s499, 4
        %s501 = scalar_lea.vmem %s0, %s500
        %s502 = smul.u32 16, %s29
        %s503 = smul.u32 16, %s29
        %p504 = scmp.lt.s32.totalorder %s503, 31
        %s505 = scalar_select %p504, %s503, 31
        %s506 = smul.addr %s505, 8
        %s507 = scalar_lea.vmem %s1, %s506
        %s508 = smul.u32 16, %s29
        %s509 = smul.u32 16, %s29
        %p510 = scmp.lt.s32.totalorder %s509, 31
        %s511 = scalar_select %p510, %s509, 31
        %s512 = smul.addr %s511, 8
        %s513 = scalar_lea.vmem %s12, %s512
        %s514 = smul.u32 16, %s29
        %s515 = smul.u32 16, %s29
        %s516 = smul.u32 16, %s29
        %p517 = scmp.lt.s32.totalorder %s516, 31
        %s518 = scalar_select %p517, %s516, 31
        %s519 = smul.addr %s518, 2
        %s520 = smul.addr %s519, 8
        %s521 = scalar_lea.vmem %s14, %s520
        %s522 = smul.u32 16, %s29
        %v524 = vld [vmem:[%s501] sm:$0xff]
        %v525 = vld [vmem:[%s501 + $0x8] sm:$0xff]
        %v526 = vld [vmem:[%s501 + $0x10] sm:$0xff]
        %v527 = vld [vmem:[%s501 + $0x18] sm:$0xff]
        %v528 = vld [vmem:[%s501 + $0x20] sm:$0xff]
        %v529 = vld [vmem:[%s501 + $0x28] sm:$0xff]
        %v530 = vld [vmem:[%s501 + $0x30] sm:$0xff]
        %v531 = vld [vmem:[%s501 + $0x38] sm:$0xff]
        %v532 = vld [vmem:[%s501 + $0x40] sm:$0xff]
        %v533 = vld [vmem:[%s501 + $0x48] sm:$0xff]
        %v534 = vld [vmem:[%s501 + $0x50] sm:$0xff]
        %v535 = vld [vmem:[%s501 + $0x58] sm:$0xff]
        %v536 = vld [vmem:[%s501 + $0x60] sm:$0xff]
        %v537 = vld [vmem:[%s501 + $0x68] sm:$0xff]
        %v538 = vld [vmem:[%s501 + $0x70] sm:$0xff]
        %v539 = vld [vmem:[%s501 + $0x78] sm:$0xff]
        %v540 = vld [vmem:[%s2] sm:$0xff]
        %v541 = vld [vmem:[%s2 + $0x8] sm:$0xff]
        %v542 = vld [vmem:[%s2 + $0x10] sm:$0xff]
        %v543 = vld [vmem:[%s2 + $0x18] sm:$0xff]
        %v544 = vld [vmem:[%s2 + $0x20] sm:$0xff]
        %v545 = vld [vmem:[%s2 + $0x28] sm:$0xff]
        %v546 = vld [vmem:[%s2 + $0x30] sm:$0xff]
        %v547 = vld [vmem:[%s2 + $0x38] sm:$0xff]
        %v548 = vld [vmem:[%s2 + $0x40] sm:$0xff]
        %v549 = vld [vmem:[%s2 + $0x48] sm:$0xff]
        %v550 = vld [vmem:[%s2 + $0x50] sm:$0xff]
        %v551 = vld [vmem:[%s2 + $0x58] sm:$0xff]
        %v552 = vld [vmem:[%s2 + $0x60] sm:$0xff]
        %v553 = vld [vmem:[%s2 + $0x68] sm:$0xff]
        %v554 = vld [vmem:[%s2 + $0x70] sm:$0xff]
        %v555 = vld [vmem:[%s2 + $0x78] sm:$0xff]
        %v556 = vld [vmem:[%s2 + $0x80] sm:$0xff]
        %v557 = vld [vmem:[%s2 + $0x88] sm:$0xff]
        %v558 = vld [vmem:[%s2 + $0x90] sm:$0xff]
        %v559 = vld [vmem:[%s2 + $0x98] sm:$0xff]
        %v560 = vld [vmem:[%s2 + $0xa0] sm:$0xff]
        %v561 = vld [vmem:[%s2 + $0xa8] sm:$0xff]
        %v562 = vld [vmem:[%s2 + $0xb0] sm:$0xff]
        %v563 = vld [vmem:[%s2 + $0xb8] sm:$0xff]
        %v564 = vld [vmem:[%s2 + $0xc0] sm:$0xff]
        %v565 = vld [vmem:[%s2 + $0xc8] sm:$0xff]
        %v566 = vld [vmem:[%s2 + $0xd0] sm:$0xff]
        %v567 = vld [vmem:[%s2 + $0xd8] sm:$0xff]
        %v568 = vld [vmem:[%s2 + $0xe0] sm:$0xff]
        %v569 = vld [vmem:[%s2 + $0xe8] sm:$0xff]
        %v570 = vld [vmem:[%s2 + $0xf0] sm:$0xff]
        %v571 = vld [vmem:[%s2 + $0xf8] sm:$0xff]
        %v572 = vld [vmem:[%s2 + $0x100] sm:$0xff]
        %v573 = vld [vmem:[%s2 + $0x108] sm:$0xff]
        %v574 = vld [vmem:[%s2 + $0x110] sm:$0xff]
        %v575 = vld [vmem:[%s2 + $0x118] sm:$0xff]
        %v576 = vld [vmem:[%s2 + $0x120] sm:$0xff]
        %v577 = vld [vmem:[%s2 + $0x128] sm:$0xff]
        %v578 = vld [vmem:[%s2 + $0x130] sm:$0xff]
        %v579 = vld [vmem:[%s2 + $0x138] sm:$0xff]
        %v580 = vld [vmem:[%s2 + $0x140] sm:$0xff]
        %v581 = vld [vmem:[%s2 + $0x148] sm:$0xff]
        %v582 = vld [vmem:[%s2 + $0x150] sm:$0xff]
        %v583 = vld [vmem:[%s2 + $0x158] sm:$0xff]
        %v584 = vld [vmem:[%s2 + $0x160] sm:$0xff]
        %v585 = vld [vmem:[%s2 + $0x168] sm:$0xff]
        %v586 = vld [vmem:[%s2 + $0x170] sm:$0xff]
        %v587 = vld [vmem:[%s2 + $0x178] sm:$0xff]
        %v588 = vld [vmem:[%s2 + $0x180] sm:$0xff]
        %v589 = vld [vmem:[%s2 + $0x188] sm:$0xff]
        %v590 = vld [vmem:[%s2 + $0x190] sm:$0xff]
        %v591 = vld [vmem:[%s2 + $0x198] sm:$0xff]
        %v592 = vld [vmem:[%s2 + $0x1a0] sm:$0xff]
        %v593 = vld [vmem:[%s2 + $0x1a8] sm:$0xff]
        %v594 = vld [vmem:[%s2 + $0x1b0] sm:$0xff]
        %v595 = vld [vmem:[%s2 + $0x1b8] sm:$0xff]
        %v596 = vld [vmem:[%s2 + $0x1c0] sm:$0xff]
        %v597 = vld [vmem:[%s2 + $0x1c8] sm:$0xff]
        %v598 = vld [vmem:[%s2 + $0x1d0] sm:$0xff]
        %v599 = vld [vmem:[%s2 + $0x1d8] sm:$0xff]
        %v600 = vld [vmem:[%s2 + $0x1e0] sm:$0xff]
        %v601 = vld [vmem:[%s2 + $0x1e8] sm:$0xff]
        %v602 = vld [vmem:[%s2 + $0x1f0] sm:$0xff]
        %v603 = vld [vmem:[%s2 + $0x1f8] sm:$0xff]
        %v604 = vld [vmem:[%s2 + $0x200] sm:$0xff]
        %v605 = vld [vmem:[%s2 + $0x208] sm:$0xff]
        %v606 = vld [vmem:[%s2 + $0x210] sm:$0xff]
        %v607 = vld [vmem:[%s2 + $0x218] sm:$0xff]
        %v608 = vld [vmem:[%s2 + $0x220] sm:$0xff]
        %v609 = vld [vmem:[%s2 + $0x228] sm:$0xff]
        %v610 = vld [vmem:[%s2 + $0x230] sm:$0xff]
        %v611 = vld [vmem:[%s2 + $0x238] sm:$0xff]
        %v612 = vld [vmem:[%s2 + $0x240] sm:$0xff]
        %v613 = vld [vmem:[%s2 + $0x248] sm:$0xff]
        %v614 = vld [vmem:[%s2 + $0x250] sm:$0xff]
        %v615 = vld [vmem:[%s2 + $0x258] sm:$0xff]
        %v616 = vld [vmem:[%s2 + $0x260] sm:$0xff]
        %v617 = vld [vmem:[%s2 + $0x268] sm:$0xff]
        %v618 = vld [vmem:[%s2 + $0x270] sm:$0xff]
        %v619 = vld [vmem:[%s2 + $0x278] sm:$0xff]
        %v620 = vld [vmem:[%s2 + $0x280] sm:$0xff]
        %v621 = vld [vmem:[%s2 + $0x288] sm:$0xff]
        %v622 = vld [vmem:[%s2 + $0x290] sm:$0xff]
        %v623 = vld [vmem:[%s2 + $0x298] sm:$0xff]
        %v624 = vld [vmem:[%s2 + $0x2a0] sm:$0xff]
        %v625 = vld [vmem:[%s2 + $0x2a8] sm:$0xff]
        %v626 = vld [vmem:[%s2 + $0x2b0] sm:$0xff]
        %v627 = vld [vmem:[%s2 + $0x2b8] sm:$0xff]
        %v628 = vld [vmem:[%s2 + $0x2c0] sm:$0xff]
        %v629 = vld [vmem:[%s2 + $0x2c8] sm:$0xff]
        %v630 = vld [vmem:[%s2 + $0x2d0] sm:$0xff]
        %v631 = vld [vmem:[%s2 + $0x2d8] sm:$0xff]
        %v632 = vld [vmem:[%s2 + $0x2e0] sm:$0xff]
        %v633 = vld [vmem:[%s2 + $0x2e8] sm:$0xff]
        %v634 = vld [vmem:[%s2 + $0x2f0] sm:$0xff]
        %v635 = vld [vmem:[%s2 + $0x2f8] sm:$0xff]
        %v636 = vld [vmem:[%s2 + $0x300] sm:$0xff]
        %v637 = vld [vmem:[%s2 + $0x308] sm:$0xff]
        %v638 = vld [vmem:[%s2 + $0x310] sm:$0xff]
        %v639 = vld [vmem:[%s2 + $0x318] sm:$0xff]
        %v640 = vld [vmem:[%s2 + $0x320] sm:$0xff]
        %v641 = vld [vmem:[%s2 + $0x328] sm:$0xff]
        %v642 = vld [vmem:[%s2 + $0x330] sm:$0xff]
        %v643 = vld [vmem:[%s2 + $0x338] sm:$0xff]
        %v644 = vld [vmem:[%s2 + $0x340] sm:$0xff]
        %v645 = vld [vmem:[%s2 + $0x348] sm:$0xff]
        %v646 = vld [vmem:[%s2 + $0x350] sm:$0xff]
        %v647 = vld [vmem:[%s2 + $0x358] sm:$0xff]
        %v648 = vld [vmem:[%s2 + $0x360] sm:$0xff]
        %v649 = vld [vmem:[%s2 + $0x368] sm:$0xff]
        %v650 = vld [vmem:[%s2 + $0x370] sm:$0xff]
        %v651 = vld [vmem:[%s2 + $0x378] sm:$0xff]
        %v652 = vld [vmem:[%s2 + $0x380] sm:$0xff]
        %v653 = vld [vmem:[%s2 + $0x388] sm:$0xff]
        %v654 = vld [vmem:[%s2 + $0x390] sm:$0xff]
        %v655 = vld [vmem:[%s2 + $0x398] sm:$0xff]
        %v656 = vld [vmem:[%s2 + $0x3a0] sm:$0xff]
        %v657 = vld [vmem:[%s2 + $0x3a8] sm:$0xff]
        %v658 = vld [vmem:[%s2 + $0x3b0] sm:$0xff]
        %v659 = vld [vmem:[%s2 + $0x3b8] sm:$0xff]
        %v660 = vld [vmem:[%s2 + $0x3c0] sm:$0xff]
        %v661 = vld [vmem:[%s2 + $0x3c8] sm:$0xff]
        %v662 = vld [vmem:[%s2 + $0x3d0] sm:$0xff]
        %v663 = vld [vmem:[%s2 + $0x3d8] sm:$0xff]
        %v664 = vld [vmem:[%s2 + $0x3e0] sm:$0xff]
        %v665 = vld [vmem:[%s2 + $0x3e8] sm:$0xff]
        %v666 = vld [vmem:[%s2 + $0x3f0] sm:$0xff]
        %v667 = vld [vmem:[%s2 + $0x3f8] sm:$0xff]
        %v668 = vld [vmem:[%s3] sm:$0xff]
        %v670 = vlaneseq
        %v671 = vshrl.u32 %v670, 7
        %v672 = vsub.s32 0, %v671
        %v673 = vrot.slane %v668, %v672
        %v674 = vlaneseq
        %v675 = vshrl.u32 %v674, 7
        %v676 = vsub.s32 1, %v675
        %v677 = vrot.slane %v668, %v676
        %v678 = vlaneseq
        %v679 = vshrl.u32 %v678, 7
        %v680 = vsub.s32 2, %v679
        %v681 = vrot.slane %v668, %v680
        %v682 = vlaneseq
        %v683 = vshrl.u32 %v682, 7
        %v684 = vsub.s32 3, %v683
        %v685 = vrot.slane %v668, %v684
        %v686 = vlaneseq
        %v687 = vshrl.u32 %v686, 7
        %v688 = vsub.s32 4, %v687
        %v689 = vrot.slane %v668, %v688
        %v690 = vlaneseq
        %v691 = vshrl.u32 %v690, 7
        %v692 = vsub.s32 5, %v691
        %v693 = vrot.slane %v668, %v692
        %v694 = vlaneseq
        %v695 = vshrl.u32 %v694, 7
        %v696 = vsub.s32 6, %v695
        %v697 = vrot.slane %v668, %v696
        %v698 = vlaneseq
        %v699 = vshrl.u32 %v698, 7
        %v700 = vsub.s32 7, %v699
        %v701 = vrot.slane %v668, %v700
        %v726 = vunpack.c.l.b16 %v524
        %v727 = vunpack.c.h.b16 %v524
        %v728 = vunpack.c.l.b16 %v525
        %v729 = vunpack.c.h.b16 %v525
        %v730 = vunpack.c.l.b16 %v526
        %v731 = vunpack.c.h.b16 %v526
        %v732 = vunpack.c.l.b16 %v527
        %v733 = vunpack.c.h.b16 %v527
        %v734 = vunpack.c.l.b16 %v528
        %v735 = vunpack.c.h.b16 %v528
        %v736 = vunpack.c.l.b16 %v529
        %v737 = vunpack.c.h.b16 %v529
        %v738 = vunpack.c.l.b16 %v530
        %v739 = vunpack.c.h.b16 %v530
        %v740 = vunpack.c.l.b16 %v531
        %v741 = vunpack.c.h.b16 %v531
        %v742 = vunpack.c.l.b16 %v532
        %v743 = vunpack.c.h.b16 %v532
        %v744 = vunpack.c.l.b16 %v533
        %v745 = vunpack.c.h.b16 %v533
        %v746 = vunpack.c.l.b16 %v534
        %v747 = vunpack.c.h.b16 %v534
        %v748 = vunpack.c.l.b16 %v535
        %v749 = vunpack.c.h.b16 %v535
        %v750 = vunpack.c.l.b16 %v536
        %v751 = vunpack.c.h.b16 %v536
        %v752 = vunpack.c.l.b16 %v537
        %v753 = vunpack.c.h.b16 %v537
        %v754 = vunpack.c.l.b16 %v538
        %v755 = vunpack.c.h.b16 %v538
        %v756 = vunpack.c.l.b16 %v539
        %v757 = vunpack.c.h.b16 %v539
        %v758 = vpack.c.b16 %v728, %v726
        %v759 = vpack.c.b16 %v729, %v727
        %v760 = vpack.c.b16 %v732, %v730
        %v761 = vpack.c.b16 %v733, %v731
        %v762 = vpack.c.b16 %v736, %v734
        %v763 = vpack.c.b16 %v737, %v735
        %v764 = vpack.c.b16 %v740, %v738
        %v765 = vpack.c.b16 %v741, %v739
        %v766 = vpack.c.b16 %v744, %v742
        %v767 = vpack.c.b16 %v745, %v743
        %v768 = vpack.c.b16 %v748, %v746
        %v769 = vpack.c.b16 %v749, %v747
        %v770 = vpack.c.b16 %v752, %v750
        %v771 = vpack.c.b16 %v753, %v751
        %v772 = vpack.c.b16 %v756, %v754
        %v773 = vpack.c.b16 %v757, %v755
        %v918 = vunpack.c.l.b16 %v540
        %v919 = vunpack.c.h.b16 %v540
        %v920 = vunpack.c.l.b16 %v541
        %v921 = vunpack.c.h.b16 %v541
        %v922 = vunpack.c.l.b16 %v542
        %v923 = vunpack.c.h.b16 %v542
        %v924 = vunpack.c.l.b16 %v543
        %v925 = vunpack.c.h.b16 %v543
        %v926 = vunpack.c.l.b16 %v544
        %v927 = vunpack.c.h.b16 %v544
        %v928 = vunpack.c.l.b16 %v545
        %v929 = vunpack.c.h.b16 %v545
        %v930 = vunpack.c.l.b16 %v546
        %v931 = vunpack.c.h.b16 %v546
        %v932 = vunpack.c.l.b16 %v547
        %v933 = vunpack.c.h.b16 %v547
        %v934 = vunpack.c.l.b16 %v548
        %v935 = vunpack.c.h.b16 %v548
        %v936 = vunpack.c.l.b16 %v549
        %v937 = vunpack.c.h.b16 %v549
        %v938 = vunpack.c.l.b16 %v550
        %v939 = vunpack.c.h.b16 %v550
        %v940 = vunpack.c.l.b16 %v551
        %v941 = vunpack.c.h.b16 %v551
        %v942 = vunpack.c.l.b16 %v552
        %v943 = vunpack.c.h.b16 %v552
        %v944 = vunpack.c.l.b16 %v553
        %v945 = vunpack.c.h.b16 %v553
        %v946 = vunpack.c.l.b16 %v554
        %v947 = vunpack.c.h.b16 %v554
        %v948 = vunpack.c.l.b16 %v555
        %v949 = vunpack.c.h.b16 %v555
        %v950 = vunpack.c.l.b16 %v556
        %v951 = vunpack.c.h.b16 %v556
        %v952 = vunpack.c.l.b16 %v557
        %v953 = vunpack.c.h.b16 %v557
        %v954 = vunpack.c.l.b16 %v558
        %v955 = vunpack.c.h.b16 %v558
        %v956 = vunpack.c.l.b16 %v559
        %v957 = vunpack.c.h.b16 %v559
        %v958 = vunpack.c.l.b16 %v560
        %v959 = vunpack.c.h.b16 %v560
        %v960 = vunpack.c.l.b16 %v561
        %v961 = vunpack.c.h.b16 %v561
        %v962 = vunpack.c.l.b16 %v562
        %v963 = vunpack.c.h.b16 %v562
        %v964 = vunpack.c.l.b16 %v563
        %v965 = vunpack.c.h.b16 %v563
        %v966 = vunpack.c.l.b16 %v564
        %v967 = vunpack.c.h.b16 %v564
        %v968 = vunpack.c.l.b16 %v565
        %v969 = vunpack.c.h.b16 %v565
        %v970 = vunpack.c.l.b16 %v566
        %v971 = vunpack.c.h.b16 %v566
        %v972 = vunpack.c.l.b16 %v567
        %v973 = vunpack.c.h.b16 %v567
        %v974 = vunpack.c.l.b16 %v568
        %v975 = vunpack.c.h.b16 %v568
        %v976 = vunpack.c.l.b16 %v569
        %v977 = vunpack.c.h.b16 %v569
        %v978 = vunpack.c.l.b16 %v570
        %v979 = vunpack.c.h.b16 %v570
        %v980 = vunpack.c.l.b16 %v571
        %v981 = vunpack.c.h.b16 %v571
        %v982 = vunpack.c.l.b16 %v572
        %v983 = vunpack.c.h.b16 %v572
        %v984 = vunpack.c.l.b16 %v573
        %v985 = vunpack.c.h.b16 %v573
        %v986 = vunpack.c.l.b16 %v574
        %v987 = vunpack.c.h.b16 %v574
        %v988 = vunpack.c.l.b16 %v575
        %v989 = vunpack.c.h.b16 %v575
        %v990 = vunpack.c.l.b16 %v576
        %v991 = vunpack.c.h.b16 %v576
        %v992 = vunpack.c.l.b16 %v577
        %v993 = vunpack.c.h.b16 %v577
        %v994 = vunpack.c.l.b16 %v578
        %v995 = vunpack.c.h.b16 %v578
        %v996 = vunpack.c.l.b16 %v579
        %v997 = vunpack.c.h.b16 %v579
        %v998 = vunpack.c.l.b16 %v580
        %v999 = vunpack.c.h.b16 %v580
        %v1000 = vunpack.c.l.b16 %v581
        %v1001 = vunpack.c.h.b16 %v581
        %v1002 = vunpack.c.l.b16 %v582
        %v1003 = vunpack.c.h.b16 %v582
        %v1004 = vunpack.c.l.b16 %v583
        %v1005 = vunpack.c.h.b16 %v583
        %v1006 = vunpack.c.l.b16 %v584
        %v1007 = vunpack.c.h.b16 %v584
        %v1008 = vunpack.c.l.b16 %v585
        %v1009 = vunpack.c.h.b16 %v585
        %v1010 = vunpack.c.l.b16 %v586
        %v1011 = vunpack.c.h.b16 %v586
        %v1012 = vunpack.c.l.b16 %v587
        %v1013 = vunpack.c.h.b16 %v587
        %v1014 = vunpack.c.l.b16 %v588
        %v1015 = vunpack.c.h.b16 %v588
        %v1016 = vunpack.c.l.b16 %v589
        %v1017 = vunpack.c.h.b16 %v589
        %v1018 = vunpack.c.l.b16 %v590
        %v1019 = vunpack.c.h.b16 %v590
        %v1020 = vunpack.c.l.b16 %v591
        %v1021 = vunpack.c.h.b16 %v591
        %v1022 = vunpack.c.l.b16 %v592
        %v1023 = vunpack.c.h.b16 %v592
        %v1024 = vunpack.c.l.b16 %v593
        %v1025 = vunpack.c.h.b16 %v593
        %v1026 = vunpack.c.l.b16 %v594
        %v1027 = vunpack.c.h.b16 %v594
        %v1028 = vunpack.c.l.b16 %v595
        %v1029 = vunpack.c.h.b16 %v595
        %v1030 = vunpack.c.l.b16 %v596
        %v1031 = vunpack.c.h.b16 %v596
        %v1032 = vunpack.c.l.b16 %v597
        %v1033 = vunpack.c.h.b16 %v597
        %v1034 = vunpack.c.l.b16 %v598
        %v1035 = vunpack.c.h.b16 %v598
        %v1036 = vunpack.c.l.b16 %v599
        %v1037 = vunpack.c.h.b16 %v599
        %v1038 = vunpack.c.l.b16 %v600
        %v1039 = vunpack.c.h.b16 %v600
        %v1040 = vunpack.c.l.b16 %v601
        %v1041 = vunpack.c.h.b16 %v601
        %v1042 = vunpack.c.l.b16 %v602
        %v1043 = vunpack.c.h.b16 %v602
        %v1044 = vunpack.c.l.b16 %v603
        %v1045 = vunpack.c.h.b16 %v603
        %v1046 = vunpack.c.l.b16 %v604
        %v1047 = vunpack.c.h.b16 %v604
        %v1048 = vunpack.c.l.b16 %v605
        %v1049 = vunpack.c.h.b16 %v605
        %v1050 = vunpack.c.l.b16 %v606
        %v1051 = vunpack.c.h.b16 %v606
        %v1052 = vunpack.c.l.b16 %v607
        %v1053 = vunpack.c.h.b16 %v607
        %v1054 = vunpack.c.l.b16 %v608
        %v1055 = vunpack.c.h.b16 %v608
        %v1056 = vunpack.c.l.b16 %v609
        %v1057 = vunpack.c.h.b16 %v609
        %v1058 = vunpack.c.l.b16 %v610
        %v1059 = vunpack.c.h.b16 %v610
        %v1060 = vunpack.c.l.b16 %v611
        %v1061 = vunpack.c.h.b16 %v611
        %v1062 = vunpack.c.l.b16 %v612
        %v1063 = vunpack.c.h.b16 %v612
        %v1064 = vunpack.c.l.b16 %v613
        %v1065 = vunpack.c.h.b16 %v613
        %v1066 = vunpack.c.l.b16 %v614
        %v1067 = vunpack.c.h.b16 %v614
        %v1068 = vunpack.c.l.b16 %v615
        %v1069 = vunpack.c.h.b16 %v615
        %v1070 = vunpack.c.l.b16 %v616
        %v1071 = vunpack.c.h.b16 %v616
        %v1072 = vunpack.c.l.b16 %v617
        %v1073 = vunpack.c.h.b16 %v617
        %v1074 = vunpack.c.l.b16 %v618
        %v1075 = vunpack.c.h.b16 %v618
        %v1076 = vunpack.c.l.b16 %v619
        %v1077 = vunpack.c.h.b16 %v619
        %v1078 = vunpack.c.l.b16 %v620
        %v1079 = vunpack.c.h.b16 %v620
        %v1080 = vunpack.c.l.b16 %v621
        %v1081 = vunpack.c.h.b16 %v621
        %v1082 = vunpack.c.l.b16 %v622
        %v1083 = vunpack.c.h.b16 %v622
        %v1084 = vunpack.c.l.b16 %v623
        %v1085 = vunpack.c.h.b16 %v623
        %v1086 = vunpack.c.l.b16 %v624
        %v1087 = vunpack.c.h.b16 %v624
        %v1088 = vunpack.c.l.b16 %v625
        %v1089 = vunpack.c.h.b16 %v625
        %v1090 = vunpack.c.l.b16 %v626
        %v1091 = vunpack.c.h.b16 %v626
        %v1092 = vunpack.c.l.b16 %v627
        %v1093 = vunpack.c.h.b16 %v627
        %v1094 = vunpack.c.l.b16 %v628
        %v1095 = vunpack.c.h.b16 %v628
        %v1096 = vunpack.c.l.b16 %v629
        %v1097 = vunpack.c.h.b16 %v629
        %v1098 = vunpack.c.l.b16 %v630
        %v1099 = vunpack.c.h.b16 %v630
        %v1100 = vunpack.c.l.b16 %v631
        %v1101 = vunpack.c.h.b16 %v631
        %v1102 = vunpack.c.l.b16 %v632
        %v1103 = vunpack.c.h.b16 %v632
        %v1104 = vunpack.c.l.b16 %v633
        %v1105 = vunpack.c.h.b16 %v633
        %v1106 = vunpack.c.l.b16 %v634
        %v1107 = vunpack.c.h.b16 %v634
        %v1108 = vunpack.c.l.b16 %v635
        %v1109 = vunpack.c.h.b16 %v635
        %v1110 = vunpack.c.l.b16 %v636
        %v1111 = vunpack.c.h.b16 %v636
        %v1112 = vunpack.c.l.b16 %v637
        %v1113 = vunpack.c.h.b16 %v637
        %v1114 = vunpack.c.l.b16 %v638
        %v1115 = vunpack.c.h.b16 %v638
        %v1116 = vunpack.c.l.b16 %v639
        %v1117 = vunpack.c.h.b16 %v639
        %v1118 = vunpack.c.l.b16 %v640
        %v1119 = vunpack.c.h.b16 %v640
        %v1120 = vunpack.c.l.b16 %v641
        %v1121 = vunpack.c.h.b16 %v641
        %v1122 = vunpack.c.l.b16 %v642
        %v1123 = vunpack.c.h.b16 %v642
        %v1124 = vunpack.c.l.b16 %v643
        %v1125 = vunpack.c.h.b16 %v643
        %v1126 = vunpack.c.l.b16 %v644
        %v1127 = vunpack.c.h.b16 %v644
        %v1128 = vunpack.c.l.b16 %v645
        %v1129 = vunpack.c.h.b16 %v645
        %v1130 = vunpack.c.l.b16 %v646
        %v1131 = vunpack.c.h.b16 %v646
        %v1132 = vunpack.c.l.b16 %v647
        %v1133 = vunpack.c.h.b16 %v647
        %v1134 = vunpack.c.l.b16 %v648
        %v1135 = vunpack.c.h.b16 %v648
        %v1136 = vunpack.c.l.b16 %v649
        %v1137 = vunpack.c.h.b16 %v649
        %v1138 = vunpack.c.l.b16 %v650
        %v1139 = vunpack.c.h.b16 %v650
        %v1140 = vunpack.c.l.b16 %v651
        %v1141 = vunpack.c.h.b16 %v651
        %v1142 = vunpack.c.l.b16 %v652
        %v1143 = vunpack.c.h.b16 %v652
        %v1144 = vunpack.c.l.b16 %v653
        %v1145 = vunpack.c.h.b16 %v653
        %v1146 = vunpack.c.l.b16 %v654
        %v1147 = vunpack.c.h.b16 %v654
        %v1148 = vunpack.c.l.b16 %v655
        %v1149 = vunpack.c.h.b16 %v655
        %v1150 = vunpack.c.l.b16 %v656
        %v1151 = vunpack.c.h.b16 %v656
        %v1152 = vunpack.c.l.b16 %v657
        %v1153 = vunpack.c.h.b16 %v657
        %v1154 = vunpack.c.l.b16 %v658
        %v1155 = vunpack.c.h.b16 %v658
        %v1156 = vunpack.c.l.b16 %v659
        %v1157 = vunpack.c.h.b16 %v659
        %v1158 = vunpack.c.l.b16 %v660
        %v1159 = vunpack.c.h.b16 %v660
        %v1160 = vunpack.c.l.b16 %v661
        %v1161 = vunpack.c.h.b16 %v661
        %v1162 = vunpack.c.l.b16 %v662
        %v1163 = vunpack.c.h.b16 %v662
        %v1164 = vunpack.c.l.b16 %v663
        %v1165 = vunpack.c.h.b16 %v663
        %v1166 = vunpack.c.l.b16 %v664
        %v1167 = vunpack.c.h.b16 %v664
        %v1168 = vunpack.c.l.b16 %v665
        %v1169 = vunpack.c.h.b16 %v665
        %v1170 = vunpack.c.l.b16 %v666
        %v1171 = vunpack.c.h.b16 %v666
        %v1172 = vunpack.c.l.b16 %v667
        %v1173 = vunpack.c.h.b16 %v667
        %v1174 = vpack.c.b16 %v926, %v918
        %v1175 = vpack.c.b16 %v927, %v919
        %v1176 = vpack.c.b16 %v928, %v920
        %v1177 = vpack.c.b16 %v929, %v921
        %v1178 = vpack.c.b16 %v930, %v922
        %v1179 = vpack.c.b16 %v931, %v923
        %v1180 = vpack.c.b16 %v932, %v924
        %v1181 = vpack.c.b16 %v933, %v925
        %v1182 = vpack.c.b16 %v942, %v934
        %v1183 = vpack.c.b16 %v943, %v935
        %v1184 = vpack.c.b16 %v944, %v936
        %v1185 = vpack.c.b16 %v945, %v937
        %v1186 = vpack.c.b16 %v946, %v938
        %v1187 = vpack.c.b16 %v947, %v939
        %v1188 = vpack.c.b16 %v948, %v940
        %v1189 = vpack.c.b16 %v949, %v941
        %v1190 = vpack.c.b16 %v958, %v950
        %v1191 = vpack.c.b16 %v959, %v951
        %v1192 = vpack.c.b16 %v960, %v952
        %v1193 = vpack.c.b16 %v961, %v953
        %v1194 = vpack.c.b16 %v962, %v954
        %v1195 = vpack.c.b16 %v963, %v955
        %v1196 = vpack.c.b16 %v964, %v956
        %v1197 = vpack.c.b16 %v965, %v957
        %v1198 = vpack.c.b16 %v974, %v966
        %v1199 = vpack.c.b16 %v975, %v967
        %v1200 = vpack.c.b16 %v976, %v968
        %v1201 = vpack.c.b16 %v977, %v969
        %v1202 = vpack.c.b16 %v978, %v970
        %v1203 = vpack.c.b16 %v979, %v971
        %v1204 = vpack.c.b16 %v980, %v972
        %v1205 = vpack.c.b16 %v981, %v973
        %v1206 = vpack.c.b16 %v990, %v982
        %v1207 = vpack.c.b16 %v991, %v983
        %v1208 = vpack.c.b16 %v992, %v984
        %v1209 = vpack.c.b16 %v993, %v985
        %v1210 = vpack.c.b16 %v994, %v986
        %v1211 = vpack.c.b16 %v995, %v987
        %v1212 = vpack.c.b16 %v996, %v988
        %v1213 = vpack.c.b16 %v997, %v989
        %v1214 = vpack.c.b16 %v1006, %v998
        %v1215 = vpack.c.b16 %v1007, %v999
        %v1216 = vpack.c.b16 %v1008, %v1000
        %v1217 = vpack.c.b16 %v1009, %v1001
        %v1218 = vpack.c.b16 %v1010, %v1002
        %v1219 = vpack.c.b16 %v1011, %v1003
        %v1220 = vpack.c.b16 %v1012, %v1004
        %v1221 = vpack.c.b16 %v1013, %v1005
        %v1222 = vpack.c.b16 %v1022, %v1014
        %v1223 = vpack.c.b16 %v1023, %v1015
        %v1224 = vpack.c.b16 %v1024, %v1016
        %v1225 = vpack.c.b16 %v1025, %v1017
        %v1226 = vpack.c.b16 %v1026, %v1018
        %v1227 = vpack.c.b16 %v1027, %v1019
        %v1228 = vpack.c.b16 %v1028, %v1020
        %v1229 = vpack.c.b16 %v1029, %v1021
        %v1230 = vpack.c.b16 %v1038, %v1030
        %v1231 = vpack.c.b16 %v1039, %v1031
        %v1232 = vpack.c.b16 %v1040, %v1032
        %v1233 = vpack.c.b16 %v1041, %v1033
        %v1234 = vpack.c.b16 %v1042, %v1034
        %v1235 = vpack.c.b16 %v1043, %v1035
        %v1236 = vpack.c.b16 %v1044, %v1036
        %v1237 = vpack.c.b16 %v1045, %v1037
        %v1238 = vpack.c.b16 %v1054, %v1046
        %v1239 = vpack.c.b16 %v1055, %v1047
        %v1240 = vpack.c.b16 %v1056, %v1048
        %v1241 = vpack.c.b16 %v1057, %v1049
        %v1242 = vpack.c.b16 %v1058, %v1050
        %v1243 = vpack.c.b16 %v1059, %v1051
        %v1244 = vpack.c.b16 %v1060, %v1052
        %v1245 = vpack.c.b16 %v1061, %v1053
        %v1246 = vpack.c.b16 %v1070, %v1062
        %v1247 = vpack.c.b16 %v1071, %v1063
        %v1248 = vpack.c.b16 %v1072, %v1064
        %v1249 = vpack.c.b16 %v1073, %v1065
        %v1250 = vpack.c.b16 %v1074, %v1066
        %v1251 = vpack.c.b16 %v1075, %v1067
        %v1252 = vpack.c.b16 %v1076, %v1068
        %v1253 = vpack.c.b16 %v1077, %v1069
        %v1254 = vpack.c.b16 %v1086, %v1078
        %v1255 = vpack.c.b16 %v1087, %v1079
        %v1256 = vpack.c.b16 %v1088, %v1080
        %v1257 = vpack.c.b16 %v1089, %v1081
        %v1258 = vpack.c.b16 %v1090, %v1082
        %v1259 = vpack.c.b16 %v1091, %v1083
        %v1260 = vpack.c.b16 %v1092, %v1084
        %v1261 = vpack.c.b16 %v1093, %v1085
        %v1262 = vpack.c.b16 %v1102, %v1094
        %v1263 = vpack.c.b16 %v1103, %v1095
        %v1264 = vpack.c.b16 %v1104, %v1096
        %v1265 = vpack.c.b16 %v1105, %v1097
        %v1266 = vpack.c.b16 %v1106, %v1098
        %v1267 = vpack.c.b16 %v1107, %v1099
        %v1268 = vpack.c.b16 %v1108, %v1100
        %v1269 = vpack.c.b16 %v1109, %v1101
        %v1270 = vpack.c.b16 %v1118, %v1110
        %v1271 = vpack.c.b16 %v1119, %v1111
        %v1272 = vpack.c.b16 %v1120, %v1112
        %v1273 = vpack.c.b16 %v1121, %v1113
        %v1274 = vpack.c.b16 %v1122, %v1114
        %v1275 = vpack.c.b16 %v1123, %v1115
        %v1276 = vpack.c.b16 %v1124, %v1116
        %v1277 = vpack.c.b16 %v1125, %v1117
        %v1278 = vpack.c.b16 %v1134, %v1126
        %v1279 = vpack.c.b16 %v1135, %v1127
        %v1280 = vpack.c.b16 %v1136, %v1128
        %v1281 = vpack.c.b16 %v1137, %v1129
        %v1282 = vpack.c.b16 %v1138, %v1130
        %v1283 = vpack.c.b16 %v1139, %v1131
        %v1284 = vpack.c.b16 %v1140, %v1132
        %v1285 = vpack.c.b16 %v1141, %v1133
        %v1286 = vpack.c.b16 %v1150, %v1142
        %v1287 = vpack.c.b16 %v1151, %v1143
        %v1288 = vpack.c.b16 %v1152, %v1144
        %v1289 = vpack.c.b16 %v1153, %v1145
        %v1290 = vpack.c.b16 %v1154, %v1146
        %v1291 = vpack.c.b16 %v1155, %v1147
        %v1292 = vpack.c.b16 %v1156, %v1148
        %v1293 = vpack.c.b16 %v1157, %v1149
        %v1294 = vpack.c.b16 %v1166, %v1158
        %v1295 = vpack.c.b16 %v1167, %v1159
        %v1296 = vpack.c.b16 %v1168, %v1160
        %v1297 = vpack.c.b16 %v1169, %v1161
        %v1298 = vpack.c.b16 %v1170, %v1162
        %v1299 = vpack.c.b16 %v1171, %v1163
        %v1300 = vpack.c.b16 %v1172, %v1164
        %v1301 = vpack.c.b16 %v1173, %v1165
        %1430 = vmatprep.subr.bf16.mxu0 %v1175
        %1431 = vmatpush1.bf16.msra.mxu0 %v1174
        %1432 = vmatprep.subr.bf16.mxu0 %v1183
        %1433 = vmatpush1.bf16.msra.mxu0 %v1182
        %1434 = vmatprep.subr.bf16.mxu0 %v1191
        %1435 = vmatpush1.bf16.msra.mxu0 %v1190
        %1436 = vmatprep.subr.bf16.mxu0 %v1199
        %1437 = vmatpush1.bf16.msra.mxu0 %v1198
        %1438 = vmatprep.subr.bf16.mxu0 %v1207
        %1439 = vmatpush1.bf16.msra.mxu0 %v1206
        %1440 = vmatprep.subr.bf16.mxu0 %v1215
        %1441 = vmatpush1.bf16.msra.mxu0 %v1214
        %1442 = vmatprep.subr.bf16.mxu0 %v1223
        %1443 = vmatpush1.bf16.msra.mxu0 %v1222
        %1444 = vmatprep.subr.bf16.mxu0 %v1231
        %1445 = vmatpush1.bf16.msra.mxu0 %v1230
        %1446 = vmatprep.subr.bf16.mxu0 %v1239
        %1447 = vmatpush1.bf16.msra.mxu0 %v1238
        %1448 = vmatprep.subr.bf16.mxu0 %v1247
        %1449 = vmatpush1.bf16.msra.mxu0 %v1246
        %1450 = vmatprep.subr.bf16.mxu0 %v1255
        %1451 = vmatpush1.bf16.msra.mxu0 %v1254
        %1452 = vmatprep.subr.bf16.mxu0 %v1263
        %1453 = vmatpush1.bf16.msra.mxu0 %v1262
        %1454 = vmatprep.subr.bf16.mxu0 %v1271
        %1455 = vmatpush1.bf16.msra.mxu0 %v1270
        %1456 = vmatprep.subr.bf16.mxu0 %v1279
        %1457 = vmatpush1.bf16.msra.mxu0 %v1278
        %1458 = vmatprep.subr.bf16.mxu0 %v1287
        %1459 = vmatpush1.bf16.msra.mxu0 %v1286
        %1460 = vmatprep.subr.bf16.mxu0 %v1295
        %1461 = vmatpush1.bf16.msra.mxu0 %v1294
        %1462 = vmatprep.mubr.bf16.mxu0 %v759
        %1463 = vmatmul.mubr.bf16.gmra.mrb[0].mxu0 %v758
        %v1464 = vpop.f32.mrb[0].mxu0
        %v1465 = vadd.f32 %v673, %v1464
        %v1466 = vpop.f32.mrb[0].mxu0
        %v1467 = vadd.f32 %v677, %v1466
        %v1468 = vpop.f32.mrb[0].mxu0
        %v1469 = vadd.f32 %v673, %v1468
        %v1470 = vpop.f32.mrb[0].mxu0
        %v1471 = vadd.f32 %v677, %v1470
        %1472 = vmatprep.mubr.bf16.mxu0 %v761
        %1473 = vmatmul.mubr.bf16.gmra.mrb[0].mxu0 %v760
        %v1474 = vpop.f32.mrb[0].mxu0
        %v1475 = vadd.f32 %v673, %v1474
        %v1476 = vpop.f32.mrb[0].mxu0
        %v1477 = vadd.f32 %v677, %v1476
        %v1478 = vpop.f32.mrb[0].mxu0
        %v1479 = vadd.f32 %v673, %v1478
        %v1480 = vpop.f32.mrb[0].mxu0
        %v1481 = vadd.f32 %v677, %v1480
        %1482 = vmatprep.mubr.bf16.mxu0 %v763
        %1483 = vmatmul.mubr.bf16.gmra.mrb[0].mxu0 %v762
        %v1484 = vpop.f32.mrb[0].mxu0
        %v1485 = vadd.f32 %v673, %v1484
        %v1486 = vpop.f32.mrb[0].mxu0
        %v1487 = vadd.f32 %v677, %v1486
        %v1488 = vpop.f32.mrb[0].mxu0
        %v1489 = vadd.f32 %v673, %v1488
        %v1490 = vpop.f32.mrb[0].mxu0
        %v1491 = vadd.f32 %v677, %v1490
        %1492 = vmatprep.mubr.bf16.mxu0 %v765
        %1493 = vmatmul.mubr.bf16.gmra.mrb[0].mxu0 %v764
        %v1494 = vpop.f32.mrb[0].mxu0
        %v1495 = vadd.f32 %v673, %v1494
        %v1496 = vpop.f32.mrb[0].mxu0
        %v1497 = vadd.f32 %v677, %v1496
        %v1498 = vpop.f32.mrb[0].mxu0
        %v1499 = vadd.f32 %v673, %v1498
        %v1500 = vpop.f32.mrb[0].mxu0
        %v1501 = vadd.f32 %v677, %v1500
        %1502 = vmatprep.mubr.bf16.mxu0 %v767
        %1503 = vmatmul.mubr.bf16.gmra.mrb[0].mxu0 %v766
        %v1504 = vpop.f32.mrb[0].mxu0
        %v1505 = vadd.f32 %v673, %v1504
        %v1506 = vpop.f32.mrb[0].mxu0
        %v1507 = vadd.f32 %v677, %v1506
        %v1508 = vpop.f32.mrb[0].mxu0
        %v1509 = vadd.f32 %v673, %v1508
        %v1510 = vpop.f32.mrb[0].mxu0
        %v1511 = vadd.f32 %v677, %v1510
        %1512 = vmatprep.mubr.bf16.mxu0 %v769
        %1513 = vmatmul.mubr.bf16.gmra.mrb[0].mxu0 %v768
        %v1514 = vpop.f32.mrb[0].mxu0
        %v1515 = vadd.f32 %v673, %v1514
        %v1516 = vpop.f32.mrb[0].mxu0
        %v1517 = vadd.f32 %v677, %v1516
        %v1518 = vpop.f32.mrb[0].mxu0
        %v1519 = vadd.f32 %v673, %v1518
        %v1520 = vpop.f32.mrb[0].mxu0
        %v1521 = vadd.f32 %v677, %v1520
        %1522 = vmatprep.mubr.bf16.mxu0 %v771
        %1523 = vmatmul.mubr.bf16.gmra.mrb[0].mxu0 %v770
        %v1524 = vpop.f32.mrb[0].mxu0
        %v1525 = vadd.f32 %v673, %v1524
        %v1526 = vpop.f32.mrb[0].mxu0
        %v1527 = vadd.f32 %v677, %v1526
        %v1528 = vpop.f32.mrb[0].mxu0
        %v1529 = vadd.f32 %v673, %v1528
        %v1530 = vpop.f32.mrb[0].mxu0
        %v1531 = vadd.f32 %v677, %v1530
        %1532 = vmatprep.mubr.bf16.mxu0 %v773
        %1533 = vmatmul.mubr.bf16.gmra.mrb[0].mxu0 %v772
        %v1534 = vpop.f32.mrb[0].mxu0
        %v1535 = vadd.f32 %v673, %v1534
        %v1536 = vpop.f32.mrb[0].mxu0
        %v1537 = vadd.f32 %v677, %v1536
        %v1538 = vpop.f32.mrb[0].mxu0
        %v1539 = vadd.f32 %v673, %v1538
        %v1540 = vpop.f32.mrb[0].mxu0
        %v1541 = vadd.f32 %v677, %v1540
        %1542 = vdwg.mxu0
        %1543 = vmatprep.subr.bf16.mxu0 %v1177
        %1544 = vmatpush1.bf16.msra.mxu0 %v1176
        %1545 = vmatprep.subr.bf16.mxu0 %v1185
        %1546 = vmatpush1.bf16.msra.mxu0 %v1184
        %1547 = vmatprep.subr.bf16.mxu0 %v1193
        %1548 = vmatpush1.bf16.msra.mxu0 %v1192
        %1549 = vmatprep.subr.bf16.mxu0 %v1201
        %1550 = vmatpush1.bf16.msra.mxu0 %v1200
        %1551 = vmatprep.subr.bf16.mxu0 %v1209
        %1552 = vmatpush1.bf16.msra.mxu0 %v1208
        %1553 = vmatprep.subr.bf16.mxu0 %v1217
        %1554 = vmatpush1.bf16.msra.mxu0 %v1216
        %1555 = vmatprep.subr.bf16.mxu0 %v1225
        %1556 = vmatpush1.bf16.msra.mxu0 %v1224
        %1557 = vmatprep.subr.bf16.mxu0 %v1233
        %1558 = vmatpush1.bf16.msra.mxu0 %v1232
        %1559 = vmatprep.subr.bf16.mxu0 %v1241
        %1560 = vmatpush1.bf16.msra.mxu0 %v1240
        %1561 = vmatprep.subr.bf16.mxu0 %v1249
        %1562 = vmatpush1.bf16.msra.mxu0 %v1248
        %1563 = vmatprep.subr.bf16.mxu0 %v1257
        %1564 = vmatpush1.bf16.msra.mxu0 %v1256
        %1565 = vmatprep.subr.bf16.mxu0 %v1265
        %1566 = vmatpush1.bf16.msra.mxu0 %v1264
        %1567 = vmatprep.subr.bf16.mxu0 %v1273
        %1568 = vmatpush1.bf16.msra.mxu0 %v1272
        %1569 = vmatprep.subr.bf16.mxu0 %v1281
        %1570 = vmatpush1.bf16.msra.mxu0 %v1280
        %1571 = vmatprep.subr.bf16.mxu0 %v1289
        %1572 = vmatpush1.bf16.msra.mxu0 %v1288
        %1573 = vmatprep.subr.bf16.mxu0 %v1297
        %1574 = vmatpush1.bf16.msra.mxu0 %v1296
        %1575 = vmatprep.mubr.bf16.mxu0 %v759
        %1576 = vmatmul.mubr.bf16.gmra.mrb[0].mxu0 %v758
        %v1577 = vpop.f32.mrb[0].mxu0
        %v1578 = vadd.f32 %v681, %v1577
        %v1579 = vpop.f32.mrb[0].mxu0
        %v1580 = vadd.f32 %v685, %v1579
        %v1581 = vpop.f32.mrb[0].mxu0
        %v1582 = vadd.f32 %v681, %v1581
        %v1583 = vpop.f32.mrb[0].mxu0
        %v1584 = vadd.f32 %v685, %v1583
        %1585 = vmatprep.mubr.bf16.mxu0 %v761
        %1586 = vmatmul.mubr.bf16.gmra.mrb[0].mxu0 %v760
        %v1587 = vpop.f32.mrb[0].mxu0
        %v1588 = vadd.f32 %v681, %v1587
        %v1589 = vpop.f32.mrb[0].mxu0
        %v1590 = vadd.f32 %v685, %v1589
        %v1591 = vpop.f32.mrb[0].mxu0
        %v1592 = vadd.f32 %v681, %v1591
        %v1593 = vpop.f32.mrb[0].mxu0
        %v1594 = vadd.f32 %v685, %v1593
        %1595 = vmatprep.mubr.bf16.mxu0 %v763
        %1596 = vmatmul.mubr.bf16.gmra.mrb[0].mxu0 %v762
        %v1597 = vpop.f32.mrb[0].mxu0
        %v1598 = vadd.f32 %v681, %v1597
        %v1599 = vpop.f32.mrb[0].mxu0
        %v1600 = vadd.f32 %v685, %v1599
        %v1601 = vpop.f32.mrb[0].mxu0
        %v1602 = vadd.f32 %v681, %v1601
        %v1603 = vpop.f32.mrb[0].mxu0
        %v1604 = vadd.f32 %v685, %v1603
        %1605 = vmatprep.mubr.bf16.mxu0 %v765
        %1606 = vmatmul.mubr.bf16.gmra.mrb[0].mxu0 %v764
        %v1607 = vpop.f32.mrb[0].mxu0
        %v1608 = vadd.f32 %v681, %v1607
        %v1609 = vpop.f32.mrb[0].mxu0
        %v1610 = vadd.f32 %v685, %v1609
        %v1611 = vpop.f32.mrb[0].mxu0
        %v1612 = vadd.f32 %v681, %v1611
        %v1613 = vpop.f32.mrb[0].mxu0
        %v1614 = vadd.f32 %v685, %v1613
        %1615 = vmatprep.mubr.bf16.mxu0 %v767
        %1616 = vmatmul.mubr.bf16.gmra.mrb[0].mxu0 %v766
        %v1617 = vpop.f32.mrb[0].mxu0
        %v1618 = vadd.f32 %v681, %v1617
        %v1619 = vpop.f32.mrb[0].mxu0
        %v1620 = vadd.f32 %v685, %v1619
        %v1621 = vpop.f32.mrb[0].mxu0
        %v1622 = vadd.f32 %v681, %v1621
        %v1623 = vpop.f32.mrb[0].mxu0
        %v1624 = vadd.f32 %v685, %v1623
        %1625 = vmatprep.mubr.bf16.mxu0 %v769
        %1626 = vmatmul.mubr.bf16.gmra.mrb[0].mxu0 %v768
        %v1627 = vpop.f32.mrb[0].mxu0
        %v1628 = vadd.f32 %v681, %v1627
        %v1629 = vpop.f32.mrb[0].mxu0
        %v1630 = vadd.f32 %v685, %v1629
        %v1631 = vpop.f32.mrb[0].mxu0
        %v1632 = vadd.f32 %v681, %v1631
        %v1633 = vpop.f32.mrb[0].mxu0
        %v1634 = vadd.f32 %v685, %v1633
        %1635 = vmatprep.mubr.bf16.mxu0 %v771
        %1636 = vmatmul.mubr.bf16.gmra.mrb[0].mxu0 %v770
        %v1637 = vpop.f32.mrb[0].mxu0
        %v1638 = vadd.f32 %v681, %v1637
        %v1639 = vpop.f32.mrb[0].mxu0
        %v1640 = vadd.f32 %v685, %v1639
        %v1641 = vpop.f32.mrb[0].mxu0
        %v1642 = vadd.f32 %v681, %v1641
        %v1643 = vpop.f32.mrb[0].mxu0
        %v1644 = vadd.f32 %v685, %v1643
        %1645 = vmatprep.mubr.bf16.mxu0 %v773
        %1646 = vmatmul.mubr.bf16.gmra.mrb[0].mxu0 %v772
        %v1647 = vpop.f32.mrb[0].mxu0
        %v1648 = vadd.f32 %v681, %v1647
        %v1649 = vpop.f32.mrb[0].mxu0
        %v1650 = vadd.f32 %v685, %v1649
        %v1651 = vpop.f32.mrb[0].mxu0
        %v1652 = vadd.f32 %v681, %v1651
        %v1653 = vpop.f32.mrb[0].mxu0
        %v1654 = vadd.f32 %v685, %v1653
        %1655 = vdwg.mxu0
        %1656 = vmatprep.subr.bf16.mxu0 %v1179
        %1657 = vmatpush1.bf16.msra.mxu0 %v1178
        %1658 = vmatprep.subr.bf16.mxu0 %v1187
        %1659 = vmatpush1.bf16.msra.mxu0 %v1186
        %1660 = vmatprep.subr.bf16.mxu0 %v1195
        %1661 = vmatpush1.bf16.msra.mxu0 %v1194
        %1662 = vmatprep.subr.bf16.mxu0 %v1203
        %1663 = vmatpush1.bf16.msra.mxu0 %v1202
        %1664 = vmatprep.subr.bf16.mxu0 %v1211
        %1665 = vmatpush1.bf16.msra.mxu0 %v1210
        %1666 = vmatprep.subr.bf16.mxu0 %v1219
        %1667 = vmatpush1.bf16.msra.mxu0 %v1218
        %1668 = vmatprep.subr.bf16.mxu0 %v1227
        %1669 = vmatpush1.bf16.msra.mxu0 %v1226
        %1670 = vmatprep.subr.bf16.mxu0 %v1235
        %1671 = vmatpush1.bf16.msra.mxu0 %v1234
        %1672 = vmatprep.subr.bf16.mxu0 %v1243
        %1673 = vmatpush1.bf16.msra.mxu0 %v1242
        %1674 = vmatprep.subr.bf16.mxu0 %v1251
        %1675 = vmatpush1.bf16.msra.mxu0 %v1250
        %1676 = vmatprep.subr.bf16.mxu0 %v1259
        %1677 = vmatpush1.bf16.msra.mxu0 %v1258
        %1678 = vmatprep.subr.bf16.mxu0 %v1267
        %1679 = vmatpush1.bf16.msra.mxu0 %v1266
        %1680 = vmatprep.subr.bf16.mxu0 %v1275
        %1681 = vmatpush1.bf16.msra.mxu0 %v1274
        %1682 = vmatprep.subr.bf16.mxu0 %v1283
        %1683 = vmatpush1.bf16.msra.mxu0 %v1282
        %1684 = vmatprep.subr.bf16.mxu0 %v1291
        %1685 = vmatpush1.bf16.msra.mxu0 %v1290
        %1686 = vmatprep.subr.bf16.mxu0 %v1299
        %1687 = vmatpush1.bf16.msra.mxu0 %v1298
        %1688 = vmatprep.mubr.bf16.mxu0 %v759
        %1689 = vmatmul.mubr.bf16.gmra.mrb[0].mxu0 %v758
        %v1690 = vpop.f32.mrb[0].mxu0
        %v1691 = vadd.f32 %v689, %v1690
        %v1692 = vpop.f32.mrb[0].mxu0
        %v1693 = vadd.f32 %v693, %v1692
        %v1694 = vpop.f32.mrb[0].mxu0
        %v1695 = vadd.f32 %v689, %v1694
        %v1696 = vpop.f32.mrb[0].mxu0
        %v1697 = vadd.f32 %v693, %v1696
        %1698 = vmatprep.mubr.bf16.mxu0 %v761
        %1699 = vmatmul.mubr.bf16.gmra.mrb[0].mxu0 %v760
        %v1700 = vpop.f32.mrb[0].mxu0
        %v1701 = vadd.f32 %v689, %v1700
        %v1702 = vpop.f32.mrb[0].mxu0
        %v1703 = vadd.f32 %v693, %v1702
        %v1704 = vpop.f32.mrb[0].mxu0
        %v1705 = vadd.f32 %v689, %v1704
        %v1706 = vpop.f32.mrb[0].mxu0
        %v1707 = vadd.f32 %v693, %v1706
        %1708 = vmatprep.mubr.bf16.mxu0 %v763
        %1709 = vmatmul.mubr.bf16.gmra.mrb[0].mxu0 %v762
        %v1710 = vpop.f32.mrb[0].mxu0
        %v1711 = vadd.f32 %v689, %v1710
        %v1712 = vpop.f32.mrb[0].mxu0
        %v1713 = vadd.f32 %v693, %v1712
        %v1714 = vpop.f32.mrb[0].mxu0
        %v1715 = vadd.f32 %v689, %v1714
        %v1716 = vpop.f32.mrb[0].mxu0
        %v1717 = vadd.f32 %v693, %v1716
        %1718 = vmatprep.mubr.bf16.mxu0 %v765
        %1719 = vmatmul.mubr.bf16.gmra.mrb[0].mxu0 %v764
        %v1720 = vpop.f32.mrb[0].mxu0
        %v1721 = vadd.f32 %v689, %v1720
        %v1722 = vpop.f32.mrb[0].mxu0
        %v1723 = vadd.f32 %v693, %v1722
        %v1724 = vpop.f32.mrb[0].mxu0
        %v1725 = vadd.f32 %v689, %v1724
        %v1726 = vpop.f32.mrb[0].mxu0
        %v1727 = vadd.f32 %v693, %v1726
        %1728 = vmatprep.mubr.bf16.mxu0 %v767
        %1729 = vmatmul.mubr.bf16.gmra.mrb[0].mxu0 %v766
        %v1730 = vpop.f32.mrb[0].mxu0
        %v1731 = vadd.f32 %v689, %v1730
        %v1732 = vpop.f32.mrb[0].mxu0
        %v1733 = vadd.f32 %v693, %v1732
        %v1734 = vpop.f32.mrb[0].mxu0
        %v1735 = vadd.f32 %v689, %v1734
        %v1736 = vpop.f32.mrb[0].mxu0
        %v1737 = vadd.f32 %v693, %v1736
        %1738 = vmatprep.mubr.bf16.mxu0 %v769
        %1739 = vmatmul.mubr.bf16.gmra.mrb[0].mxu0 %v768
        %v1740 = vpop.f32.mrb[0].mxu0
        %v1741 = vadd.f32 %v689, %v1740
        %v1742 = vpop.f32.mrb[0].mxu0
        %v1743 = vadd.f32 %v693, %v1742
        %v1744 = vpop.f32.mrb[0].mxu0
        %v1745 = vadd.f32 %v689, %v1744
        %v1746 = vpop.f32.mrb[0].mxu0
        %v1747 = vadd.f32 %v693, %v1746
        %1748 = vmatprep.mubr.bf16.mxu0 %v771
        %1749 = vmatmul.mubr.bf16.gmra.mrb[0].mxu0 %v770
        %v1750 = vpop.f32.mrb[0].mxu0
        %v1751 = vadd.f32 %v689, %v1750
        %v1752 = vpop.f32.mrb[0].mxu0
        %v1753 = vadd.f32 %v693, %v1752
        %v1754 = vpop.f32.mrb[0].mxu0
        %v1755 = vadd.f32 %v689, %v1754
        %v1756 = vpop.f32.mrb[0].mxu0
        %v1757 = vadd.f32 %v693, %v1756
        %1758 = vmatprep.mubr.bf16.mxu0 %v773
        %1759 = vmatmul.mubr.bf16.gmra.mrb[0].mxu0 %v772
        %v1760 = vpop.f32.mrb[0].mxu0
        %v1761 = vadd.f32 %v689, %v1760
        %v1762 = vpop.f32.mrb[0].mxu0
        %v1763 = vadd.f32 %v693, %v1762
        %v1764 = vpop.f32.mrb[0].mxu0
        %v1765 = vadd.f32 %v689, %v1764
        %v1766 = vpop.f32.mrb[0].mxu0
        %v1767 = vadd.f32 %v693, %v1766
        %1768 = vdwg.mxu0
        %1769 = vmatprep.subr.bf16.mxu0 %v1181
        %1770 = vmatpush1.bf16.msra.mxu0 %v1180
        %1771 = vmatprep.subr.bf16.mxu0 %v1189
        %1772 = vmatpush1.bf16.msra.mxu0 %v1188
        %1773 = vmatprep.subr.bf16.mxu0 %v1197
        %1774 = vmatpush1.bf16.msra.mxu0 %v1196
        %1775 = vmatprep.subr.bf16.mxu0 %v1205
        %1776 = vmatpush1.bf16.msra.mxu0 %v1204
        %1777 = vmatprep.subr.bf16.mxu0 %v1213
        %1778 = vmatpush1.bf16.msra.mxu0 %v1212
        %1779 = vmatprep.subr.bf16.mxu0 %v1221
        %1780 = vmatpush1.bf16.msra.mxu0 %v1220
        %1781 = vmatprep.subr.bf16.mxu0 %v1229
        %1782 = vmatpush1.bf16.msra.mxu0 %v1228
        %1783 = vmatprep.subr.bf16.mxu0 %v1237
        %1784 = vmatpush1.bf16.msra.mxu0 %v1236
        %1785 = vmatprep.subr.bf16.mxu0 %v1245
        %1786 = vmatpush1.bf16.msra.mxu0 %v1244
        %1787 = vmatprep.subr.bf16.mxu0 %v1253
        %1788 = vmatpush1.bf16.msra.mxu0 %v1252
        %1789 = vmatprep.subr.bf16.mxu0 %v1261
        %1790 = vmatpush1.bf16.msra.mxu0 %v1260
        %1791 = vmatprep.subr.bf16.mxu0 %v1269
        %1792 = vmatpush1.bf16.msra.mxu0 %v1268
        %1793 = vmatprep.subr.bf16.mxu0 %v1277
        %1794 = vmatpush1.bf16.msra.mxu0 %v1276
        %1795 = vmatprep.subr.bf16.mxu0 %v1285
        %1796 = vmatpush1.bf16.msra.mxu0 %v1284
        %1797 = vmatprep.subr.bf16.mxu0 %v1293
        %1798 = vmatpush1.bf16.msra.mxu0 %v1292
        %1799 = vmatprep.subr.bf16.mxu0 %v1301
        %1800 = vmatpush1.bf16.msra.mxu0 %v1300
        %1801 = vmatprep.mubr.bf16.mxu0 %v759
        %1802 = vmatmul.mubr.bf16.gmra.mrb[0].mxu0 %v758
        %v1803 = vpop.f32.mrb[0].mxu0
        %v1804 = vadd.f32 %v697, %v1803
        %v1805 = vpop.f32.mrb[0].mxu0
        %v1806 = vadd.f32 %v701, %v1805
        %v1807 = vpop.f32.mrb[0].mxu0
        %v1808 = vadd.f32 %v697, %v1807
        %v1809 = vpop.f32.mrb[0].mxu0
        %v1810 = vadd.f32 %v701, %v1809
        %1811 = vmatprep.mubr.bf16.mxu0 %v761
        %1812 = vmatmul.mubr.bf16.gmra.mrb[0].mxu0 %v760
        %v1813 = vpop.f32.mrb[0].mxu0
        %v1814 = vadd.f32 %v697, %v1813
        %v1815 = vpop.f32.mrb[0].mxu0
        %v1816 = vadd.f32 %v701, %v1815
        %v1817 = vpop.f32.mrb[0].mxu0
        %v1818 = vadd.f32 %v697, %v1817
        %v1819 = vpop.f32.mrb[0].mxu0
        %v1820 = vadd.f32 %v701, %v1819
        %1821 = vmatprep.mubr.bf16.mxu0 %v763
        %1822 = vmatmul.mubr.bf16.gmra.mrb[0].mxu0 %v762
        %v1823 = vpop.f32.mrb[0].mxu0
        %v1824 = vadd.f32 %v697, %v1823
        %v1825 = vpop.f32.mrb[0].mxu0
        %v1826 = vadd.f32 %v701, %v1825
        %v1827 = vpop.f32.mrb[0].mxu0
        %v1828 = vadd.f32 %v697, %v1827
        %v1829 = vpop.f32.mrb[0].mxu0
        %v1830 = vadd.f32 %v701, %v1829
        %1831 = vmatprep.mubr.bf16.mxu0 %v765
        %1832 = vmatmul.mubr.bf16.gmra.mrb[0].mxu0 %v764
        %v1833 = vpop.f32.mrb[0].mxu0
        %v1834 = vadd.f32 %v697, %v1833
        %v1835 = vpop.f32.mrb[0].mxu0
        %v1836 = vadd.f32 %v701, %v1835
        %v1837 = vpop.f32.mrb[0].mxu0
        %v1838 = vadd.f32 %v697, %v1837
        %v1839 = vpop.f32.mrb[0].mxu0
        %v1840 = vadd.f32 %v701, %v1839
        %1841 = vmatprep.mubr.bf16.mxu0 %v767
        %1842 = vmatmul.mubr.bf16.gmra.mrb[0].mxu0 %v766
        %v1843 = vpop.f32.mrb[0].mxu0
        %v1844 = vadd.f32 %v697, %v1843
        %v1845 = vpop.f32.mrb[0].mxu0
        %v1846 = vadd.f32 %v701, %v1845
        %v1847 = vpop.f32.mrb[0].mxu0
        %v1848 = vadd.f32 %v697, %v1847
        %v1849 = vpop.f32.mrb[0].mxu0
        %v1850 = vadd.f32 %v701, %v1849
        %1851 = vmatprep.mubr.bf16.mxu0 %v769
        %1852 = vmatmul.mubr.bf16.gmra.mrb[0].mxu0 %v768
        %v1853 = vpop.f32.mrb[0].mxu0
        %v1854 = vadd.f32 %v697, %v1853
        %v1855 = vpop.f32.mrb[0].mxu0
        %v1856 = vadd.f32 %v701, %v1855
        %v1857 = vpop.f32.mrb[0].mxu0
        %v1858 = vadd.f32 %v697, %v1857
        %v1859 = vpop.f32.mrb[0].mxu0
        %v1860 = vadd.f32 %v701, %v1859
        %1861 = vmatprep.mubr.bf16.mxu0 %v771
        %1862 = vmatmul.mubr.bf16.gmra.mrb[0].mxu0 %v770
        %v1863 = vpop.f32.mrb[0].mxu0
        %v1864 = vadd.f32 %v697, %v1863
        %v1865 = vpop.f32.mrb[0].mxu0
        %v1866 = vadd.f32 %v701, %v1865
        %v1867 = vpop.f32.mrb[0].mxu0
        %v1868 = vadd.f32 %v697, %v1867
        %v1869 = vpop.f32.mrb[0].mxu0
        %v1870 = vadd.f32 %v701, %v1869
        %1871 = vmatprep.mubr.bf16.mxu0 %v773
        %1872 = vmatmul.mubr.bf16.gmra.mrb[0].mxu0 %v772
        %v1873 = vpop.f32.mrb[0].mxu0
        %v1874 = vadd.f32 %v697, %v1873
        %v1875 = vpop.f32.mrb[0].mxu0
        %v1876 = vadd.f32 %v701, %v1875
        %v1877 = vpop.f32.mrb[0].mxu0
        %v1878 = vadd.f32 %v697, %v1877
        %v1879 = vpop.f32.mrb[0].mxu0
        %v1880 = vadd.f32 %v701, %v1879
        %1881 = vdwg.mxu0
        %v1882 = vmax.f32 %v1465, 0.0
        %v1883 = vmax.f32 %v1467, 0.0
        %v1884 = vmax.f32 %v1578, 0.0
        %v1885 = vmax.f32 %v1580, 0.0
        %v1886 = vmax.f32 %v1691, 0.0
        %v1887 = vmax.f32 %v1693, 0.0
        %v1888 = vmax.f32 %v1804, 0.0
        %v1889 = vmax.f32 %v1806, 0.0
        %v1890 = vmax.f32 %v1469, 0.0
        %v1891 = vmax.f32 %v1471, 0.0
        %v1892 = vmax.f32 %v1582, 0.0
        %v1893 = vmax.f32 %v1584, 0.0
        %v1894 = vmax.f32 %v1695, 0.0
        %v1895 = vmax.f32 %v1697, 0.0
        %v1896 = vmax.f32 %v1808, 0.0
        %v1897 = vmax.f32 %v1810, 0.0
        %v1898 = vmax.f32 %v1475, 0.0
        %v1899 = vmax.f32 %v1477, 0.0
        %v1900 = vmax.f32 %v1588, 0.0
        %v1901 = vmax.f32 %v1590, 0.0
        %v1902 = vmax.f32 %v1701, 0.0
        %v1903 = vmax.f32 %v1703, 0.0
        %v1904 = vmax.f32 %v1814, 0.0
        %v1905 = vmax.f32 %v1816, 0.0
        %v1906 = vmax.f32 %v1479, 0.0
        %v1907 = vmax.f32 %v1481, 0.0
        %v1908 = vmax.f32 %v1592, 0.0
        %v1909 = vmax.f32 %v1594, 0.0
        %v1910 = vmax.f32 %v1705, 0.0
        %v1911 = vmax.f32 %v1707, 0.0
        %v1912 = vmax.f32 %v1818, 0.0
        %v1913 = vmax.f32 %v1820, 0.0
        %v1914 = vmax.f32 %v1485, 0.0
        %v1915 = vmax.f32 %v1487, 0.0
        %v1916 = vmax.f32 %v1598, 0.0
        %v1917 = vmax.f32 %v1600, 0.0
        %v1918 = vmax.f32 %v1711, 0.0
        %v1919 = vmax.f32 %v1713, 0.0
        %v1920 = vmax.f32 %v1824, 0.0
        %v1921 = vmax.f32 %v1826, 0.0
        %v1922 = vmax.f32 %v1489, 0.0
        %v1923 = vmax.f32 %v1491, 0.0
        %v1924 = vmax.f32 %v1602, 0.0
        %v1925 = vmax.f32 %v1604, 0.0
        %v1926 = vmax.f32 %v1715, 0.0
        %v1927 = vmax.f32 %v1717, 0.0
        %v1928 = vmax.f32 %v1828, 0.0
        %v1929 = vmax.f32 %v1830, 0.0
        %v1930 = vmax.f32 %v1495, 0.0
        %v1931 = vmax.f32 %v1497, 0.0
        %v1932 = vmax.f32 %v1608, 0.0
        %v1933 = vmax.f32 %v1610, 0.0
        %v1934 = vmax.f32 %v1721, 0.0
        %v1935 = vmax.f32 %v1723, 0.0
        %v1936 = vmax.f32 %v1834, 0.0
        %v1937 = vmax.f32 %v1836, 0.0
        %v1938 = vmax.f32 %v1499, 0.0
        %v1939 = vmax.f32 %v1501, 0.0
        %v1940 = vmax.f32 %v1612, 0.0
        %v1941 = vmax.f32 %v1614, 0.0
        %v1942 = vmax.f32 %v1725, 0.0
        %v1943 = vmax.f32 %v1727, 0.0
        %v1944 = vmax.f32 %v1838, 0.0
        %v1945 = vmax.f32 %v1840, 0.0
        %v1946 = vmax.f32 %v1505, 0.0
        %v1947 = vmax.f32 %v1507, 0.0
        %v1948 = vmax.f32 %v1618, 0.0
        %v1949 = vmax.f32 %v1620, 0.0
        %v1950 = vmax.f32 %v1731, 0.0
        %v1951 = vmax.f32 %v1733, 0.0
        %v1952 = vmax.f32 %v1844, 0.0
        %v1953 = vmax.f32 %v1846, 0.0
        %v1954 = vmax.f32 %v1509, 0.0
        %v1955 = vmax.f32 %v1511, 0.0
        %v1956 = vmax.f32 %v1622, 0.0
        %v1957 = vmax.f32 %v1624, 0.0
        %v1958 = vmax.f32 %v1735, 0.0
        %v1959 = vmax.f32 %v1737, 0.0
        %v1960 = vmax.f32 %v1848, 0.0
        %v1961 = vmax.f32 %v1850, 0.0
        %v1962 = vmax.f32 %v1515, 0.0
        %v1963 = vmax.f32 %v1517, 0.0
        %v1964 = vmax.f32 %v1628, 0.0
        %v1965 = vmax.f32 %v1630, 0.0
        %v1966 = vmax.f32 %v1741, 0.0
        %v1967 = vmax.f32 %v1743, 0.0
        %v1968 = vmax.f32 %v1854, 0.0
        %v1969 = vmax.f32 %v1856, 0.0
        %v1970 = vmax.f32 %v1519, 0.0
        %v1971 = vmax.f32 %v1521, 0.0
        %v1972 = vmax.f32 %v1632, 0.0
        %v1973 = vmax.f32 %v1634, 0.0
        %v1974 = vmax.f32 %v1745, 0.0
        %v1975 = vmax.f32 %v1747, 0.0
        %v1976 = vmax.f32 %v1858, 0.0
        %v1977 = vmax.f32 %v1860, 0.0
        %v1978 = vmax.f32 %v1525, 0.0
        %v1979 = vmax.f32 %v1527, 0.0
        %v1980 = vmax.f32 %v1638, 0.0
        %v1981 = vmax.f32 %v1640, 0.0
        %v1982 = vmax.f32 %v1751, 0.0
        %v1983 = vmax.f32 %v1753, 0.0
        %v1984 = vmax.f32 %v1864, 0.0
        %v1985 = vmax.f32 %v1866, 0.0
        %v1986 = vmax.f32 %v1529, 0.0
        %v1987 = vmax.f32 %v1531, 0.0
        %v1988 = vmax.f32 %v1642, 0.0
        %v1989 = vmax.f32 %v1644, 0.0
        %v1990 = vmax.f32 %v1755, 0.0
        %v1991 = vmax.f32 %v1757, 0.0
        %v1992 = vmax.f32 %v1868, 0.0
        %v1993 = vmax.f32 %v1870, 0.0
        %v1994 = vmax.f32 %v1535, 0.0
        %v1995 = vmax.f32 %v1537, 0.0
        %v1996 = vmax.f32 %v1648, 0.0
        %v1997 = vmax.f32 %v1650, 0.0
        %v1998 = vmax.f32 %v1761, 0.0
        %v1999 = vmax.f32 %v1763, 0.0
        %v2000 = vmax.f32 %v1874, 0.0
        %v2001 = vmax.f32 %v1876, 0.0
        %v2002 = vmax.f32 %v1539, 0.0
        %v2003 = vmax.f32 %v1541, 0.0
        %v2004 = vmax.f32 %v1652, 0.0
        %v2005 = vmax.f32 %v1654, 0.0
        %v2006 = vmax.f32 %v1765, 0.0
        %v2007 = vmax.f32 %v1767, 0.0
        %v2008 = vmax.f32 %v1878, 0.0
        %v2009 = vmax.f32 %v1880, 0.0
        %v2010 = vpack.c.bf16 %v1890, %v1882
        %v2011 = vpack.c.bf16 %v1891, %v1883
        %v2012 = vpack.c.bf16 %v1892, %v1884
        %v2013 = vpack.c.bf16 %v1893, %v1885
        %v2014 = vpack.c.bf16 %v1894, %v1886
        %v2015 = vpack.c.bf16 %v1895, %v1887
        %v2016 = vpack.c.bf16 %v1896, %v1888
        %v2017 = vpack.c.bf16 %v1897, %v1889
        %v2018 = vpack.c.bf16 %v1906, %v1898
        %v2019 = vpack.c.bf16 %v1907, %v1899
        %v2020 = vpack.c.bf16 %v1908, %v1900
        %v2021 = vpack.c.bf16 %v1909, %v1901
        %v2022 = vpack.c.bf16 %v1910, %v1902
        %v2023 = vpack.c.bf16 %v1911, %v1903
        %v2024 = vpack.c.bf16 %v1912, %v1904
        %v2025 = vpack.c.bf16 %v1913, %v1905
        %v2026 = vpack.c.bf16 %v1922, %v1914
        %v2027 = vpack.c.bf16 %v1923, %v1915
        %v2028 = vpack.c.bf16 %v1924, %v1916
        %v2029 = vpack.c.bf16 %v1925, %v1917
        %v2030 = vpack.c.bf16 %v1926, %v1918
        %v2031 = vpack.c.bf16 %v1927, %v1919
        %v2032 = vpack.c.bf16 %v1928, %v1920
        %v2033 = vpack.c.bf16 %v1929, %v1921
        %v2034 = vpack.c.bf16 %v1938, %v1930
        %v2035 = vpack.c.bf16 %v1939, %v1931
        %v2036 = vpack.c.bf16 %v1940, %v1932
        %v2037 = vpack.c.bf16 %v1941, %v1933
        %v2038 = vpack.c.bf16 %v1942, %v1934
        %v2039 = vpack.c.bf16 %v1943, %v1935
        %v2040 = vpack.c.bf16 %v1944, %v1936
        %v2041 = vpack.c.bf16 %v1945, %v1937
        %v2042 = vpack.c.bf16 %v1954, %v1946
        %v2043 = vpack.c.bf16 %v1955, %v1947
        %v2044 = vpack.c.bf16 %v1956, %v1948
        %v2045 = vpack.c.bf16 %v1957, %v1949
        %v2046 = vpack.c.bf16 %v1958, %v1950
        %v2047 = vpack.c.bf16 %v1959, %v1951
        %v2048 = vpack.c.bf16 %v1960, %v1952
        %v2049 = vpack.c.bf16 %v1961, %v1953
        %v2050 = vpack.c.bf16 %v1970, %v1962
        %v2051 = vpack.c.bf16 %v1971, %v1963
        %v2052 = vpack.c.bf16 %v1972, %v1964
        %v2053 = vpack.c.bf16 %v1973, %v1965
        %v2054 = vpack.c.bf16 %v1974, %v1966
        %v2055 = vpack.c.bf16 %v1975, %v1967
        %v2056 = vpack.c.bf16 %v1976, %v1968
        %v2057 = vpack.c.bf16 %v1977, %v1969
        %v2058 = vpack.c.bf16 %v1986, %v1978
        %v2059 = vpack.c.bf16 %v1987, %v1979
        %v2060 = vpack.c.bf16 %v1988, %v1980
        %v2061 = vpack.c.bf16 %v1989, %v1981
        %v2062 = vpack.c.bf16 %v1990, %v1982
        %v2063 = vpack.c.bf16 %v1991, %v1983
        %v2064 = vpack.c.bf16 %v1992, %v1984
        %v2065 = vpack.c.bf16 %v1993, %v1985
        %v2066 = vpack.c.bf16 %v2002, %v1994
        %v2067 = vpack.c.bf16 %v2003, %v1995
        %v2068 = vpack.c.bf16 %v2004, %v1996
        %v2069 = vpack.c.bf16 %v2005, %v1997
        %v2070 = vpack.c.bf16 %v2006, %v1998
        %v2071 = vpack.c.bf16 %v2007, %v1999
        %v2072 = vpack.c.bf16 %v2008, %v2000
        %v2073 = vpack.c.bf16 %v2009, %v2001
        %v2074 = vld [vmem:[%s4] sm:$0xff]
        %v2075 = vld [vmem:[%s4 + $0x8] sm:$0xff]
        %v2076 = vld [vmem:[%s4 + $0x10] sm:$0xff]
        %v2077 = vld [vmem:[%s4 + $0x18] sm:$0xff]
        %v2078 = vld [vmem:[%s4 + $0x20] sm:$0xff]
        %v2079 = vld [vmem:[%s4 + $0x28] sm:$0xff]
        %v2080 = vld [vmem:[%s4 + $0x30] sm:$0xff]
        %v2081 = vld [vmem:[%s4 + $0x38] sm:$0xff]
        %v2082 = vld [vmem:[%s4 + $0x40] sm:$0xff]
        %v2083 = vld [vmem:[%s4 + $0x48] sm:$0xff]
        %v2084 = vld [vmem:[%s4 + $0x50] sm:$0xff]
        %v2085 = vld [vmem:[%s4 + $0x58] sm:$0xff]
        %v2086 = vld [vmem:[%s4 + $0x60] sm:$0xff]
        %v2087 = vld [vmem:[%s4 + $0x68] sm:$0xff]
        %v2088 = vld [vmem:[%s4 + $0x70] sm:$0xff]
        %v2089 = vld [vmem:[%s4 + $0x78] sm:$0xff]
        %v2090 = vld [vmem:[%s4 + $0x80] sm:$0xff]
        %v2091 = vld [vmem:[%s4 + $0x88] sm:$0xff]
        %v2092 = vld [vmem:[%s4 + $0x90] sm:$0xff]
        %v2093 = vld [vmem:[%s4 + $0x98] sm:$0xff]
        %v2094 = vld [vmem:[%s4 + $0xa0] sm:$0xff]
        %v2095 = vld [vmem:[%s4 + $0xa8] sm:$0xff]
        %v2096 = vld [vmem:[%s4 + $0xb0] sm:$0xff]
        %v2097 = vld [vmem:[%s4 + $0xb8] sm:$0xff]
        %v2098 = vld [vmem:[%s4 + $0xc0] sm:$0xff]
        %v2099 = vld [vmem:[%s4 + $0xc8] sm:$0xff]
        %v2100 = vld [vmem:[%s4 + $0xd0] sm:$0xff]
        %v2101 = vld [vmem:[%s4 + $0xd8] sm:$0xff]
        %v2102 = vld [vmem:[%s4 + $0xe0] sm:$0xff]
        %v2103 = vld [vmem:[%s4 + $0xe8] sm:$0xff]
        %v2104 = vld [vmem:[%s4 + $0xf0] sm:$0xff]
        %v2105 = vld [vmem:[%s4 + $0xf8] sm:$0xff]
        %v2106 = vld [vmem:[%s4 + $0x100] sm:$0xff]
        %v2107 = vld [vmem:[%s4 + $0x108] sm:$0xff]
        %v2108 = vld [vmem:[%s4 + $0x110] sm:$0xff]
        %v2109 = vld [vmem:[%s4 + $0x118] sm:$0xff]
        %v2110 = vld [vmem:[%s4 + $0x120] sm:$0xff]
        %v2111 = vld [vmem:[%s4 + $0x128] sm:$0xff]
        %v2112 = vld [vmem:[%s4 + $0x130] sm:$0xff]
        %v2113 = vld [vmem:[%s4 + $0x138] sm:$0xff]
        %v2114 = vld [vmem:[%s4 + $0x140] sm:$0xff]
        %v2115 = vld [vmem:[%s4 + $0x148] sm:$0xff]
        %v2116 = vld [vmem:[%s4 + $0x150] sm:$0xff]
        %v2117 = vld [vmem:[%s4 + $0x158] sm:$0xff]
        %v2118 = vld [vmem:[%s4 + $0x160] sm:$0xff]
        %v2119 = vld [vmem:[%s4 + $0x168] sm:$0xff]
        %v2120 = vld [vmem:[%s4 + $0x170] sm:$0xff]
        %v2121 = vld [vmem:[%s4 + $0x178] sm:$0xff]
        %v2122 = vld [vmem:[%s4 + $0x180] sm:$0xff]
        %v2123 = vld [vmem:[%s4 + $0x188] sm:$0xff]
        %v2124 = vld [vmem:[%s4 + $0x190] sm:$0xff]
        %v2125 = vld [vmem:[%s4 + $0x198] sm:$0xff]
        %v2126 = vld [vmem:[%s4 + $0x1a0] sm:$0xff]
        %v2127 = vld [vmem:[%s4 + $0x1a8] sm:$0xff]
        %v2128 = vld [vmem:[%s4 + $0x1b0] sm:$0xff]
        %v2129 = vld [vmem:[%s4 + $0x1b8] sm:$0xff]
        %v2130 = vld [vmem:[%s4 + $0x1c0] sm:$0xff]
        %v2131 = vld [vmem:[%s4 + $0x1c8] sm:$0xff]
        %v2132 = vld [vmem:[%s4 + $0x1d0] sm:$0xff]
        %v2133 = vld [vmem:[%s4 + $0x1d8] sm:$0xff]
        %v2134 = vld [vmem:[%s4 + $0x1e0] sm:$0xff]
        %v2135 = vld [vmem:[%s4 + $0x1e8] sm:$0xff]
        %v2136 = vld [vmem:[%s4 + $0x1f0] sm:$0xff]
        %v2137 = vld [vmem:[%s4 + $0x1f8] sm:$0xff]
        %v2138 = vld [vmem:[%s4 + $0x200] sm:$0xff]
        %v2139 = vld [vmem:[%s4 + $0x208] sm:$0xff]
        %v2140 = vld [vmem:[%s4 + $0x210] sm:$0xff]
        %v2141 = vld [vmem:[%s4 + $0x218] sm:$0xff]
        %v2142 = vld [vmem:[%s4 + $0x220] sm:$0xff]
        %v2143 = vld [vmem:[%s4 + $0x228] sm:$0xff]
        %v2144 = vld [vmem:[%s4 + $0x230] sm:$0xff]
        %v2145 = vld [vmem:[%s4 + $0x238] sm:$0xff]
        %v2146 = vld [vmem:[%s4 + $0x240] sm:$0xff]
        %v2147 = vld [vmem:[%s4 + $0x248] sm:$0xff]
        %v2148 = vld [vmem:[%s4 + $0x250] sm:$0xff]
        %v2149 = vld [vmem:[%s4 + $0x258] sm:$0xff]
        %v2150 = vld [vmem:[%s4 + $0x260] sm:$0xff]
        %v2151 = vld [vmem:[%s4 + $0x268] sm:$0xff]
        %v2152 = vld [vmem:[%s4 + $0x270] sm:$0xff]
        %v2153 = vld [vmem:[%s4 + $0x278] sm:$0xff]
        %v2154 = vld [vmem:[%s4 + $0x280] sm:$0xff]
        %v2155 = vld [vmem:[%s4 + $0x288] sm:$0xff]
        %v2156 = vld [vmem:[%s4 + $0x290] sm:$0xff]
        %v2157 = vld [vmem:[%s4 + $0x298] sm:$0xff]
        %v2158 = vld [vmem:[%s4 + $0x2a0] sm:$0xff]
        %v2159 = vld [vmem:[%s4 + $0x2a8] sm:$0xff]
        %v2160 = vld [vmem:[%s4 + $0x2b0] sm:$0xff]
        %v2161 = vld [vmem:[%s4 + $0x2b8] sm:$0xff]
        %v2162 = vld [vmem:[%s4 + $0x2c0] sm:$0xff]
        %v2163 = vld [vmem:[%s4 + $0x2c8] sm:$0xff]
        %v2164 = vld [vmem:[%s4 + $0x2d0] sm:$0xff]
        %v2165 = vld [vmem:[%s4 + $0x2d8] sm:$0xff]
        %v2166 = vld [vmem:[%s4 + $0x2e0] sm:$0xff]
        %v2167 = vld [vmem:[%s4 + $0x2e8] sm:$0xff]
        %v2168 = vld [vmem:[%s4 + $0x2f0] sm:$0xff]
        %v2169 = vld [vmem:[%s4 + $0x2f8] sm:$0xff]
        %v2170 = vld [vmem:[%s4 + $0x300] sm:$0xff]
        %v2171 = vld [vmem:[%s4 + $0x308] sm:$0xff]
        %v2172 = vld [vmem:[%s4 + $0x310] sm:$0xff]
        %v2173 = vld [vmem:[%s4 + $0x318] sm:$0xff]
        %v2174 = vld [vmem:[%s4 + $0x320] sm:$0xff]
        %v2175 = vld [vmem:[%s4 + $0x328] sm:$0xff]
        %v2176 = vld [vmem:[%s4 + $0x330] sm:$0xff]
        %v2177 = vld [vmem:[%s4 + $0x338] sm:$0xff]
        %v2178 = vld [vmem:[%s4 + $0x340] sm:$0xff]
        %v2179 = vld [vmem:[%s4 + $0x348] sm:$0xff]
        %v2180 = vld [vmem:[%s4 + $0x350] sm:$0xff]
        %v2181 = vld [vmem:[%s4 + $0x358] sm:$0xff]
        %v2182 = vld [vmem:[%s4 + $0x360] sm:$0xff]
        %v2183 = vld [vmem:[%s4 + $0x368] sm:$0xff]
        %v2184 = vld [vmem:[%s4 + $0x370] sm:$0xff]
        %v2185 = vld [vmem:[%s4 + $0x378] sm:$0xff]
        %v2186 = vld [vmem:[%s4 + $0x380] sm:$0xff]
        %v2187 = vld [vmem:[%s4 + $0x388] sm:$0xff]
        %v2188 = vld [vmem:[%s4 + $0x390] sm:$0xff]
        %v2189 = vld [vmem:[%s4 + $0x398] sm:$0xff]
        %v2190 = vld [vmem:[%s4 + $0x3a0] sm:$0xff]
        %v2191 = vld [vmem:[%s4 + $0x3a8] sm:$0xff]
        %v2192 = vld [vmem:[%s4 + $0x3b0] sm:$0xff]
        %v2193 = vld [vmem:[%s4 + $0x3b8] sm:$0xff]
        %v2194 = vld [vmem:[%s4 + $0x3c0] sm:$0xff]
        %v2195 = vld [vmem:[%s4 + $0x3c8] sm:$0xff]
        %v2196 = vld [vmem:[%s4 + $0x3d0] sm:$0xff]
        %v2197 = vld [vmem:[%s4 + $0x3d8] sm:$0xff]
        %v2198 = vld [vmem:[%s4 + $0x3e0] sm:$0xff]
        %v2199 = vld [vmem:[%s4 + $0x3e8] sm:$0xff]
        %v2200 = vld [vmem:[%s4 + $0x3f0] sm:$0xff]
        %v2201 = vld [vmem:[%s4 + $0x3f8] sm:$0xff]
        %v2202 = vld [vmem:[%s4 + $0x400] sm:$0xff]
        %v2203 = vld [vmem:[%s4 + $0x408] sm:$0xff]
        %v2204 = vld [vmem:[%s4 + $0x410] sm:$0xff]
        %v2205 = vld [vmem:[%s4 + $0x418] sm:$0xff]
        %v2206 = vld [vmem:[%s4 + $0x420] sm:$0xff]
        %v2207 = vld [vmem:[%s4 + $0x428] sm:$0xff]
        %v2208 = vld [vmem:[%s4 + $0x430] sm:$0xff]
        %v2209 = vld [vmem:[%s4 + $0x438] sm:$0xff]
        %v2210 = vld [vmem:[%s4 + $0x440] sm:$0xff]
        %v2211 = vld [vmem:[%s4 + $0x448] sm:$0xff]
        %v2212 = vld [vmem:[%s4 + $0x450] sm:$0xff]
        %v2213 = vld [vmem:[%s4 + $0x458] sm:$0xff]
        %v2214 = vld [vmem:[%s4 + $0x460] sm:$0xff]
        %v2215 = vld [vmem:[%s4 + $0x468] sm:$0xff]
        %v2216 = vld [vmem:[%s4 + $0x470] sm:$0xff]
        %v2217 = vld [vmem:[%s4 + $0x478] sm:$0xff]
        %v2218 = vld [vmem:[%s4 + $0x480] sm:$0xff]
        %v2219 = vld [vmem:[%s4 + $0x488] sm:$0xff]
        %v2220 = vld [vmem:[%s4 + $0x490] sm:$0xff]
        %v2221 = vld [vmem:[%s4 + $0x498] sm:$0xff]
        %v2222 = vld [vmem:[%s4 + $0x4a0] sm:$0xff]
        %v2223 = vld [vmem:[%s4 + $0x4a8] sm:$0xff]
        %v2224 = vld [vmem:[%s4 + $0x4b0] sm:$0xff]
        %v2225 = vld [vmem:[%s4 + $0x4b8] sm:$0xff]
        %v2226 = vld [vmem:[%s4 + $0x4c0] sm:$0xff]
        %v2227 = vld [vmem:[%s4 + $0x4c8] sm:$0xff]
        %v2228 = vld [vmem:[%s4 + $0x4d0] sm:$0xff]
        %v2229 = vld [vmem:[%s4 + $0x4d8] sm:$0xff]
        %v2230 = vld [vmem:[%s4 + $0x4e0] sm:$0xff]
        %v2231 = vld [vmem:[%s4 + $0x4e8] sm:$0xff]
        %v2232 = vld [vmem:[%s4 + $0x4f0] sm:$0xff]
        %v2233 = vld [vmem:[%s4 + $0x4f8] sm:$0xff]
        %v2234 = vld [vmem:[%s4 + $0x500] sm:$0xff]
        %v2235 = vld [vmem:[%s4 + $0x508] sm:$0xff]
        %v2236 = vld [vmem:[%s4 + $0x510] sm:$0xff]
        %v2237 = vld [vmem:[%s4 + $0x518] sm:$0xff]
        %v2238 = vld [vmem:[%s4 + $0x520] sm:$0xff]
        %v2239 = vld [vmem:[%s4 + $0x528] sm:$0xff]
        %v2240 = vld [vmem:[%s4 + $0x530] sm:$0xff]
        %v2241 = vld [vmem:[%s4 + $0x538] sm:$0xff]
        %v2242 = vld [vmem:[%s4 + $0x540] sm:$0xff]
        %v2243 = vld [vmem:[%s4 + $0x548] sm:$0xff]
        %v2244 = vld [vmem:[%s4 + $0x550] sm:$0xff]
        %v2245 = vld [vmem:[%s4 + $0x558] sm:$0xff]
        %v2246 = vld [vmem:[%s4 + $0x560] sm:$0xff]
        %v2247 = vld [vmem:[%s4 + $0x568] sm:$0xff]
        %v2248 = vld [vmem:[%s4 + $0x570] sm:$0xff]
        %v2249 = vld [vmem:[%s4 + $0x578] sm:$0xff]
        %v2250 = vld [vmem:[%s4 + $0x580] sm:$0xff]
        %v2251 = vld [vmem:[%s4 + $0x588] sm:$0xff]
        %v2252 = vld [vmem:[%s4 + $0x590] sm:$0xff]
        %v2253 = vld [vmem:[%s4 + $0x598] sm:$0xff]
        %v2254 = vld [vmem:[%s4 + $0x5a0] sm:$0xff]
        %v2255 = vld [vmem:[%s4 + $0x5a8] sm:$0xff]
        %v2256 = vld [vmem:[%s4 + $0x5b0] sm:$0xff]
        %v2257 = vld [vmem:[%s4 + $0x5b8] sm:$0xff]
        %v2258 = vld [vmem:[%s4 + $0x5c0] sm:$0xff]
        %v2259 = vld [vmem:[%s4 + $0x5c8] sm:$0xff]
        %v2260 = vld [vmem:[%s4 + $0x5d0] sm:$0xff]
        %v2261 = vld [vmem:[%s4 + $0x5d8] sm:$0xff]
        %v2262 = vld [vmem:[%s4 + $0x5e0] sm:$0xff]
        %v2263 = vld [vmem:[%s4 + $0x5e8] sm:$0xff]
        %v2264 = vld [vmem:[%s4 + $0x5f0] sm:$0xff]
        %v2265 = vld [vmem:[%s4 + $0x5f8] sm:$0xff]
        %v2266 = vld [vmem:[%s4 + $0x600] sm:$0xff]
        %v2267 = vld [vmem:[%s4 + $0x608] sm:$0xff]
        %v2268 = vld [vmem:[%s4 + $0x610] sm:$0xff]
        %v2269 = vld [vmem:[%s4 + $0x618] sm:$0xff]
        %v2270 = vld [vmem:[%s4 + $0x620] sm:$0xff]
        %v2271 = vld [vmem:[%s4 + $0x628] sm:$0xff]
        %v2272 = vld [vmem:[%s4 + $0x630] sm:$0xff]
        %v2273 = vld [vmem:[%s4 + $0x638] sm:$0xff]
        %v2274 = vld [vmem:[%s4 + $0x640] sm:$0xff]
        %v2275 = vld [vmem:[%s4 + $0x648] sm:$0xff]
        %v2276 = vld [vmem:[%s4 + $0x650] sm:$0xff]
        %v2277 = vld [vmem:[%s4 + $0x658] sm:$0xff]
        %v2278 = vld [vmem:[%s4 + $0x660] sm:$0xff]
        %v2279 = vld [vmem:[%s4 + $0x668] sm:$0xff]
        %v2280 = vld [vmem:[%s4 + $0x670] sm:$0xff]
        %v2281 = vld [vmem:[%s4 + $0x678] sm:$0xff]
        %v2282 = vld [vmem:[%s4 + $0x680] sm:$0xff]
        %v2283 = vld [vmem:[%s4 + $0x688] sm:$0xff]
        %v2284 = vld [vmem:[%s4 + $0x690] sm:$0xff]
        %v2285 = vld [vmem:[%s4 + $0x698] sm:$0xff]
        %v2286 = vld [vmem:[%s4 + $0x6a0] sm:$0xff]
        %v2287 = vld [vmem:[%s4 + $0x6a8] sm:$0xff]
        %v2288 = vld [vmem:[%s4 + $0x6b0] sm:$0xff]
        %v2289 = vld [vmem:[%s4 + $0x6b8] sm:$0xff]
        %v2290 = vld [vmem:[%s4 + $0x6c0] sm:$0xff]
        %v2291 = vld [vmem:[%s4 + $0x6c8] sm:$0xff]
        %v2292 = vld [vmem:[%s4 + $0x6d0] sm:$0xff]
        %v2293 = vld [vmem:[%s4 + $0x6d8] sm:$0xff]
        %v2294 = vld [vmem:[%s4 + $0x6e0] sm:$0xff]
        %v2295 = vld [vmem:[%s4 + $0x6e8] sm:$0xff]
        %v2296 = vld [vmem:[%s4 + $0x6f0] sm:$0xff]
        %v2297 = vld [vmem:[%s4 + $0x6f8] sm:$0xff]
        %v2298 = vld [vmem:[%s4 + $0x700] sm:$0xff]
        %v2299 = vld [vmem:[%s4 + $0x708] sm:$0xff]
        %v2300 = vld [vmem:[%s4 + $0x710] sm:$0xff]
        %v2301 = vld [vmem:[%s4 + $0x718] sm:$0xff]
        %v2302 = vld [vmem:[%s4 + $0x720] sm:$0xff]
        %v2303 = vld [vmem:[%s4 + $0x728] sm:$0xff]
        %v2304 = vld [vmem:[%s4 + $0x730] sm:$0xff]
        %v2305 = vld [vmem:[%s4 + $0x738] sm:$0xff]
        %v2306 = vld [vmem:[%s4 + $0x740] sm:$0xff]
        %v2307 = vld [vmem:[%s4 + $0x748] sm:$0xff]
        %v2308 = vld [vmem:[%s4 + $0x750] sm:$0xff]
        %v2309 = vld [vmem:[%s4 + $0x758] sm:$0xff]
        %v2310 = vld [vmem:[%s4 + $0x760] sm:$0xff]
        %v2311 = vld [vmem:[%s4 + $0x768] sm:$0xff]
        %v2312 = vld [vmem:[%s4 + $0x770] sm:$0xff]
        %v2313 = vld [vmem:[%s4 + $0x778] sm:$0xff]
        %v2314 = vld [vmem:[%s4 + $0x780] sm:$0xff]
        %v2315 = vld [vmem:[%s4 + $0x788] sm:$0xff]
        %v2316 = vld [vmem:[%s4 + $0x790] sm:$0xff]
        %v2317 = vld [vmem:[%s4 + $0x798] sm:$0xff]
        %v2318 = vld [vmem:[%s4 + $0x7a0] sm:$0xff]
        %v2319 = vld [vmem:[%s4 + $0x7a8] sm:$0xff]
        %v2320 = vld [vmem:[%s4 + $0x7b0] sm:$0xff]
        %v2321 = vld [vmem:[%s4 + $0x7b8] sm:$0xff]
        %v2322 = vld [vmem:[%s4 + $0x7c0] sm:$0xff]
        %v2323 = vld [vmem:[%s4 + $0x7c8] sm:$0xff]
        %v2324 = vld [vmem:[%s4 + $0x7d0] sm:$0xff]
        %v2325 = vld [vmem:[%s4 + $0x7d8] sm:$0xff]
        %v2326 = vld [vmem:[%s4 + $0x7e0] sm:$0xff]
        %v2327 = vld [vmem:[%s4 + $0x7e8] sm:$0xff]
        %v2328 = vld [vmem:[%s4 + $0x7f0] sm:$0xff]
        %v2329 = vld [vmem:[%s4 + $0x7f8] sm:$0xff]
        %v2330 = vld [vmem:[%s5] sm:$0xf]
        %v2332 = vlaneseq
        %v2333 = vshrl.u32 %v2332, 7
        %v2334 = vsub.s32 0, %v2333
        %v2335 = vrot.slane %v2330, %v2334
        %v2336 = vlaneseq
        %v2337 = vshrl.u32 %v2336, 7
        %v2338 = vsub.s32 1, %v2337
        %v2339 = vrot.slane %v2330, %v2338
        %v2340 = vlaneseq
        %v2341 = vshrl.u32 %v2340, 7
        %v2342 = vsub.s32 2, %v2341
        %v2343 = vrot.slane %v2330, %v2342
        %v2344 = vlaneseq
        %v2345 = vshrl.u32 %v2344, 7
        %v2346 = vsub.s32 3, %v2345
        %v2347 = vrot.slane %v2330, %v2346
        %v2608 = vunpack.c.l.b16 %v2074
        %v2609 = vunpack.c.h.b16 %v2074
        %v2610 = vunpack.c.l.b16 %v2075
        %v2611 = vunpack.c.h.b16 %v2075
        %v2612 = vunpack.c.l.b16 %v2076
        %v2613 = vunpack.c.h.b16 %v2076
        %v2614 = vunpack.c.l.b16 %v2077
        %v2615 = vunpack.c.h.b16 %v2077
        %v2616 = vunpack.c.l.b16 %v2078
        %v2617 = vunpack.c.h.b16 %v2078
        %v2618 = vunpack.c.l.b16 %v2079
        %v2619 = vunpack.c.h.b16 %v2079
        %v2620 = vunpack.c.l.b16 %v2080
        %v2621 = vunpack.c.h.b16 %v2080
        %v2622 = vunpack.c.l.b16 %v2081
        %v2623 = vunpack.c.h.b16 %v2081
        %v2624 = vunpack.c.l.b16 %v2082
        %v2625 = vunpack.c.h.b16 %v2082
        %v2626 = vunpack.c.l.b16 %v2083
        %v2627 = vunpack.c.h.b16 %v2083
        %v2628 = vunpack.c.l.b16 %v2084
        %v2629 = vunpack.c.h.b16 %v2084
        %v2630 = vunpack.c.l.b16 %v2085
        %v2631 = vunpack.c.h.b16 %v2085
        %v2632 = vunpack.c.l.b16 %v2086
        %v2633 = vunpack.c.h.b16 %v2086
        %v2634 = vunpack.c.l.b16 %v2087
        %v2635 = vunpack.c.h.b16 %v2087
        %v2636 = vunpack.c.l.b16 %v2088
        %v2637 = vunpack.c.h.b16 %v2088
        %v2638 = vunpack.c.l.b16 %v2089
        %v2639 = vunpack.c.h.b16 %v2089
        %v2640 = vunpack.c.l.b16 %v2090
        %v2641 = vunpack.c.h.b16 %v2090
        %v2642 = vunpack.c.l.b16 %v2091
        %v2643 = vunpack.c.h.b16 %v2091
        %v2644 = vunpack.c.l.b16 %v2092
        %v2645 = vunpack.c.h.b16 %v2092
        %v2646 = vunpack.c.l.b16 %v2093
        %v2647 = vunpack.c.h.b16 %v2093
        %v2648 = vunpack.c.l.b16 %v2094
        %v2649 = vunpack.c.h.b16 %v2094
        %v2650 = vunpack.c.l.b16 %v2095
        %v2651 = vunpack.c.h.b16 %v2095
        %v2652 = vunpack.c.l.b16 %v2096
        %v2653 = vunpack.c.h.b16 %v2096
        %v2654 = vunpack.c.l.b16 %v2097
        %v2655 = vunpack.c.h.b16 %v2097
        %v2656 = vunpack.c.l.b16 %v2098
        %v2657 = vunpack.c.h.b16 %v2098
        %v2658 = vunpack.c.l.b16 %v2099
        %v2659 = vunpack.c.h.b16 %v2099
        %v2660 = vunpack.c.l.b16 %v2100
        %v2661 = vunpack.c.h.b16 %v2100
        %v2662 = vunpack.c.l.b16 %v2101
        %v2663 = vunpack.c.h.b16 %v2101
        %v2664 = vunpack.c.l.b16 %v2102
        %v2665 = vunpack.c.h.b16 %v2102
        %v2666 = vunpack.c.l.b16 %v2103
        %v2667 = vunpack.c.h.b16 %v2103
        %v2668 = vunpack.c.l.b16 %v2104
        %v2669 = vunpack.c.h.b16 %v2104
        %v2670 = vunpack.c.l.b16 %v2105
        %v2671 = vunpack.c.h.b16 %v2105
        %v2672 = vunpack.c.l.b16 %v2106
        %v2673 = vunpack.c.h.b16 %v2106
        %v2674 = vunpack.c.l.b16 %v2107
        %v2675 = vunpack.c.h.b16 %v2107
        %v2676 = vunpack.c.l.b16 %v2108
        %v2677 = vunpack.c.h.b16 %v2108
        %v2678 = vunpack.c.l.b16 %v2109
        %v2679 = vunpack.c.h.b16 %v2109
        %v2680 = vunpack.c.l.b16 %v2110
        %v2681 = vunpack.c.h.b16 %v2110
        %v2682 = vunpack.c.l.b16 %v2111
        %v2683 = vunpack.c.h.b16 %v2111
        %v2684 = vunpack.c.l.b16 %v2112
        %v2685 = vunpack.c.h.b16 %v2112
        %v2686 = vunpack.c.l.b16 %v2113
        %v2687 = vunpack.c.h.b16 %v2113
        %v2688 = vunpack.c.l.b16 %v2114
        %v2689 = vunpack.c.h.b16 %v2114
        %v2690 = vunpack.c.l.b16 %v2115
        %v2691 = vunpack.c.h.b16 %v2115
        %v2692 = vunpack.c.l.b16 %v2116
        %v2693 = vunpack.c.h.b16 %v2116
        %v2694 = vunpack.c.l.b16 %v2117
        %v2695 = vunpack.c.h.b16 %v2117
        %v2696 = vunpack.c.l.b16 %v2118
        %v2697 = vunpack.c.h.b16 %v2118
        %v2698 = vunpack.c.l.b16 %v2119
        %v2699 = vunpack.c.h.b16 %v2119
        %v2700 = vunpack.c.l.b16 %v2120
        %v2701 = vunpack.c.h.b16 %v2120
        %v2702 = vunpack.c.l.b16 %v2121
        %v2703 = vunpack.c.h.b16 %v2121
        %v2704 = vunpack.c.l.b16 %v2122
        %v2705 = vunpack.c.h.b16 %v2122
        %v2706 = vunpack.c.l.b16 %v2123
        %v2707 = vunpack.c.h.b16 %v2123
        %v2708 = vunpack.c.l.b16 %v2124
        %v2709 = vunpack.c.h.b16 %v2124
        %v2710 = vunpack.c.l.b16 %v2125
        %v2711 = vunpack.c.h.b16 %v2125
        %v2712 = vunpack.c.l.b16 %v2126
        %v2713 = vunpack.c.h.b16 %v2126
        %v2714 = vunpack.c.l.b16 %v2127
        %v2715 = vunpack.c.h.b16 %v2127
        %v2716 = vunpack.c.l.b16 %v2128
        %v2717 = vunpack.c.h.b16 %v2128
        %v2718 = vunpack.c.l.b16 %v2129
        %v2719 = vunpack.c.h.b16 %v2129
        %v2720 = vunpack.c.l.b16 %v2130
        %v2721 = vunpack.c.h.b16 %v2130
        %v2722 = vunpack.c.l.b16 %v2131
        %v2723 = vunpack.c.h.b16 %v2131
        %v2724 = vunpack.c.l.b16 %v2132
        %v2725 = vunpack.c.h.b16 %v2132
        %v2726 = vunpack.c.l.b16 %v2133
        %v2727 = vunpack.c.h.b16 %v2133
        %v2728 = vunpack.c.l.b16 %v2134
        %v2729 = vunpack.c.h.b16 %v2134
        %v2730 = vunpack.c.l.b16 %v2135
        %v2731 = vunpack.c.h.b16 %v2135
        %v2732 = vunpack.c.l.b16 %v2136
        %v2733 = vunpack.c.h.b16 %v2136
        %v2734 = vunpack.c.l.b16 %v2137
        %v2735 = vunpack.c.h.b16 %v2137
        %v2736 = vunpack.c.l.b16 %v2138
        %v2737 = vunpack.c.h.b16 %v2138
        %v2738 = vunpack.c.l.b16 %v2139
        %v2739 = vunpack.c.h.b16 %v2139
        %v2740 = vunpack.c.l.b16 %v2140
        %v2741 = vunpack.c.h.b16 %v2140
        %v2742 = vunpack.c.l.b16 %v2141
        %v2743 = vunpack.c.h.b16 %v2141
        %v2744 = vunpack.c.l.b16 %v2142
        %v2745 = vunpack.c.h.b16 %v2142
        %v2746 = vunpack.c.l.b16 %v2143
        %v2747 = vunpack.c.h.b16 %v2143
        %v2748 = vunpack.c.l.b16 %v2144
        %v2749 = vunpack.c.h.b16 %v2144
        %v2750 = vunpack.c.l.b16 %v2145
        %v2751 = vunpack.c.h.b16 %v2145
        %v2752 = vunpack.c.l.b16 %v2146
        %v2753 = vunpack.c.h.b16 %v2146
        %v2754 = vunpack.c.l.b16 %v2147
        %v2755 = vunpack.c.h.b16 %v2147
        %v2756 = vunpack.c.l.b16 %v2148
        %v2757 = vunpack.c.h.b16 %v2148
        %v2758 = vunpack.c.l.b16 %v2149
        %v2759 = vunpack.c.h.b16 %v2149
        %v2760 = vunpack.c.l.b16 %v2150
        %v2761 = vunpack.c.h.b16 %v2150
        %v2762 = vunpack.c.l.b16 %v2151
        %v2763 = vunpack.c.h.b16 %v2151
        %v2764 = vunpack.c.l.b16 %v2152
        %v2765 = vunpack.c.h.b16 %v2152
        %v2766 = vunpack.c.l.b16 %v2153
        %v2767 = vunpack.c.h.b16 %v2153
        %v2768 = vunpack.c.l.b16 %v2154
        %v2769 = vunpack.c.h.b16 %v2154
        %v2770 = vunpack.c.l.b16 %v2155
        %v2771 = vunpack.c.h.b16 %v2155
        %v2772 = vunpack.c.l.b16 %v2156
        %v2773 = vunpack.c.h.b16 %v2156
        %v2774 = vunpack.c.l.b16 %v2157
        %v2775 = vunpack.c.h.b16 %v2157
        %v2776 = vunpack.c.l.b16 %v2158
        %v2777 = vunpack.c.h.b16 %v2158
        %v2778 = vunpack.c.l.b16 %v2159
        %v2779 = vunpack.c.h.b16 %v2159
        %v2780 = vunpack.c.l.b16 %v2160
        %v2781 = vunpack.c.h.b16 %v2160
        %v2782 = vunpack.c.l.b16 %v2161
        %v2783 = vunpack.c.h.b16 %v2161
        %v2784 = vunpack.c.l.b16 %v2162
        %v2785 = vunpack.c.h.b16 %v2162
        %v2786 = vunpack.c.l.b16 %v2163
        %v2787 = vunpack.c.h.b16 %v2163
        %v2788 = vunpack.c.l.b16 %v2164
        %v2789 = vunpack.c.h.b16 %v2164
        %v2790 = vunpack.c.l.b16 %v2165
        %v2791 = vunpack.c.h.b16 %v2165
        %v2792 = vunpack.c.l.b16 %v2166
        %v2793 = vunpack.c.h.b16 %v2166
        %v2794 = vunpack.c.l.b16 %v2167
        %v2795 = vunpack.c.h.b16 %v2167
        %v2796 = vunpack.c.l.b16 %v2168
        %v2797 = vunpack.c.h.b16 %v2168
        %v2798 = vunpack.c.l.b16 %v2169
        %v2799 = vunpack.c.h.b16 %v2169
        %v2800 = vunpack.c.l.b16 %v2170
        %v2801 = vunpack.c.h.b16 %v2170
        %v2802 = vunpack.c.l.b16 %v2171
        %v2803 = vunpack.c.h.b16 %v2171
        %v2804 = vunpack.c.l.b16 %v2172
        %v2805 = vunpack.c.h.b16 %v2172
        %v2806 = vunpack.c.l.b16 %v2173
        %v2807 = vunpack.c.h.b16 %v2173
        %v2808 = vunpack.c.l.b16 %v2174
        %v2809 = vunpack.c.h.b16 %v2174
        %v2810 = vunpack.c.l.b16 %v2175
        %v2811 = vunpack.c.h.b16 %v2175
        %v2812 = vunpack.c.l.b16 %v2176
        %v2813 = vunpack.c.h.b16 %v2176
        %v2814 = vunpack.c.l.b16 %v2177
        %v2815 = vunpack.c.h.b16 %v2177
        %v2816 = vunpack.c.l.b16 %v2178
        %v2817 = vunpack.c.h.b16 %v2178
        %v2818 = vunpack.c.l.b16 %v2179
        %v2819 = vunpack.c.h.b16 %v2179
        %v2820 = vunpack.c.l.b16 %v2180
        %v2821 = vunpack.c.h.b16 %v2180
        %v2822 = vunpack.c.l.b16 %v2181
        %v2823 = vunpack.c.h.b16 %v2181
        %v2824 = vunpack.c.l.b16 %v2182
        %v2825 = vunpack.c.h.b16 %v2182
        %v2826 = vunpack.c.l.b16 %v2183
        %v2827 = vunpack.c.h.b16 %v2183
        %v2828 = vunpack.c.l.b16 %v2184
        %v2829 = vunpack.c.h.b16 %v2184
        %v2830 = vunpack.c.l.b16 %v2185
        %v2831 = vunpack.c.h.b16 %v2185
        %v2832 = vunpack.c.l.b16 %v2186
        %v2833 = vunpack.c.h.b16 %v2186
        %v2834 = vunpack.c.l.b16 %v2187
        %v2835 = vunpack.c.h.b16 %v2187
        %v2836 = vunpack.c.l.b16 %v2188
        %v2837 = vunpack.c.h.b16 %v2188
        %v2838 = vunpack.c.l.b16 %v2189
        %v2839 = vunpack.c.h.b16 %v2189
        %v2840 = vunpack.c.l.b16 %v2190
        %v2841 = vunpack.c.h.b16 %v2190
        %v2842 = vunpack.c.l.b16 %v2191
        %v2843 = vunpack.c.h.b16 %v2191
        %v2844 = vunpack.c.l.b16 %v2192
        %v2845 = vunpack.c.h.b16 %v2192
        %v2846 = vunpack.c.l.b16 %v2193
        %v2847 = vunpack.c.h.b16 %v2193
        %v2848 = vunpack.c.l.b16 %v2194
        %v2849 = vunpack.c.h.b16 %v2194
        %v2850 = vunpack.c.l.b16 %v2195
        %v2851 = vunpack.c.h.b16 %v2195
        %v2852 = vunpack.c.l.b16 %v2196
        %v2853 = vunpack.c.h.b16 %v2196
        %v2854 = vunpack.c.l.b16 %v2197
        %v2855 = vunpack.c.h.b16 %v2197
        %v2856 = vunpack.c.l.b16 %v2198
        %v2857 = vunpack.c.h.b16 %v2198
        %v2858 = vunpack.c.l.b16 %v2199
        %v2859 = vunpack.c.h.b16 %v2199
        %v2860 = vunpack.c.l.b16 %v2200
        %v2861 = vunpack.c.h.b16 %v2200
        %v2862 = vunpack.c.l.b16 %v2201
        %v2863 = vunpack.c.h.b16 %v2201
        %v2864 = vunpack.c.l.b16 %v2202
        %v2865 = vunpack.c.h.b16 %v2202
        %v2866 = vunpack.c.l.b16 %v2203
        %v2867 = vunpack.c.h.b16 %v2203
        %v2868 = vunpack.c.l.b16 %v2204
        %v2869 = vunpack.c.h.b16 %v2204
        %v2870 = vunpack.c.l.b16 %v2205
        %v2871 = vunpack.c.h.b16 %v2205
        %v2872 = vunpack.c.l.b16 %v2206
        %v2873 = vunpack.c.h.b16 %v2206
        %v2874 = vunpack.c.l.b16 %v2207
        %v2875 = vunpack.c.h.b16 %v2207
        %v2876 = vunpack.c.l.b16 %v2208
        %v2877 = vunpack.c.h.b16 %v2208
        %v2878 = vunpack.c.l.b16 %v2209
        %v2879 = vunpack.c.h.b16 %v2209
        %v2880 = vunpack.c.l.b16 %v2210
        %v2881 = vunpack.c.h.b16 %v2210
        %v2882 = vunpack.c.l.b16 %v2211
        %v2883 = vunpack.c.h.b16 %v2211
        %v2884 = vunpack.c.l.b16 %v2212
        %v2885 = vunpack.c.h.b16 %v2212
        %v2886 = vunpack.c.l.b16 %v2213
        %v2887 = vunpack.c.h.b16 %v2213
        %v2888 = vunpack.c.l.b16 %v2214
        %v2889 = vunpack.c.h.b16 %v2214
        %v2890 = vunpack.c.l.b16 %v2215
        %v2891 = vunpack.c.h.b16 %v2215
        %v2892 = vunpack.c.l.b16 %v2216
        %v2893 = vunpack.c.h.b16 %v2216
        %v2894 = vunpack.c.l.b16 %v2217
        %v2895 = vunpack.c.h.b16 %v2217
        %v2896 = vunpack.c.l.b16 %v2218
        %v2897 = vunpack.c.h.b16 %v2218
        %v2898 = vunpack.c.l.b16 %v2219
        %v2899 = vunpack.c.h.b16 %v2219
        %v2900 = vunpack.c.l.b16 %v2220
        %v2901 = vunpack.c.h.b16 %v2220
        %v2902 = vunpack.c.l.b16 %v2221
        %v2903 = vunpack.c.h.b16 %v2221
        %v2904 = vunpack.c.l.b16 %v2222
        %v2905 = vunpack.c.h.b16 %v2222
        %v2906 = vunpack.c.l.b16 %v2223
        %v2907 = vunpack.c.h.b16 %v2223
        %v2908 = vunpack.c.l.b16 %v2224
        %v2909 = vunpack.c.h.b16 %v2224
        %v2910 = vunpack.c.l.b16 %v2225
        %v2911 = vunpack.c.h.b16 %v2225
        %v2912 = vunpack.c.l.b16 %v2226
        %v2913 = vunpack.c.h.b16 %v2226
        %v2914 = vunpack.c.l.b16 %v2227
        %v2915 = vunpack.c.h.b16 %v2227
        %v2916 = vunpack.c.l.b16 %v2228
        %v2917 = vunpack.c.h.b16 %v2228
        %v2918 = vunpack.c.l.b16 %v2229
        %v2919 = vunpack.c.h.b16 %v2229
        %v2920 = vunpack.c.l.b16 %v2230
        %v2921 = vunpack.c.h.b16 %v2230
        %v2922 = vunpack.c.l.b16 %v2231
        %v2923 = vunpack.c.h.b16 %v2231
        %v2924 = vunpack.c.l.b16 %v2232
        %v2925 = vunpack.c.h.b16 %v2232
        %v2926 = vunpack.c.l.b16 %v2233
        %v2927 = vunpack.c.h.b16 %v2233
        %v2928 = vunpack.c.l.b16 %v2234
        %v2929 = vunpack.c.h.b16 %v2234
        %v2930 = vunpack.c.l.b16 %v2235
        %v2931 = vunpack.c.h.b16 %v2235
        %v2932 = vunpack.c.l.b16 %v2236
        %v2933 = vunpack.c.h.b16 %v2236
        %v2934 = vunpack.c.l.b16 %v2237
        %v2935 = vunpack.c.h.b16 %v2237
        %v2936 = vunpack.c.l.b16 %v2238
        %v2937 = vunpack.c.h.b16 %v2238
        %v2938 = vunpack.c.l.b16 %v2239
        %v2939 = vunpack.c.h.b16 %v2239
        %v2940 = vunpack.c.l.b16 %v2240
        %v2941 = vunpack.c.h.b16 %v2240
        %v2942 = vunpack.c.l.b16 %v2241
        %v2943 = vunpack.c.h.b16 %v2241
        %v2944 = vunpack.c.l.b16 %v2242
        %v2945 = vunpack.c.h.b16 %v2242
        %v2946 = vunpack.c.l.b16 %v2243
        %v2947 = vunpack.c.h.b16 %v2243
        %v2948 = vunpack.c.l.b16 %v2244
        %v2949 = vunpack.c.h.b16 %v2244
        %v2950 = vunpack.c.l.b16 %v2245
        %v2951 = vunpack.c.h.b16 %v2245
        %v2952 = vunpack.c.l.b16 %v2246
        %v2953 = vunpack.c.h.b16 %v2246
        %v2954 = vunpack.c.l.b16 %v2247
        %v2955 = vunpack.c.h.b16 %v2247
        %v2956 = vunpack.c.l.b16 %v2248
        %v2957 = vunpack.c.h.b16 %v2248
        %v2958 = vunpack.c.l.b16 %v2249
        %v2959 = vunpack.c.h.b16 %v2249
        %v2960 = vunpack.c.l.b16 %v2250
        %v2961 = vunpack.c.h.b16 %v2250
        %v2962 = vunpack.c.l.b16 %v2251
        %v2963 = vunpack.c.h.b16 %v2251
        %v2964 = vunpack.c.l.b16 %v2252
        %v2965 = vunpack.c.h.b16 %v2252
        %v2966 = vunpack.c.l.b16 %v2253
        %v2967 = vunpack.c.h.b16 %v2253
        %v2968 = vunpack.c.l.b16 %v2254
        %v2969 = vunpack.c.h.b16 %v2254
        %v2970 = vunpack.c.l.b16 %v2255
        %v2971 = vunpack.c.h.b16 %v2255
        %v2972 = vunpack.c.l.b16 %v2256
        %v2973 = vunpack.c.h.b16 %v2256
        %v2974 = vunpack.c.l.b16 %v2257
        %v2975 = vunpack.c.h.b16 %v2257
        %v2976 = vunpack.c.l.b16 %v2258
        %v2977 = vunpack.c.h.b16 %v2258
        %v2978 = vunpack.c.l.b16 %v2259
        %v2979 = vunpack.c.h.b16 %v2259
        %v2980 = vunpack.c.l.b16 %v2260
        %v2981 = vunpack.c.h.b16 %v2260
        %v2982 = vunpack.c.l.b16 %v2261
        %v2983 = vunpack.c.h.b16 %v2261
        %v2984 = vunpack.c.l.b16 %v2262
        %v2985 = vunpack.c.h.b16 %v2262
        %v2986 = vunpack.c.l.b16 %v2263
        %v2987 = vunpack.c.h.b16 %v2263
        %v2988 = vunpack.c.l.b16 %v2264
        %v2989 = vunpack.c.h.b16 %v2264
        %v2990 = vunpack.c.l.b16 %v2265
        %v2991 = vunpack.c.h.b16 %v2265
        %v2992 = vunpack.c.l.b16 %v2266
        %v2993 = vunpack.c.h.b16 %v2266
        %v2994 = vunpack.c.l.b16 %v2267
        %v2995 = vunpack.c.h.b16 %v2267
        %v2996 = vunpack.c.l.b16 %v2268
        %v2997 = vunpack.c.h.b16 %v2268
        %v2998 = vunpack.c.l.b16 %v2269
        %v2999 = vunpack.c.h.b16 %v2269
        %v3000 = vunpack.c.l.b16 %v2270
        %v3001 = vunpack.c.h.b16 %v2270
        %v3002 = vunpack.c.l.b16 %v2271
        %v3003 = vunpack.c.h.b16 %v2271
        %v3004 = vunpack.c.l.b16 %v2272
        %v3005 = vunpack.c.h.b16 %v2272
        %v3006 = vunpack.c.l.b16 %v2273
        %v3007 = vunpack.c.h.b16 %v2273
        %v3008 = vunpack.c.l.b16 %v2274
        %v3009 = vunpack.c.h.b16 %v2274
        %v3010 = vunpack.c.l.b16 %v2275
        %v3011 = vunpack.c.h.b16 %v2275
        %v3012 = vunpack.c.l.b16 %v2276
        %v3013 = vunpack.c.h.b16 %v2276
        %v3014 = vunpack.c.l.b16 %v2277
        %v3015 = vunpack.c.h.b16 %v2277
        %v3016 = vunpack.c.l.b16 %v2278
        %v3017 = vunpack.c.h.b16 %v2278
        %v3018 = vunpack.c.l.b16 %v2279
        %v3019 = vunpack.c.h.b16 %v2279
        %v3020 = vunpack.c.l.b16 %v2280
        %v3021 = vunpack.c.h.b16 %v2280
        %v3022 = vunpack.c.l.b16 %v2281
        %v3023 = vunpack.c.h.b16 %v2281
        %v3024 = vunpack.c.l.b16 %v2282
        %v3025 = vunpack.c.h.b16 %v2282
        %v3026 = vunpack.c.l.b16 %v2283
        %v3027 = vunpack.c.h.b16 %v2283
        %v3028 = vunpack.c.l.b16 %v2284
        %v3029 = vunpack.c.h.b16 %v2284
        %v3030 = vunpack.c.l.b16 %v2285
        %v3031 = vunpack.c.h.b16 %v2285
        %v3032 = vunpack.c.l.b16 %v2286
        %v3033 = vunpack.c.h.b16 %v2286
        %v3034 = vunpack.c.l.b16 %v2287
        %v3035 = vunpack.c.h.b16 %v2287
        %v3036 = vunpack.c.l.b16 %v2288
        %v3037 = vunpack.c.h.b16 %v2288
        %v3038 = vunpack.c.l.b16 %v2289
        %v3039 = vunpack.c.h.b16 %v2289
        %v3040 = vunpack.c.l.b16 %v2290
        %v3041 = vunpack.c.h.b16 %v2290
        %v3042 = vunpack.c.l.b16 %v2291
        %v3043 = vunpack.c.h.b16 %v2291
        %v3044 = vunpack.c.l.b16 %v2292
        %v3045 = vunpack.c.h.b16 %v2292
        %v3046 = vunpack.c.l.b16 %v2293
        %v3047 = vunpack.c.h.b16 %v2293
        %v3048 = vunpack.c.l.b16 %v2294
        %v3049 = vunpack.c.h.b16 %v2294
        %v3050 = vunpack.c.l.b16 %v2295
        %v3051 = vunpack.c.h.b16 %v2295
        %v3052 = vunpack.c.l.b16 %v2296
        %v3053 = vunpack.c.h.b16 %v2296
        %v3054 = vunpack.c.l.b16 %v2297
        %v3055 = vunpack.c.h.b16 %v2297
        %v3056 = vunpack.c.l.b16 %v2298
        %v3057 = vunpack.c.h.b16 %v2298
        %v3058 = vunpack.c.l.b16 %v2299
        %v3059 = vunpack.c.h.b16 %v2299
        %v3060 = vunpack.c.l.b16 %v2300
        %v3061 = vunpack.c.h.b16 %v2300
        %v3062 = vunpack.c.l.b16 %v2301
        %v3063 = vunpack.c.h.b16 %v2301
        %v3064 = vunpack.c.l.b16 %v2302
        %v3065 = vunpack.c.h.b16 %v2302
        %v3066 = vunpack.c.l.b16 %v2303
        %v3067 = vunpack.c.h.b16 %v2303
        %v3068 = vunpack.c.l.b16 %v2304
        %v3069 = vunpack.c.h.b16 %v2304
        %v3070 = vunpack.c.l.b16 %v2305
        %v3071 = vunpack.c.h.b16 %v2305
        %v3072 = vunpack.c.l.b16 %v2306
        %v3073 = vunpack.c.h.b16 %v2306
        %v3074 = vunpack.c.l.b16 %v2307
        %v3075 = vunpack.c.h.b16 %v2307
        %v3076 = vunpack.c.l.b16 %v2308
        %v3077 = vunpack.c.h.b16 %v2308
        %v3078 = vunpack.c.l.b16 %v2309
        %v3079 = vunpack.c.h.b16 %v2309
        %v3080 = vunpack.c.l.b16 %v2310
        %v3081 = vunpack.c.h.b16 %v2310
        %v3082 = vunpack.c.l.b16 %v2311
        %v3083 = vunpack.c.h.b16 %v2311
        %v3084 = vunpack.c.l.b16 %v2312
        %v3085 = vunpack.c.h.b16 %v2312
        %v3086 = vunpack.c.l.b16 %v2313
        %v3087 = vunpack.c.h.b16 %v2313
        %v3088 = vunpack.c.l.b16 %v2314
        %v3089 = vunpack.c.h.b16 %v2314
        %v3090 = vunpack.c.l.b16 %v2315
        %v3091 = vunpack.c.h.b16 %v2315
        %v3092 = vunpack.c.l.b16 %v2316
        %v3093 = vunpack.c.h.b16 %v2316
        %v3094 = vunpack.c.l.b16 %v2317
        %v3095 = vunpack.c.h.b16 %v2317
        %v3096 = vunpack.c.l.b16 %v2318
        %v3097 = vunpack.c.h.b16 %v2318
        %v3098 = vunpack.c.l.b16 %v2319
        %v3099 = vunpack.c.h.b16 %v2319
        %v3100 = vunpack.c.l.b16 %v2320
        %v3101 = vunpack.c.h.b16 %v2320
        %v3102 = vunpack.c.l.b16 %v2321
        %v3103 = vunpack.c.h.b16 %v2321
        %v3104 = vunpack.c.l.b16 %v2322
        %v3105 = vunpack.c.h.b16 %v2322
        %v3106 = vunpack.c.l.b16 %v2323
        %v3107 = vunpack.c.h.b16 %v2323
        %v3108 = vunpack.c.l.b16 %v2324
        %v3109 = vunpack.c.h.b16 %v2324
        %v3110 = vunpack.c.l.b16 %v2325
        %v3111 = vunpack.c.h.b16 %v2325
        %v3112 = vunpack.c.l.b16 %v2326
        %v3113 = vunpack.c.h.b16 %v2326
        %v3114 = vunpack.c.l.b16 %v2327
        %v3115 = vunpack.c.h.b16 %v2327
        %v3116 = vunpack.c.l.b16 %v2328
        %v3117 = vunpack.c.h.b16 %v2328
        %v3118 = vunpack.c.l.b16 %v2329
        %v3119 = vunpack.c.h.b16 %v2329
        %v3120 = vpack.c.b16 %v2612, %v2608
        %v3121 = vpack.c.b16 %v2613, %v2609
        %v3122 = vpack.c.b16 %v2614, %v2610
        %v3123 = vpack.c.b16 %v2615, %v2611
        %v3124 = vpack.c.b16 %v2620, %v2616
        %v3125 = vpack.c.b16 %v2621, %v2617
        %v3126 = vpack.c.b16 %v2622, %v2618
        %v3127 = vpack.c.b16 %v2623, %v2619
        %v3128 = vpack.c.b16 %v2628, %v2624
        %v3129 = vpack.c.b16 %v2629, %v2625
        %v3130 = vpack.c.b16 %v2630, %v2626
        %v3131 = vpack.c.b16 %v2631, %v2627
        %v3132 = vpack.c.b16 %v2636, %v2632
        %v3133 = vpack.c.b16 %v2637, %v2633
        %v3134 = vpack.c.b16 %v2638, %v2634
        %v3135 = vpack.c.b16 %v2639, %v2635
        %v3136 = vpack.c.b16 %v2644, %v2640
        %v3137 = vpack.c.b16 %v2645, %v2641
        %v3138 = vpack.c.b16 %v2646, %v2642
        %v3139 = vpack.c.b16 %v2647, %v2643
        %v3140 = vpack.c.b16 %v2652, %v2648
        %v3141 = vpack.c.b16 %v2653, %v2649
        %v3142 = vpack.c.b16 %v2654, %v2650
        %v3143 = vpack.c.b16 %v2655, %v2651
        %v3144 = vpack.c.b16 %v2660, %v2656
        %v3145 = vpack.c.b16 %v2661, %v2657
        %v3146 = vpack.c.b16 %v2662, %v2658
        %v3147 = vpack.c.b16 %v2663, %v2659
        %v3148 = vpack.c.b16 %v2668, %v2664
        %v3149 = vpack.c.b16 %v2669, %v2665
        %v3150 = vpack.c.b16 %v2670, %v2666
        %v3151 = vpack.c.b16 %v2671, %v2667
        %v3152 = vpack.c.b16 %v2676, %v2672
        %v3153 = vpack.c.b16 %v2677, %v2673
        %v3154 = vpack.c.b16 %v2678, %v2674
        %v3155 = vpack.c.b16 %v2679, %v2675
        %v3156 = vpack.c.b16 %v2684, %v2680
        %v3157 = vpack.c.b16 %v2685, %v2681
        %v3158 = vpack.c.b16 %v2686, %v2682
        %v3159 = vpack.c.b16 %v2687, %v2683
        %v3160 = vpack.c.b16 %v2692, %v2688
        %v3161 = vpack.c.b16 %v2693, %v2689
        %v3162 = vpack.c.b16 %v2694, %v2690
        %v3163 = vpack.c.b16 %v2695, %v2691
        %v3164 = vpack.c.b16 %v2700, %v2696
        %v3165 = vpack.c.b16 %v2701, %v2697
        %v3166 = vpack.c.b16 %v2702, %v2698
        %v3167 = vpack.c.b16 %v2703, %v2699
        %v3168 = vpack.c.b16 %v2708, %v2704
        %v3169 = vpack.c.b16 %v2709, %v2705
        %v3170 = vpack.c.b16 %v2710, %v2706
        %v3171 = vpack.c.b16 %v2711, %v2707
        %v3172 = vpack.c.b16 %v2716, %v2712
        %v3173 = vpack.c.b16 %v2717, %v2713
        %v3174 = vpack.c.b16 %v2718, %v2714
        %v3175 = vpack.c.b16 %v2719, %v2715
        %v3176 = vpack.c.b16 %v2724, %v2720
        %v3177 = vpack.c.b16 %v2725, %v2721
        %v3178 = vpack.c.b16 %v2726, %v2722
        %v3179 = vpack.c.b16 %v2727, %v2723
        %v3180 = vpack.c.b16 %v2732, %v2728
        %v3181 = vpack.c.b16 %v2733, %v2729
        %v3182 = vpack.c.b16 %v2734, %v2730
        %v3183 = vpack.c.b16 %v2735, %v2731
        %v3184 = vpack.c.b16 %v2740, %v2736
        %v3185 = vpack.c.b16 %v2741, %v2737
        %v3186 = vpack.c.b16 %v2742, %v2738
        %v3187 = vpack.c.b16 %v2743, %v2739
        %v3188 = vpack.c.b16 %v2748, %v2744
        %v3189 = vpack.c.b16 %v2749, %v2745
        %v3190 = vpack.c.b16 %v2750, %v2746
        %v3191 = vpack.c.b16 %v2751, %v2747
        %v3192 = vpack.c.b16 %v2756, %v2752
        %v3193 = vpack.c.b16 %v2757, %v2753
        %v3194 = vpack.c.b16 %v2758, %v2754
        %v3195 = vpack.c.b16 %v2759, %v2755
        %v3196 = vpack.c.b16 %v2764, %v2760
        %v3197 = vpack.c.b16 %v2765, %v2761
        %v3198 = vpack.c.b16 %v2766, %v2762
        %v3199 = vpack.c.b16 %v2767, %v2763
        %v3200 = vpack.c.b16 %v2772, %v2768
        %v3201 = vpack.c.b16 %v2773, %v2769
        %v3202 = vpack.c.b16 %v2774, %v2770
        %v3203 = vpack.c.b16 %v2775, %v2771
        %v3204 = vpack.c.b16 %v2780, %v2776
        %v3205 = vpack.c.b16 %v2781, %v2777
        %v3206 = vpack.c.b16 %v2782, %v2778
        %v3207 = vpack.c.b16 %v2783, %v2779
        %v3208 = vpack.c.b16 %v2788, %v2784
        %v3209 = vpack.c.b16 %v2789, %v2785
        %v3210 = vpack.c.b16 %v2790, %v2786
        %v3211 = vpack.c.b16 %v2791, %v2787
        %v3212 = vpack.c.b16 %v2796, %v2792
        %v3213 = vpack.c.b16 %v2797, %v2793
        %v3214 = vpack.c.b16 %v2798, %v2794
        %v3215 = vpack.c.b16 %v2799, %v2795
        %v3216 = vpack.c.b16 %v2804, %v2800
        %v3217 = vpack.c.b16 %v2805, %v2801
        %v3218 = vpack.c.b16 %v2806, %v2802
        %v3219 = vpack.c.b16 %v2807, %v2803
        %v3220 = vpack.c.b16 %v2812, %v2808
        %v3221 = vpack.c.b16 %v2813, %v2809
        %v3222 = vpack.c.b16 %v2814, %v2810
        %v3223 = vpack.c.b16 %v2815, %v2811
        %v3224 = vpack.c.b16 %v2820, %v2816
        %v3225 = vpack.c.b16 %v2821, %v2817
        %v3226 = vpack.c.b16 %v2822, %v2818
        %v3227 = vpack.c.b16 %v2823, %v2819
        %v3228 = vpack.c.b16 %v2828, %v2824
        %v3229 = vpack.c.b16 %v2829, %v2825
        %v3230 = vpack.c.b16 %v2830, %v2826
        %v3231 = vpack.c.b16 %v2831, %v2827
        %v3232 = vpack.c.b16 %v2836, %v2832
        %v3233 = vpack.c.b16 %v2837, %v2833
        %v3234 = vpack.c.b16 %v2838, %v2834
        %v3235 = vpack.c.b16 %v2839, %v2835
        %v3236 = vpack.c.b16 %v2844, %v2840
        %v3237 = vpack.c.b16 %v2845, %v2841
        %v3238 = vpack.c.b16 %v2846, %v2842
        %v3239 = vpack.c.b16 %v2847, %v2843
        %v3240 = vpack.c.b16 %v2852, %v2848
        %v3241 = vpack.c.b16 %v2853, %v2849
        %v3242 = vpack.c.b16 %v2854, %v2850
        %v3243 = vpack.c.b16 %v2855, %v2851
        %v3244 = vpack.c.b16 %v2860, %v2856
        %v3245 = vpack.c.b16 %v2861, %v2857
        %v3246 = vpack.c.b16 %v2862, %v2858
        %v3247 = vpack.c.b16 %v2863, %v2859
        %v3248 = vpack.c.b16 %v2868, %v2864
        %v3249 = vpack.c.b16 %v2869, %v2865
        %v3250 = vpack.c.b16 %v2870, %v2866
        %v3251 = vpack.c.b16 %v2871, %v2867
        %v3252 = vpack.c.b16 %v2876, %v2872
        %v3253 = vpack.c.b16 %v2877, %v2873
        %v3254 = vpack.c.b16 %v2878, %v2874
        %v3255 = vpack.c.b16 %v2879, %v2875
        %v3256 = vpack.c.b16 %v2884, %v2880
        %v3257 = vpack.c.b16 %v2885, %v2881
        %v3258 = vpack.c.b16 %v2886, %v2882
        %v3259 = vpack.c.b16 %v2887, %v2883
        %v3260 = vpack.c.b16 %v2892, %v2888
        %v3261 = vpack.c.b16 %v2893, %v2889
        %v3262 = vpack.c.b16 %v2894, %v2890
        %v3263 = vpack.c.b16 %v2895, %v2891
        %v3264 = vpack.c.b16 %v2900, %v2896
        %v3265 = vpack.c.b16 %v2901, %v2897
        %v3266 = vpack.c.b16 %v2902, %v2898
        %v3267 = vpack.c.b16 %v2903, %v2899
        %v3268 = vpack.c.b16 %v2908, %v2904
        %v3269 = vpack.c.b16 %v2909, %v2905
        %v3270 = vpack.c.b16 %v2910, %v2906
        %v3271 = vpack.c.b16 %v2911, %v2907
        %v3272 = vpack.c.b16 %v2916, %v2912
        %v3273 = vpack.c.b16 %v2917, %v2913
        %v3274 = vpack.c.b16 %v2918, %v2914
        %v3275 = vpack.c.b16 %v2919, %v2915
        %v3276 = vpack.c.b16 %v2924, %v2920
        %v3277 = vpack.c.b16 %v2925, %v2921
        %v3278 = vpack.c.b16 %v2926, %v2922
        %v3279 = vpack.c.b16 %v2927, %v2923
        %v3280 = vpack.c.b16 %v2932, %v2928
        %v3281 = vpack.c.b16 %v2933, %v2929
        %v3282 = vpack.c.b16 %v2934, %v2930
        %v3283 = vpack.c.b16 %v2935, %v2931
        %v3284 = vpack.c.b16 %v2940, %v2936
        %v3285 = vpack.c.b16 %v2941, %v2937
        %v3286 = vpack.c.b16 %v2942, %v2938
        %v3287 = vpack.c.b16 %v2943, %v2939
        %v3288 = vpack.c.b16 %v2948, %v2944
        %v3289 = vpack.c.b16 %v2949, %v2945
        %v3290 = vpack.c.b16 %v2950, %v2946
        %v3291 = vpack.c.b16 %v2951, %v2947
        %v3292 = vpack.c.b16 %v2956, %v2952
        %v3293 = vpack.c.b16 %v2957, %v2953
        %v3294 = vpack.c.b16 %v2958, %v2954
        %v3295 = vpack.c.b16 %v2959, %v2955
        %v3296 = vpack.c.b16 %v2964, %v2960
        %v3297 = vpack.c.b16 %v2965, %v2961
        %v3298 = vpack.c.b16 %v2966, %v2962
        %v3299 = vpack.c.b16 %v2967, %v2963
        %v3300 = vpack.c.b16 %v2972, %v2968
        %v3301 = vpack.c.b16 %v2973, %v2969
        %v3302 = vpack.c.b16 %v2974, %v2970
        %v3303 = vpack.c.b16 %v2975, %v2971
        %v3304 = vpack.c.b16 %v2980, %v2976
        %v3305 = vpack.c.b16 %v2981, %v2977
        %v3306 = vpack.c.b16 %v2982, %v2978
        %v3307 = vpack.c.b16 %v2983, %v2979
        %v3308 = vpack.c.b16 %v2988, %v2984
        %v3309 = vpack.c.b16 %v2989, %v2985
        %v3310 = vpack.c.b16 %v2990, %v2986
        %v3311 = vpack.c.b16 %v2991, %v2987
        %v3312 = vpack.c.b16 %v2996, %v2992
        %v3313 = vpack.c.b16 %v2997, %v2993
        %v3314 = vpack.c.b16 %v2998, %v2994
        %v3315 = vpack.c.b16 %v2999, %v2995
        %v3316 = vpack.c.b16 %v3004, %v3000
        %v3317 = vpack.c.b16 %v3005, %v3001
        %v3318 = vpack.c.b16 %v3006, %v3002
        %v3319 = vpack.c.b16 %v3007, %v3003
        %v3320 = vpack.c.b16 %v3012, %v3008
        %v3321 = vpack.c.b16 %v3013, %v3009
        %v3322 = vpack.c.b16 %v3014, %v3010
        %v3323 = vpack.c.b16 %v3015, %v3011
        %v3324 = vpack.c.b16 %v3020, %v3016
        %v3325 = vpack.c.b16 %v3021, %v3017
        %v3326 = vpack.c.b16 %v3022, %v3018
        %v3327 = vpack.c.b16 %v3023, %v3019
        %v3328 = vpack.c.b16 %v3028, %v3024
        %v3329 = vpack.c.b16 %v3029, %v3025
        %v3330 = vpack.c.b16 %v3030, %v3026
        %v3331 = vpack.c.b16 %v3031, %v3027
        %v3332 = vpack.c.b16 %v3036, %v3032
        %v3333 = vpack.c.b16 %v3037, %v3033
        %v3334 = vpack.c.b16 %v3038, %v3034
        %v3335 = vpack.c.b16 %v3039, %v3035
        %v3336 = vpack.c.b16 %v3044, %v3040
        %v3337 = vpack.c.b16 %v3045, %v3041
        %v3338 = vpack.c.b16 %v3046, %v3042
        %v3339 = vpack.c.b16 %v3047, %v3043
        %v3340 = vpack.c.b16 %v3052, %v3048
        %v3341 = vpack.c.b16 %v3053, %v3049
        %v3342 = vpack.c.b16 %v3054, %v3050
        %v3343 = vpack.c.b16 %v3055, %v3051
        %v3344 = vpack.c.b16 %v3060, %v3056
        %v3345 = vpack.c.b16 %v3061, %v3057
        %v3346 = vpack.c.b16 %v3062, %v3058
        %v3347 = vpack.c.b16 %v3063, %v3059
        %v3348 = vpack.c.b16 %v3068, %v3064
        %v3349 = vpack.c.b16 %v3069, %v3065
        %v3350 = vpack.c.b16 %v3070, %v3066
        %v3351 = vpack.c.b16 %v3071, %v3067
        %v3352 = vpack.c.b16 %v3076, %v3072
        %v3353 = vpack.c.b16 %v3077, %v3073
        %v3354 = vpack.c.b16 %v3078, %v3074
        %v3355 = vpack.c.b16 %v3079, %v3075
        %v3356 = vpack.c.b16 %v3084, %v3080
        %v3357 = vpack.c.b16 %v3085, %v3081
        %v3358 = vpack.c.b16 %v3086, %v3082
        %v3359 = vpack.c.b16 %v3087, %v3083
        %v3360 = vpack.c.b16 %v3092, %v3088
        %v3361 = vpack.c.b16 %v3093, %v3089
        %v3362 = vpack.c.b16 %v3094, %v3090
        %v3363 = vpack.c.b16 %v3095, %v3091
        %v3364 = vpack.c.b16 %v3100, %v3096
        %v3365 = vpack.c.b16 %v3101, %v3097
        %v3366 = vpack.c.b16 %v3102, %v3098
        %v3367 = vpack.c.b16 %v3103, %v3099
        %v3368 = vpack.c.b16 %v3108, %v3104
        %v3369 = vpack.c.b16 %v3109, %v3105
        %v3370 = vpack.c.b16 %v3110, %v3106
        %v3371 = vpack.c.b16 %v3111, %v3107
        %v3372 = vpack.c.b16 %v3116, %v3112
        %v3373 = vpack.c.b16 %v3117, %v3113
        %v3374 = vpack.c.b16 %v3118, %v3114
        %v3375 = vpack.c.b16 %v3119, %v3115
        %3632 = vmatprep.subr.bf16.mxu0 %v3121
        %3633 = vmatpush1.bf16.msra.mxu0 %v3120
        %3634 = vmatprep.subr.bf16.mxu0 %v3125
        %3635 = vmatpush1.bf16.msra.mxu0 %v3124
        %3636 = vmatprep.subr.bf16.mxu0 %v3129
        %3637 = vmatpush1.bf16.msra.mxu0 %v3128
        %3638 = vmatprep.subr.bf16.mxu0 %v3133
        %3639 = vmatpush1.bf16.msra.mxu0 %v3132
        %3640 = vmatprep.subr.bf16.mxu0 %v3137
        %3641 = vmatpush1.bf16.msra.mxu0 %v3136
        %3642 = vmatprep.subr.bf16.mxu0 %v3141
        %3643 = vmatpush1.bf16.msra.mxu0 %v3140
        %3644 = vmatprep.subr.bf16.mxu0 %v3145
        %3645 = vmatpush1.bf16.msra.mxu0 %v3144
        %3646 = vmatprep.subr.bf16.mxu0 %v3149
        %3647 = vmatpush1.bf16.msra.mxu0 %v3148
        %3648 = vmatprep.subr.bf16.mxu0 %v3153
        %3649 = vmatpush1.bf16.msra.mxu0 %v3152
        %3650 = vmatprep.subr.bf16.mxu0 %v3157
        %3651 = vmatpush1.bf16.msra.mxu0 %v3156
        %3652 = vmatprep.subr.bf16.mxu0 %v3161
        %3653 = vmatpush1.bf16.msra.mxu0 %v3160
        %3654 = vmatprep.subr.bf16.mxu0 %v3165
        %3655 = vmatpush1.bf16.msra.mxu0 %v3164
        %3656 = vmatprep.subr.bf16.mxu0 %v3169
        %3657 = vmatpush1.bf16.msra.mxu0 %v3168
        %3658 = vmatprep.subr.bf16.mxu0 %v3173
        %3659 = vmatpush1.bf16.msra.mxu0 %v3172
        %3660 = vmatprep.subr.bf16.mxu0 %v3177
        %3661 = vmatpush1.bf16.msra.mxu0 %v3176
        %3662 = vmatprep.subr.bf16.mxu0 %v3181
        %3663 = vmatpush1.bf16.msra.mxu0 %v3180
        %3664 = vmatprep.mubr.bf16.mxu0 %v2011
        %3665 = vmatmul.mubr.bf16.gmra.mrb[0].mxu0 %v2010
        %v3666 = vpop.f32.mrb[0].mxu0
        %v3667 = vadd.f32 %v2335, %v3666
        %v3668 = vpop.f32.mrb[0].mxu0
        %v3669 = vadd.f32 %v2339, %v3668
        %v3670 = vpop.f32.mrb[0].mxu0
        %v3671 = vadd.f32 %v2335, %v3670
        %v3672 = vpop.f32.mrb[0].mxu0
        %v3673 = vadd.f32 %v2339, %v3672
        %3674 = vmatprep.mubr.bf16.mxu0 %v2019
        %3675 = vmatmul.mubr.bf16.gmra.mrb[0].mxu0 %v2018
        %v3676 = vpop.f32.mrb[0].mxu0
        %v3677 = vadd.f32 %v2335, %v3676
        %v3678 = vpop.f32.mrb[0].mxu0
        %v3679 = vadd.f32 %v2339, %v3678
        %v3680 = vpop.f32.mrb[0].mxu0
        %v3681 = vadd.f32 %v2335, %v3680
        %v3682 = vpop.f32.mrb[0].mxu0
        %v3683 = vadd.f32 %v2339, %v3682
        %3684 = vmatprep.mubr.bf16.mxu0 %v2027
        %3685 = vmatmul.mubr.bf16.gmra.mrb[0].mxu0 %v2026
        %v3686 = vpop.f32.mrb[0].mxu0
        %v3687 = vadd.f32 %v2335, %v3686
        %v3688 = vpop.f32.mrb[0].mxu0
        %v3689 = vadd.f32 %v2339, %v3688
        %v3690 = vpop.f32.mrb[0].mxu0
        %v3691 = vadd.f32 %v2335, %v3690
        %v3692 = vpop.f32.mrb[0].mxu0
        %v3693 = vadd.f32 %v2339, %v3692
        %3694 = vmatprep.mubr.bf16.mxu0 %v2035
        %3695 = vmatmul.mubr.bf16.gmra.mrb[0].mxu0 %v2034
        %v3696 = vpop.f32.mrb[0].mxu0
        %v3697 = vadd.f32 %v2335, %v3696
        %v3698 = vpop.f32.mrb[0].mxu0
        %v3699 = vadd.f32 %v2339, %v3698
        %v3700 = vpop.f32.mrb[0].mxu0
        %v3701 = vadd.f32 %v2335, %v3700
        %v3702 = vpop.f32.mrb[0].mxu0
        %v3703 = vadd.f32 %v2339, %v3702
        %3704 = vmatprep.mubr.bf16.mxu0 %v2043
        %3705 = vmatmul.mubr.bf16.gmra.mrb[0].mxu0 %v2042
        %v3706 = vpop.f32.mrb[0].mxu0
        %v3707 = vadd.f32 %v2335, %v3706
        %v3708 = vpop.f32.mrb[0].mxu0
        %v3709 = vadd.f32 %v2339, %v3708
        %v3710 = vpop.f32.mrb[0].mxu0
        %v3711 = vadd.f32 %v2335, %v3710
        %v3712 = vpop.f32.mrb[0].mxu0
        %v3713 = vadd.f32 %v2339, %v3712
        %3714 = vmatprep.mubr.bf16.mxu0 %v2051
        %3715 = vmatmul.mubr.bf16.gmra.mrb[0].mxu0 %v2050
        %v3716 = vpop.f32.mrb[0].mxu0
        %v3717 = vadd.f32 %v2335, %v3716
        %v3718 = vpop.f32.mrb[0].mxu0
        %v3719 = vadd.f32 %v2339, %v3718
        %v3720 = vpop.f32.mrb[0].mxu0
        %v3721 = vadd.f32 %v2335, %v3720
        %v3722 = vpop.f32.mrb[0].mxu0
        %v3723 = vadd.f32 %v2339, %v3722
        %3724 = vmatprep.mubr.bf16.mxu0 %v2059
        %3725 = vmatmul.mubr.bf16.gmra.mrb[0].mxu0 %v2058
        %v3726 = vpop.f32.mrb[0].mxu0
        %v3727 = vadd.f32 %v2335, %v3726
        %v3728 = vpop.f32.mrb[0].mxu0
        %v3729 = vadd.f32 %v2339, %v3728
        %v3730 = vpop.f32.mrb[0].mxu0
        %v3731 = vadd.f32 %v2335, %v3730
        %v3732 = vpop.f32.mrb[0].mxu0
        %v3733 = vadd.f32 %v2339, %v3732
        %3734 = vmatprep.mubr.bf16.mxu0 %v2067
        %3735 = vmatmul.mubr.bf16.gmra.mrb[0].mxu0 %v2066
        %v3736 = vpop.f32.mrb[0].mxu0
        %v3737 = vadd.f32 %v2335, %v3736
        %v3738 = vpop.f32.mrb[0].mxu0
        %v3739 = vadd.f32 %v2339, %v3738
        %v3740 = vpop.f32.mrb[0].mxu0
        %v3741 = vadd.f32 %v2335, %v3740
        %v3742 = vpop.f32.mrb[0].mxu0
        %v3743 = vadd.f32 %v2339, %v3742
        %3744 = vdwg.mxu0
        %3745 = vmatprep.subr.bf16.mxu0 %v3185
        %3746 = vmatpush1.bf16.msra.mxu0 %v3184
        %3747 = vmatprep.subr.bf16.mxu0 %v3189
        %3748 = vmatpush1.bf16.msra.mxu0 %v3188
        %3749 = vmatprep.subr.bf16.mxu0 %v3193
        %3750 = vmatpush1.bf16.msra.mxu0 %v3192
        %3751 = vmatprep.subr.bf16.mxu0 %v3197
        %3752 = vmatpush1.bf16.msra.mxu0 %v3196
        %3753 = vmatprep.subr.bf16.mxu0 %v3201
        %3754 = vmatpush1.bf16.msra.mxu0 %v3200
        %3755 = vmatprep.subr.bf16.mxu0 %v3205
        %3756 = vmatpush1.bf16.msra.mxu0 %v3204
        %3757 = vmatprep.subr.bf16.mxu0 %v3209
        %3758 = vmatpush1.bf16.msra.mxu0 %v3208
        %3759 = vmatprep.subr.bf16.mxu0 %v3213
        %3760 = vmatpush1.bf16.msra.mxu0 %v3212
        %3761 = vmatprep.subr.bf16.mxu0 %v3217
        %3762 = vmatpush1.bf16.msra.mxu0 %v3216
        %3763 = vmatprep.subr.bf16.mxu0 %v3221
        %3764 = vmatpush1.bf16.msra.mxu0 %v3220
        %3765 = vmatprep.subr.bf16.mxu0 %v3225
        %3766 = vmatpush1.bf16.msra.mxu0 %v3224
        %3767 = vmatprep.subr.bf16.mxu0 %v3229
        %3768 = vmatpush1.bf16.msra.mxu0 %v3228
        %3769 = vmatprep.subr.bf16.mxu0 %v3233
        %3770 = vmatpush1.bf16.msra.mxu0 %v3232
        %3771 = vmatprep.subr.bf16.mxu0 %v3237
        %3772 = vmatpush1.bf16.msra.mxu0 %v3236
        %3773 = vmatprep.subr.bf16.mxu0 %v3241
        %3774 = vmatpush1.bf16.msra.mxu0 %v3240
        %3775 = vmatprep.subr.bf16.mxu0 %v3245
        %3776 = vmatpush1.bf16.msra.mxu0 %v3244
        %3777 = vmatprep.mubr.bf16.mxu0 %v2013
        %3778 = vmatmul.mubr.bf16.gmra.mrb[0].mxu0 %v2012
        %v3779 = vpop.f32.mrb[0].mxu0
        %v3780 = vadd.f32 %v3667, %v3779
        %v3781 = vpop.f32.mrb[0].mxu0
        %v3782 = vadd.f32 %v3669, %v3781
        %v3783 = vpop.f32.mrb[0].mxu0
        %v3784 = vadd.f32 %v3671, %v3783
        %v3785 = vpop.f32.mrb[0].mxu0
        %v3786 = vadd.f32 %v3673, %v3785
        %3787 = vmatprep.mubr.bf16.mxu0 %v2021
        %3788 = vmatmul.mubr.bf16.gmra.mrb[0].mxu0 %v2020
        %v3789 = vpop.f32.mrb[0].mxu0
        %v3790 = vadd.f32 %v3677, %v3789
        %v3791 = vpop.f32.mrb[0].mxu0
        %v3792 = vadd.f32 %v3679, %v3791
        %v3793 = vpop.f32.mrb[0].mxu0
        %v3794 = vadd.f32 %v3681, %v3793
        %v3795 = vpop.f32.mrb[0].mxu0
        %v3796 = vadd.f32 %v3683, %v3795
        %3797 = vmatprep.mubr.bf16.mxu0 %v2029
        %3798 = vmatmul.mubr.bf16.gmra.mrb[0].mxu0 %v2028
        %v3799 = vpop.f32.mrb[0].mxu0
        %v3800 = vadd.f32 %v3687, %v3799
        %v3801 = vpop.f32.mrb[0].mxu0
        %v3802 = vadd.f32 %v3689, %v3801
        %v3803 = vpop.f32.mrb[0].mxu0
        %v3804 = vadd.f32 %v3691, %v3803
        %v3805 = vpop.f32.mrb[0].mxu0
        %v3806 = vadd.f32 %v3693, %v3805
        %3807 = vmatprep.mubr.bf16.mxu0 %v2037
        %3808 = vmatmul.mubr.bf16.gmra.mrb[0].mxu0 %v2036
        %v3809 = vpop.f32.mrb[0].mxu0
        %v3810 = vadd.f32 %v3697, %v3809
        %v3811 = vpop.f32.mrb[0].mxu0
        %v3812 = vadd.f32 %v3699, %v3811
        %v3813 = vpop.f32.mrb[0].mxu0
        %v3814 = vadd.f32 %v3701, %v3813
        %v3815 = vpop.f32.mrb[0].mxu0
        %v3816 = vadd.f32 %v3703, %v3815
        %3817 = vmatprep.mubr.bf16.mxu0 %v2045
        %3818 = vmatmul.mubr.bf16.gmra.mrb[0].mxu0 %v2044
        %v3819 = vpop.f32.mrb[0].mxu0
        %v3820 = vadd.f32 %v3707, %v3819
        %v3821 = vpop.f32.mrb[0].mxu0
        %v3822 = vadd.f32 %v3709, %v3821
        %v3823 = vpop.f32.mrb[0].mxu0
        %v3824 = vadd.f32 %v3711, %v3823
        %v3825 = vpop.f32.mrb[0].mxu0
        %v3826 = vadd.f32 %v3713, %v3825
        %3827 = vmatprep.mubr.bf16.mxu0 %v2053
        %3828 = vmatmul.mubr.bf16.gmra.mrb[0].mxu0 %v2052
        %v3829 = vpop.f32.mrb[0].mxu0
        %v3830 = vadd.f32 %v3717, %v3829
        %v3831 = vpop.f32.mrb[0].mxu0
        %v3832 = vadd.f32 %v3719, %v3831
        %v3833 = vpop.f32.mrb[0].mxu0
        %v3834 = vadd.f32 %v3721, %v3833
        %v3835 = vpop.f32.mrb[0].mxu0
        %v3836 = vadd.f32 %v3723, %v3835
        %3837 = vmatprep.mubr.bf16.mxu0 %v2061
        %3838 = vmatmul.mubr.bf16.gmra.mrb[0].mxu0 %v2060
        %v3839 = vpop.f32.mrb[0].mxu0
        %v3840 = vadd.f32 %v3727, %v3839
        %v3841 = vpop.f32.mrb[0].mxu0
        %v3842 = vadd.f32 %v3729, %v3841
        %v3843 = vpop.f32.mrb[0].mxu0
        %v3844 = vadd.f32 %v3731, %v3843
        %v3845 = vpop.f32.mrb[0].mxu0
        %v3846 = vadd.f32 %v3733, %v3845
        %3847 = vmatprep.mubr.bf16.mxu0 %v2069
        %3848 = vmatmul.mubr.bf16.gmra.mrb[0].mxu0 %v2068
        %v3849 = vpop.f32.mrb[0].mxu0
        %v3850 = vadd.f32 %v3737, %v3849
        %v3851 = vpop.f32.mrb[0].mxu0
        %v3852 = vadd.f32 %v3739, %v3851
        %v3853 = vpop.f32.mrb[0].mxu0
        %v3854 = vadd.f32 %v3741, %v3853
        %v3855 = vpop.f32.mrb[0].mxu0
        %v3856 = vadd.f32 %v3743, %v3855
        %3857 = vdwg.mxu0
        %3858 = vmatprep.subr.bf16.mxu0 %v3249
        %3859 = vmatpush1.bf16.msra.mxu0 %v3248
        %3860 = vmatprep.subr.bf16.mxu0 %v3253
        %3861 = vmatpush1.bf16.msra.mxu0 %v3252
        %3862 = vmatprep.subr.bf16.mxu0 %v3257
        %3863 = vmatpush1.bf16.msra.mxu0 %v3256
        %3864 = vmatprep.subr.bf16.mxu0 %v3261
        %3865 = vmatpush1.bf16.msra.mxu0 %v3260
        %3866 = vmatprep.subr.bf16.mxu0 %v3265
        %3867 = vmatpush1.bf16.msra.mxu0 %v3264
        %3868 = vmatprep.subr.bf16.mxu0 %v3269
        %3869 = vmatpush1.bf16.msra.mxu0 %v3268
        %3870 = vmatprep.subr.bf16.mxu0 %v3273
        %3871 = vmatpush1.bf16.msra.mxu0 %v3272
        %3872 = vmatprep.subr.bf16.mxu0 %v3277
        %3873 = vmatpush1.bf16.msra.mxu0 %v3276
        %3874 = vmatprep.subr.bf16.mxu0 %v3281
        %3875 = vmatpush1.bf16.msra.mxu0 %v3280
        %3876 = vmatprep.subr.bf16.mxu0 %v3285
        %3877 = vmatpush1.bf16.msra.mxu0 %v3284
        %3878 = vmatprep.subr.bf16.mxu0 %v3289
        %3879 = vmatpush1.bf16.msra.mxu0 %v3288
        %3880 = vmatprep.subr.bf16.mxu0 %v3293
        %3881 = vmatpush1.bf16.msra.mxu0 %v3292
        %3882 = vmatprep.subr.bf16.mxu0 %v3297
        %3883 = vmatpush1.bf16.msra.mxu0 %v3296
        %3884 = vmatprep.subr.bf16.mxu0 %v3301
        %3885 = vmatpush1.bf16.msra.mxu0 %v3300
        %3886 = vmatprep.subr.bf16.mxu0 %v3305
        %3887 = vmatpush1.bf16.msra.mxu0 %v3304
        %3888 = vmatprep.subr.bf16.mxu0 %v3309
        %3889 = vmatpush1.bf16.msra.mxu0 %v3308
        %3890 = vmatprep.mubr.bf16.mxu0 %v2015
        %3891 = vmatmul.mubr.bf16.gmra.mrb[0].mxu0 %v2014
        %v3892 = vpop.f32.mrb[0].mxu0
        %v3893 = vadd.f32 %v3780, %v3892
        %v3894 = vpop.f32.mrb[0].mxu0
        %v3895 = vadd.f32 %v3782, %v3894
        %v3896 = vpop.f32.mrb[0].mxu0
        %v3897 = vadd.f32 %v3784, %v3896
        %v3898 = vpop.f32.mrb[0].mxu0
        %v3899 = vadd.f32 %v3786, %v3898
        %3900 = vmatprep.mubr.bf16.mxu0 %v2023
        %3901 = vmatmul.mubr.bf16.gmra.mrb[0].mxu0 %v2022
        %v3902 = vpop.f32.mrb[0].mxu0
        %v3903 = vadd.f32 %v3790, %v3902
        %v3904 = vpop.f32.mrb[0].mxu0
        %v3905 = vadd.f32 %v3792, %v3904
        %v3906 = vpop.f32.mrb[0].mxu0
        %v3907 = vadd.f32 %v3794, %v3906
        %v3908 = vpop.f32.mrb[0].mxu0
        %v3909 = vadd.f32 %v3796, %v3908
        %3910 = vmatprep.mubr.bf16.mxu0 %v2031
        %3911 = vmatmul.mubr.bf16.gmra.mrb[0].mxu0 %v2030
        %v3912 = vpop.f32.mrb[0].mxu0
        %v3913 = vadd.f32 %v3800, %v3912
        %v3914 = vpop.f32.mrb[0].mxu0
        %v3915 = vadd.f32 %v3802, %v3914
        %v3916 = vpop.f32.mrb[0].mxu0
        %v3917 = vadd.f32 %v3804, %v3916
        %v3918 = vpop.f32.mrb[0].mxu0
        %v3919 = vadd.f32 %v3806, %v3918
        %3920 = vmatprep.mubr.bf16.mxu0 %v2039
        %3921 = vmatmul.mubr.bf16.gmra.mrb[0].mxu0 %v2038
        %v3922 = vpop.f32.mrb[0].mxu0
        %v3923 = vadd.f32 %v3810, %v3922
        %v3924 = vpop.f32.mrb[0].mxu0
        %v3925 = vadd.f32 %v3812, %v3924
        %v3926 = vpop.f32.mrb[0].mxu0
        %v3927 = vadd.f32 %v3814, %v3926
        %v3928 = vpop.f32.mrb[0].mxu0
        %v3929 = vadd.f32 %v3816, %v3928
        %3930 = vmatprep.mubr.bf16.mxu0 %v2047
        %3931 = vmatmul.mubr.bf16.gmra.mrb[0].mxu0 %v2046
        %v3932 = vpop.f32.mrb[0].mxu0
        %v3933 = vadd.f32 %v3820, %v3932
        %v3934 = vpop.f32.mrb[0].mxu0
        %v3935 = vadd.f32 %v3822, %v3934
        %v3936 = vpop.f32.mrb[0].mxu0
        %v3937 = vadd.f32 %v3824, %v3936
        %v3938 = vpop.f32.mrb[0].mxu0
        %v3939 = vadd.f32 %v3826, %v3938
        %3940 = vmatprep.mubr.bf16.mxu0 %v2055
        %3941 = vmatmul.mubr.bf16.gmra.mrb[0].mxu0 %v2054
        %v3942 = vpop.f32.mrb[0].mxu0
        %v3943 = vadd.f32 %v3830, %v3942
        %v3944 = vpop.f32.mrb[0].mxu0
        %v3945 = vadd.f32 %v3832, %v3944
        %v3946 = vpop.f32.mrb[0].mxu0
        %v3947 = vadd.f32 %v3834, %v3946
        %v3948 = vpop.f32.mrb[0].mxu0
        %v3949 = vadd.f32 %v3836, %v3948
        %3950 = vmatprep.mubr.bf16.mxu0 %v2063
        %3951 = vmatmul.mubr.bf16.gmra.mrb[0].mxu0 %v2062
        %v3952 = vpop.f32.mrb[0].mxu0
        %v3953 = vadd.f32 %v3840, %v3952
        %v3954 = vpop.f32.mrb[0].mxu0
        %v3955 = vadd.f32 %v3842, %v3954
        %v3956 = vpop.f32.mrb[0].mxu0
        %v3957 = vadd.f32 %v3844, %v3956
        %v3958 = vpop.f32.mrb[0].mxu0
        %v3959 = vadd.f32 %v3846, %v3958
        %3960 = vmatprep.mubr.bf16.mxu0 %v2071
        %3961 = vmatmul.mubr.bf16.gmra.mrb[0].mxu0 %v2070
        %v3962 = vpop.f32.mrb[0].mxu0
        %v3963 = vadd.f32 %v3850, %v3962
        %v3964 = vpop.f32.mrb[0].mxu0
        %v3965 = vadd.f32 %v3852, %v3964
        %v3966 = vpop.f32.mrb[0].mxu0
        %v3967 = vadd.f32 %v3854, %v3966
        %v3968 = vpop.f32.mrb[0].mxu0
        %v3969 = vadd.f32 %v3856, %v3968
        %3970 = vdwg.mxu0
        %3971 = vmatprep.subr.bf16.mxu0 %v3313
        %3972 = vmatpush1.bf16.msra.mxu0 %v3312
        %3973 = vmatprep.subr.bf16.mxu0 %v3317
        %3974 = vmatpush1.bf16.msra.mxu0 %v3316
        %3975 = vmatprep.subr.bf16.mxu0 %v3321
        %3976 = vmatpush1.bf16.msra.mxu0 %v3320
        %3977 = vmatprep.subr.bf16.mxu0 %v3325
        %3978 = vmatpush1.bf16.msra.mxu0 %v3324
        %3979 = vmatprep.subr.bf16.mxu0 %v3329
        %3980 = vmatpush1.bf16.msra.mxu0 %v3328
        %3981 = vmatprep.subr.bf16.mxu0 %v3333
        %3982 = vmatpush1.bf16.msra.mxu0 %v3332
        %3983 = vmatprep.subr.bf16.mxu0 %v3337
        %3984 = vmatpush1.bf16.msra.mxu0 %v3336
        %3985 = vmatprep.subr.bf16.mxu0 %v3341
        %3986 = vmatpush1.bf16.msra.mxu0 %v3340
        %3987 = vmatprep.subr.bf16.mxu0 %v3345
        %3988 = vmatpush1.bf16.msra.mxu0 %v3344
        %3989 = vmatprep.subr.bf16.mxu0 %v3349
        %3990 = vmatpush1.bf16.msra.mxu0 %v3348
        %3991 = vmatprep.subr.bf16.mxu0 %v3353
        %3992 = vmatpush1.bf16.msra.mxu0 %v3352
        %3993 = vmatprep.subr.bf16.mxu0 %v3357
        %3994 = vmatpush1.bf16.msra.mxu0 %v3356
        %3995 = vmatprep.subr.bf16.mxu0 %v3361
        %3996 = vmatpush1.bf16.msra.mxu0 %v3360
        %3997 = vmatprep.subr.bf16.mxu0 %v3365
        %3998 = vmatpush1.bf16.msra.mxu0 %v3364
        %3999 = vmatprep.subr.bf16.mxu0 %v3369
        %4000 = vmatpush1.bf16.msra.mxu0 %v3368
        %4001 = vmatprep.subr.bf16.mxu0 %v3373
        %4002 = vmatpush1.bf16.msra.mxu0 %v3372
        %4003 = vmatprep.mubr.bf16.mxu0 %v2017
        %4004 = vmatmul.mubr.bf16.gmra.mrb[0].mxu0 %v2016
        %v4005 = vpop.f32.mrb[0].mxu0
        %v4006 = vadd.f32 %v3893, %v4005
        %v4007 = vpop.f32.mrb[0].mxu0
        %v4008 = vadd.f32 %v3895, %v4007
        %v4009 = vpop.f32.mrb[0].mxu0
        %v4010 = vadd.f32 %v3897, %v4009
        %v4011 = vpop.f32.mrb[0].mxu0
        %v4012 = vadd.f32 %v3899, %v4011
        %4013 = vmatprep.mubr.bf16.mxu0 %v2025
        %4014 = vmatmul.mubr.bf16.gmra.mrb[0].mxu0 %v2024
        %v4015 = vpop.f32.mrb[0].mxu0
        %v4016 = vadd.f32 %v3903, %v4015
        %v4017 = vpop.f32.mrb[0].mxu0
        %v4018 = vadd.f32 %v3905, %v4017
        %v4019 = vpop.f32.mrb[0].mxu0
        %v4020 = vadd.f32 %v3907, %v4019
        %v4021 = vpop.f32.mrb[0].mxu0
        %v4022 = vadd.f32 %v3909, %v4021
        %4023 = vmatprep.mubr.bf16.mxu0 %v2033
        %4024 = vmatmul.mubr.bf16.gmra.mrb[0].mxu0 %v2032
        %v4025 = vpop.f32.mrb[0].mxu0
        %v4026 = vadd.f32 %v3913, %v4025
        %v4027 = vpop.f32.mrb[0].mxu0
        %v4028 = vadd.f32 %v3915, %v4027
        %v4029 = vpop.f32.mrb[0].mxu0
        %v4030 = vadd.f32 %v3917, %v4029
        %v4031 = vpop.f32.mrb[0].mxu0
        %v4032 = vadd.f32 %v3919, %v4031
        %4033 = vmatprep.mubr.bf16.mxu0 %v2041
        %4034 = vmatmul.mubr.bf16.gmra.mrb[0].mxu0 %v2040
        %v4035 = vpop.f32.mrb[0].mxu0
        %v4036 = vadd.f32 %v3923, %v4035
        %v4037 = vpop.f32.mrb[0].mxu0
        %v4038 = vadd.f32 %v3925, %v4037
        %v4039 = vpop.f32.mrb[0].mxu0
        %v4040 = vadd.f32 %v3927, %v4039
        %v4041 = vpop.f32.mrb[0].mxu0
        %v4042 = vadd.f32 %v3929, %v4041
        %4043 = vmatprep.mubr.bf16.mxu0 %v2049
        %4044 = vmatmul.mubr.bf16.gmra.mrb[0].mxu0 %v2048
        %v4045 = vpop.f32.mrb[0].mxu0
        %v4046 = vadd.f32 %v3933, %v4045
        %v4047 = vpop.f32.mrb[0].mxu0
        %v4048 = vadd.f32 %v3935, %v4047
        %v4049 = vpop.f32.mrb[0].mxu0
        %v4050 = vadd.f32 %v3937, %v4049
        %v4051 = vpop.f32.mrb[0].mxu0
        %v4052 = vadd.f32 %v3939, %v4051
        %4053 = vmatprep.mubr.bf16.mxu0 %v2057
        %4054 = vmatmul.mubr.bf16.gmra.mrb[0].mxu0 %v2056
        %v4055 = vpop.f32.mrb[0].mxu0
        %v4056 = vadd.f32 %v3943, %v4055
        %v4057 = vpop.f32.mrb[0].mxu0
        %v4058 = vadd.f32 %v3945, %v4057
        %v4059 = vpop.f32.mrb[0].mxu0
        %v4060 = vadd.f32 %v3947, %v4059
        %v4061 = vpop.f32.mrb[0].mxu0
        %v4062 = vadd.f32 %v3949, %v4061
        %4063 = vmatprep.mubr.bf16.mxu0 %v2065
        %4064 = vmatmul.mubr.bf16.gmra.mrb[0].mxu0 %v2064
        %v4065 = vpop.f32.mrb[0].mxu0
        %v4066 = vadd.f32 %v3953, %v4065
        %v4067 = vpop.f32.mrb[0].mxu0
        %v4068 = vadd.f32 %v3955, %v4067
        %v4069 = vpop.f32.mrb[0].mxu0
        %v4070 = vadd.f32 %v3957, %v4069
        %v4071 = vpop.f32.mrb[0].mxu0
        %v4072 = vadd.f32 %v3959, %v4071
        %4073 = vmatprep.mubr.bf16.mxu0 %v2073
        %4074 = vmatmul.mubr.bf16.gmra.mrb[0].mxu0 %v2072
        %v4075 = vpop.f32.mrb[0].mxu0
        %v4076 = vadd.f32 %v3963, %v4075
        %v4077 = vpop.f32.mrb[0].mxu0
        %v4078 = vadd.f32 %v3965, %v4077
        %v4079 = vpop.f32.mrb[0].mxu0
        %v4080 = vadd.f32 %v3967, %v4079
        %v4081 = vpop.f32.mrb[0].mxu0
        %v4082 = vadd.f32 %v3969, %v4081
        %4083 = vdwg.mxu0
        %4084 = vmatprep.subr.bf16.mxu0 %v3123
        %4085 = vmatpush1.bf16.msra.mxu0 %v3122
        %4086 = vmatprep.subr.bf16.mxu0 %v3127
        %4087 = vmatpush1.bf16.msra.mxu0 %v3126
        %4088 = vmatprep.subr.bf16.mxu0 %v3131
        %4089 = vmatpush1.bf16.msra.mxu0 %v3130
        %4090 = vmatprep.subr.bf16.mxu0 %v3135
        %4091 = vmatpush1.bf16.msra.mxu0 %v3134
        %4092 = vmatprep.subr.bf16.mxu0 %v3139
        %4093 = vmatpush1.bf16.msra.mxu0 %v3138
        %4094 = vmatprep.subr.bf16.mxu0 %v3143
        %4095 = vmatpush1.bf16.msra.mxu0 %v3142
        %4096 = vmatprep.subr.bf16.mxu0 %v3147
        %4097 = vmatpush1.bf16.msra.mxu0 %v3146
        %4098 = vmatprep.subr.bf16.mxu0 %v3151
        %4099 = vmatpush1.bf16.msra.mxu0 %v3150
        %4100 = vmatprep.subr.bf16.mxu0 %v3155
        %4101 = vmatpush1.bf16.msra.mxu0 %v3154
        %4102 = vmatprep.subr.bf16.mxu0 %v3159
        %4103 = vmatpush1.bf16.msra.mxu0 %v3158
        %4104 = vmatprep.subr.bf16.mxu0 %v3163
        %4105 = vmatpush1.bf16.msra.mxu0 %v3162
        %4106 = vmatprep.subr.bf16.mxu0 %v3167
        %4107 = vmatpush1.bf16.msra.mxu0 %v3166
        %4108 = vmatprep.subr.bf16.mxu0 %v3171
        %4109 = vmatpush1.bf16.msra.mxu0 %v3170
        %4110 = vmatprep.subr.bf16.mxu0 %v3175
        %4111 = vmatpush1.bf16.msra.mxu0 %v3174
        %4112 = vmatprep.subr.bf16.mxu0 %v3179
        %4113 = vmatpush1.bf16.msra.mxu0 %v3178
        %4114 = vmatprep.subr.bf16.mxu0 %v3183
        %4115 = vmatpush1.bf16.msra.mxu0 %v3182
        %4116 = vmatprep.mubr.bf16.mxu0 %v2011
        %4117 = vmatmul.mubr.bf16.gmra.mrb[0].mxu0 %v2010
        %v4118 = vpop.f32.mrb[0].mxu0
        %v4119 = vadd.f32 %v2343, %v4118
        %v4120 = vpop.f32.mrb[0].mxu0
        %v4121 = vadd.f32 %v2347, %v4120
        %v4122 = vpop.f32.mrb[0].mxu0
        %v4123 = vadd.f32 %v2343, %v4122
        %v4124 = vpop.f32.mrb[0].mxu0
        %v4125 = vadd.f32 %v2347, %v4124
        %4126 = vmatprep.mubr.bf16.mxu0 %v2019
        %4127 = vmatmul.mubr.bf16.gmra.mrb[0].mxu0 %v2018
        %v4128 = vpop.f32.mrb[0].mxu0
        %v4129 = vadd.f32 %v2343, %v4128
        %v4130 = vpop.f32.mrb[0].mxu0
        %v4131 = vadd.f32 %v2347, %v4130
        %v4132 = vpop.f32.mrb[0].mxu0
        %v4133 = vadd.f32 %v2343, %v4132
        %v4134 = vpop.f32.mrb[0].mxu0
        %v4135 = vadd.f32 %v2347, %v4134
        %4136 = vmatprep.mubr.bf16.mxu0 %v2027
        %4137 = vmatmul.mubr.bf16.gmra.mrb[0].mxu0 %v2026
        %v4138 = vpop.f32.mrb[0].mxu0
        %v4139 = vadd.f32 %v2343, %v4138
        %v4140 = vpop.f32.mrb[0].mxu0
        %v4141 = vadd.f32 %v2347, %v4140
        %v4142 = vpop.f32.mrb[0].mxu0
        %v4143 = vadd.f32 %v2343, %v4142
        %v4144 = vpop.f32.mrb[0].mxu0
        %v4145 = vadd.f32 %v2347, %v4144
        %4146 = vmatprep.mubr.bf16.mxu0 %v2035
        %4147 = vmatmul.mubr.bf16.gmra.mrb[0].mxu0 %v2034
        %v4148 = vpop.f32.mrb[0].mxu0
        %v4149 = vadd.f32 %v2343, %v4148
        %v4150 = vpop.f32.mrb[0].mxu0
        %v4151 = vadd.f32 %v2347, %v4150
        %v4152 = vpop.f32.mrb[0].mxu0
        %v4153 = vadd.f32 %v2343, %v4152
        %v4154 = vpop.f32.mrb[0].mxu0
        %v4155 = vadd.f32 %v2347, %v4154
        %4156 = vmatprep.mubr.bf16.mxu0 %v2043
        %4157 = vmatmul.mubr.bf16.gmra.mrb[0].mxu0 %v2042
        %v4158 = vpop.f32.mrb[0].mxu0
        %v4159 = vadd.f32 %v2343, %v4158
        %v4160 = vpop.f32.mrb[0].mxu0
        %v4161 = vadd.f32 %v2347, %v4160
        %v4162 = vpop.f32.mrb[0].mxu0
        %v4163 = vadd.f32 %v2343, %v4162
        %v4164 = vpop.f32.mrb[0].mxu0
        %v4165 = vadd.f32 %v2347, %v4164
        %4166 = vmatprep.mubr.bf16.mxu0 %v2051
        %4167 = vmatmul.mubr.bf16.gmra.mrb[0].mxu0 %v2050
        %v4168 = vpop.f32.mrb[0].mxu0
        %v4169 = vadd.f32 %v2343, %v4168
        %v4170 = vpop.f32.mrb[0].mxu0
        %v4171 = vadd.f32 %v2347, %v4170
        %v4172 = vpop.f32.mrb[0].mxu0
        %v4173 = vadd.f32 %v2343, %v4172
        %v4174 = vpop.f32.mrb[0].mxu0
        %v4175 = vadd.f32 %v2347, %v4174
        %4176 = vmatprep.mubr.bf16.mxu0 %v2059
        %4177 = vmatmul.mubr.bf16.gmra.mrb[0].mxu0 %v2058
        %v4178 = vpop.f32.mrb[0].mxu0
        %v4179 = vadd.f32 %v2343, %v4178
        %v4180 = vpop.f32.mrb[0].mxu0
        %v4181 = vadd.f32 %v2347, %v4180
        %v4182 = vpop.f32.mrb[0].mxu0
        %v4183 = vadd.f32 %v2343, %v4182
        %v4184 = vpop.f32.mrb[0].mxu0
        %v4185 = vadd.f32 %v2347, %v4184
        %4186 = vmatprep.mubr.bf16.mxu0 %v2067
        %4187 = vmatmul.mubr.bf16.gmra.mrb[0].mxu0 %v2066
        %v4188 = vpop.f32.mrb[0].mxu0
        %v4189 = vadd.f32 %v2343, %v4188
        %v4190 = vpop.f32.mrb[0].mxu0
        %v4191 = vadd.f32 %v2347, %v4190
        %v4192 = vpop.f32.mrb[0].mxu0
        %v4193 = vadd.f32 %v2343, %v4192
        %v4194 = vpop.f32.mrb[0].mxu0
        %v4195 = vadd.f32 %v2347, %v4194
        %4196 = vdwg.mxu0
        %4197 = vmatprep.subr.bf16.mxu0 %v3187
        %4198 = vmatpush1.bf16.msra.mxu0 %v3186
        %4199 = vmatprep.subr.bf16.mxu0 %v3191
        %4200 = vmatpush1.bf16.msra.mxu0 %v3190
        %4201 = vmatprep.subr.bf16.mxu0 %v3195
        %4202 = vmatpush1.bf16.msra.mxu0 %v3194
        %4203 = vmatprep.subr.bf16.mxu0 %v3199
        %4204 = vmatpush1.bf16.msra.mxu0 %v3198
        %4205 = vmatprep.subr.bf16.mxu0 %v3203
        %4206 = vmatpush1.bf16.msra.mxu0 %v3202
        %4207 = vmatprep.subr.bf16.mxu0 %v3207
        %4208 = vmatpush1.bf16.msra.mxu0 %v3206
        %4209 = vmatprep.subr.bf16.mxu0 %v3211
        %4210 = vmatpush1.bf16.msra.mxu0 %v3210
        %4211 = vmatprep.subr.bf16.mxu0 %v3215
        %4212 = vmatpush1.bf16.msra.mxu0 %v3214
        %4213 = vmatprep.subr.bf16.mxu0 %v3219
        %4214 = vmatpush1.bf16.msra.mxu0 %v3218
        %4215 = vmatprep.subr.bf16.mxu0 %v3223
        %4216 = vmatpush1.bf16.msra.mxu0 %v3222
        %4217 = vmatprep.subr.bf16.mxu0 %v3227
        %4218 = vmatpush1.bf16.msra.mxu0 %v3226
        %4219 = vmatprep.subr.bf16.mxu0 %v3231
        %4220 = vmatpush1.bf16.msra.mxu0 %v3230
        %4221 = vmatprep.subr.bf16.mxu0 %v3235
        %4222 = vmatpush1.bf16.msra.mxu0 %v3234
        %4223 = vmatprep.subr.bf16.mxu0 %v3239
        %4224 = vmatpush1.bf16.msra.mxu0 %v3238
        %4225 = vmatprep.subr.bf16.mxu0 %v3243
        %4226 = vmatpush1.bf16.msra.mxu0 %v3242
        %4227 = vmatprep.subr.bf16.mxu0 %v3247
        %4228 = vmatpush1.bf16.msra.mxu0 %v3246
        %4229 = vmatprep.mubr.bf16.mxu0 %v2013
        %4230 = vmatmul.mubr.bf16.gmra.mrb[0].mxu0 %v2012
        %v4231 = vpop.f32.mrb[0].mxu0
        %v4232 = vadd.f32 %v4119, %v4231
        %v4233 = vpop.f32.mrb[0].mxu0
        %v4234 = vadd.f32 %v4121, %v4233
        %v4235 = vpop.f32.mrb[0].mxu0
        %v4236 = vadd.f32 %v4123, %v4235
        %v4237 = vpop.f32.mrb[0].mxu0
        %v4238 = vadd.f32 %v4125, %v4237
        %4239 = vmatprep.mubr.bf16.mxu0 %v2021
        %4240 = vmatmul.mubr.bf16.gmra.mrb[0].mxu0 %v2020
        %v4241 = vpop.f32.mrb[0].mxu0
        %v4242 = vadd.f32 %v4129, %v4241
        %v4243 = vpop.f32.mrb[0].mxu0
        %v4244 = vadd.f32 %v4131, %v4243
        %v4245 = vpop.f32.mrb[0].mxu0
        %v4246 = vadd.f32 %v4133, %v4245
        %v4247 = vpop.f32.mrb[0].mxu0
        %v4248 = vadd.f32 %v4135, %v4247
        %4249 = vmatprep.mubr.bf16.mxu0 %v2029
        %4250 = vmatmul.mubr.bf16.gmra.mrb[0].mxu0 %v2028
        %v4251 = vpop.f32.mrb[0].mxu0
        %v4252 = vadd.f32 %v4139, %v4251
        %v4253 = vpop.f32.mrb[0].mxu0
        %v4254 = vadd.f32 %v4141, %v4253
        %v4255 = vpop.f32.mrb[0].mxu0
        %v4256 = vadd.f32 %v4143, %v4255
        %v4257 = vpop.f32.mrb[0].mxu0
        %v4258 = vadd.f32 %v4145, %v4257
        %4259 = vmatprep.mubr.bf16.mxu0 %v2037
        %4260 = vmatmul.mubr.bf16.gmra.mrb[0].mxu0 %v2036
        %v4261 = vpop.f32.mrb[0].mxu0
        %v4262 = vadd.f32 %v4149, %v4261
        %v4263 = vpop.f32.mrb[0].mxu0
        %v4264 = vadd.f32 %v4151, %v4263
        %v4265 = vpop.f32.mrb[0].mxu0
        %v4266 = vadd.f32 %v4153, %v4265
        %v4267 = vpop.f32.mrb[0].mxu0
        %v4268 = vadd.f32 %v4155, %v4267
        %4269 = vmatprep.mubr.bf16.mxu0 %v2045
        %4270 = vmatmul.mubr.bf16.gmra.mrb[0].mxu0 %v2044
        %v4271 = vpop.f32.mrb[0].mxu0
        %v4272 = vadd.f32 %v4159, %v4271
        %v4273 = vpop.f32.mrb[0].mxu0
        %v4274 = vadd.f32 %v4161, %v4273
        %v4275 = vpop.f32.mrb[0].mxu0
        %v4276 = vadd.f32 %v4163, %v4275
        %v4277 = vpop.f32.mrb[0].mxu0
        %v4278 = vadd.f32 %v4165, %v4277
        %4279 = vmatprep.mubr.bf16.mxu0 %v2053
        %4280 = vmatmul.mubr.bf16.gmra.mrb[0].mxu0 %v2052
        %v4281 = vpop.f32.mrb[0].mxu0
        %v4282 = vadd.f32 %v4169, %v4281
        %v4283 = vpop.f32.mrb[0].mxu0
        %v4284 = vadd.f32 %v4171, %v4283
        %v4285 = vpop.f32.mrb[0].mxu0
        %v4286 = vadd.f32 %v4173, %v4285
        %v4287 = vpop.f32.mrb[0].mxu0
        %v4288 = vadd.f32 %v4175, %v4287
        %4289 = vmatprep.mubr.bf16.mxu0 %v2061
        %4290 = vmatmul.mubr.bf16.gmra.mrb[0].mxu0 %v2060
        %v4291 = vpop.f32.mrb[0].mxu0
        %v4292 = vadd.f32 %v4179, %v4291
        %v4293 = vpop.f32.mrb[0].mxu0
        %v4294 = vadd.f32 %v4181, %v4293
        %v4295 = vpop.f32.mrb[0].mxu0
        %v4296 = vadd.f32 %v4183, %v4295
        %v4297 = vpop.f32.mrb[0].mxu0
        %v4298 = vadd.f32 %v4185, %v4297
        %4299 = vmatprep.mubr.bf16.mxu0 %v2069
        %4300 = vmatmul.mubr.bf16.gmra.mrb[0].mxu0 %v2068
        %v4301 = vpop.f32.mrb[0].mxu0
        %v4302 = vadd.f32 %v4189, %v4301
        %v4303 = vpop.f32.mrb[0].mxu0
        %v4304 = vadd.f32 %v4191, %v4303
        %v4305 = vpop.f32.mrb[0].mxu0
        %v4306 = vadd.f32 %v4193, %v4305
        %v4307 = vpop.f32.mrb[0].mxu0
        %v4308 = vadd.f32 %v4195, %v4307
        %4309 = vdwg.mxu0
        %4310 = vmatprep.subr.bf16.mxu0 %v3251
        %4311 = vmatpush1.bf16.msra.mxu0 %v3250
        %4312 = vmatprep.subr.bf16.mxu0 %v3255
        %4313 = vmatpush1.bf16.msra.mxu0 %v3254
        %4314 = vmatprep.subr.bf16.mxu0 %v3259
        %4315 = vmatpush1.bf16.msra.mxu0 %v3258
        %4316 = vmatprep.subr.bf16.mxu0 %v3263
        %4317 = vmatpush1.bf16.msra.mxu0 %v3262
        %4318 = vmatprep.subr.bf16.mxu0 %v3267
        %4319 = vmatpush1.bf16.msra.mxu0 %v3266
        %4320 = vmatprep.subr.bf16.mxu0 %v3271
        %4321 = vmatpush1.bf16.msra.mxu0 %v3270
        %4322 = vmatprep.subr.bf16.mxu0 %v3275
        %4323 = vmatpush1.bf16.msra.mxu0 %v3274
        %4324 = vmatprep.subr.bf16.mxu0 %v3279
        %4325 = vmatpush1.bf16.msra.mxu0 %v3278
        %4326 = vmatprep.subr.bf16.mxu0 %v3283
        %4327 = vmatpush1.bf16.msra.mxu0 %v3282
        %4328 = vmatprep.subr.bf16.mxu0 %v3287
        %4329 = vmatpush1.bf16.msra.mxu0 %v3286
        %4330 = vmatprep.subr.bf16.mxu0 %v3291
        %4331 = vmatpush1.bf16.msra.mxu0 %v3290
        %4332 = vmatprep.subr.bf16.mxu0 %v3295
        %4333 = vmatpush1.bf16.msra.mxu0 %v3294
        %4334 = vmatprep.subr.bf16.mxu0 %v3299
        %4335 = vmatpush1.bf16.msra.mxu0 %v3298
        %4336 = vmatprep.subr.bf16.mxu0 %v3303
        %4337 = vmatpush1.bf16.msra.mxu0 %v3302
        %4338 = vmatprep.subr.bf16.mxu0 %v3307
        %4339 = vmatpush1.bf16.msra.mxu0 %v3306
        %4340 = vmatprep.subr.bf16.mxu0 %v3311
        %4341 = vmatpush1.bf16.msra.mxu0 %v3310
        %4342 = vmatprep.mubr.bf16.mxu0 %v2015
        %4343 = vmatmul.mubr.bf16.gmra.mrb[0].mxu0 %v2014
        %v4344 = vpop.f32.mrb[0].mxu0
        %v4345 = vadd.f32 %v4232, %v4344
        %v4346 = vpop.f32.mrb[0].mxu0
        %v4347 = vadd.f32 %v4234, %v4346
        %v4348 = vpop.f32.mrb[0].mxu0
        %v4349 = vadd.f32 %v4236, %v4348
        %v4350 = vpop.f32.mrb[0].mxu0
        %v4351 = vadd.f32 %v4238, %v4350
        %4352 = vmatprep.mubr.bf16.mxu0 %v2023
        %4353 = vmatmul.mubr.bf16.gmra.mrb[0].mxu0 %v2022
        %v4354 = vpop.f32.mrb[0].mxu0
        %v4355 = vadd.f32 %v4242, %v4354
        %v4356 = vpop.f32.mrb[0].mxu0
        %v4357 = vadd.f32 %v4244, %v4356
        %v4358 = vpop.f32.mrb[0].mxu0
        %v4359 = vadd.f32 %v4246, %v4358
        %v4360 = vpop.f32.mrb[0].mxu0
        %v4361 = vadd.f32 %v4248, %v4360
        %4362 = vmatprep.mubr.bf16.mxu0 %v2031
        %4363 = vmatmul.mubr.bf16.gmra.mrb[0].mxu0 %v2030
        %v4364 = vpop.f32.mrb[0].mxu0
        %v4365 = vadd.f32 %v4252, %v4364
        %v4366 = vpop.f32.mrb[0].mxu0
        %v4367 = vadd.f32 %v4254, %v4366
        %v4368 = vpop.f32.mrb[0].mxu0
        %v4369 = vadd.f32 %v4256, %v4368
        %v4370 = vpop.f32.mrb[0].mxu0
        %v4371 = vadd.f32 %v4258, %v4370
        %4372 = vmatprep.mubr.bf16.mxu0 %v2039
        %4373 = vmatmul.mubr.bf16.gmra.mrb[0].mxu0 %v2038
        %v4374 = vpop.f32.mrb[0].mxu0
        %v4375 = vadd.f32 %v4262, %v4374
        %v4376 = vpop.f32.mrb[0].mxu0
        %v4377 = vadd.f32 %v4264, %v4376
        %v4378 = vpop.f32.mrb[0].mxu0
        %v4379 = vadd.f32 %v4266, %v4378
        %v4380 = vpop.f32.mrb[0].mxu0
        %v4381 = vadd.f32 %v4268, %v4380
        %4382 = vmatprep.mubr.bf16.mxu0 %v2047
        %4383 = vmatmul.mubr.bf16.gmra.mrb[0].mxu0 %v2046
        %v4384 = vpop.f32.mrb[0].mxu0
        %v4385 = vadd.f32 %v4272, %v4384
        %v4386 = vpop.f32.mrb[0].mxu0
        %v4387 = vadd.f32 %v4274, %v4386
        %v4388 = vpop.f32.mrb[0].mxu0
        %v4389 = vadd.f32 %v4276, %v4388
        %v4390 = vpop.f32.mrb[0].mxu0
        %v4391 = vadd.f32 %v4278, %v4390
        %4392 = vmatprep.mubr.bf16.mxu0 %v2055
        %4393 = vmatmul.mubr.bf16.gmra.mrb[0].mxu0 %v2054
        %v4394 = vpop.f32.mrb[0].mxu0
        %v4395 = vadd.f32 %v4282, %v4394
        %v4396 = vpop.f32.mrb[0].mxu0
        %v4397 = vadd.f32 %v4284, %v4396
        %v4398 = vpop.f32.mrb[0].mxu0
        %v4399 = vadd.f32 %v4286, %v4398
        %v4400 = vpop.f32.mrb[0].mxu0
        %v4401 = vadd.f32 %v4288, %v4400
        %4402 = vmatprep.mubr.bf16.mxu0 %v2063
        %4403 = vmatmul.mubr.bf16.gmra.mrb[0].mxu0 %v2062
        %v4404 = vpop.f32.mrb[0].mxu0
        %v4405 = vadd.f32 %v4292, %v4404
        %v4406 = vpop.f32.mrb[0].mxu0
        %v4407 = vadd.f32 %v4294, %v4406
        %v4408 = vpop.f32.mrb[0].mxu0
        %v4409 = vadd.f32 %v4296, %v4408
        %v4410 = vpop.f32.mrb[0].mxu0
        %v4411 = vadd.f32 %v4298, %v4410
        %4412 = vmatprep.mubr.bf16.mxu0 %v2071
        %4413 = vmatmul.mubr.bf16.gmra.mrb[0].mxu0 %v2070
        %v4414 = vpop.f32.mrb[0].mxu0
        %v4415 = vadd.f32 %v4302, %v4414
        %v4416 = vpop.f32.mrb[0].mxu0
        %v4417 = vadd.f32 %v4304, %v4416
        %v4418 = vpop.f32.mrb[0].mxu0
        %v4419 = vadd.f32 %v4306, %v4418
        %v4420 = vpop.f32.mrb[0].mxu0
        %v4421 = vadd.f32 %v4308, %v4420
        %4422 = vdwg.mxu0
        %4423 = vmatprep.subr.bf16.mxu0 %v3315
        %4424 = vmatpush1.bf16.msra.mxu0 %v3314
        %4425 = vmatprep.subr.bf16.mxu0 %v3319
        %4426 = vmatpush1.bf16.msra.mxu0 %v3318
        %4427 = vmatprep.subr.bf16.mxu0 %v3323
        %4428 = vmatpush1.bf16.msra.mxu0 %v3322
        %4429 = vmatprep.subr.bf16.mxu0 %v3327
        %4430 = vmatpush1.bf16.msra.mxu0 %v3326
        %4431 = vmatprep.subr.bf16.mxu0 %v3331
        %4432 = vmatpush1.bf16.msra.mxu0 %v3330
        %4433 = vmatprep.subr.bf16.mxu0 %v3335
        %4434 = vmatpush1.bf16.msra.mxu0 %v3334
        %4435 = vmatprep.subr.bf16.mxu0 %v3339
        %4436 = vmatpush1.bf16.msra.mxu0 %v3338
        %4437 = vmatprep.subr.bf16.mxu0 %v3343
        %4438 = vmatpush1.bf16.msra.mxu0 %v3342
        %4439 = vmatprep.subr.bf16.mxu0 %v3347
        %4440 = vmatpush1.bf16.msra.mxu0 %v3346
        %4441 = vmatprep.subr.bf16.mxu0 %v3351
        %4442 = vmatpush1.bf16.msra.mxu0 %v3350
        %4443 = vmatprep.subr.bf16.mxu0 %v3355
        %4444 = vmatpush1.bf16.msra.mxu0 %v3354
        %4445 = vmatprep.subr.bf16.mxu0 %v3359
        %4446 = vmatpush1.bf16.msra.mxu0 %v3358
        %4447 = vmatprep.subr.bf16.mxu0 %v3363
        %4448 = vmatpush1.bf16.msra.mxu0 %v3362
        %4449 = vmatprep.subr.bf16.mxu0 %v3367
        %4450 = vmatpush1.bf16.msra.mxu0 %v3366
        %4451 = vmatprep.subr.bf16.mxu0 %v3371
        %4452 = vmatpush1.bf16.msra.mxu0 %v3370
        %4453 = vmatprep.subr.bf16.mxu0 %v3375
        %4454 = vmatpush1.bf16.msra.mxu0 %v3374
        %4455 = vmatprep.mubr.bf16.mxu0 %v2017
        %4456 = vmatmul.mubr.bf16.gmra.mrb[0].mxu0 %v2016
        %v4457 = vpop.f32.mrb[0].mxu0
        %v4458 = vadd.f32 %v4345, %v4457
        %v4459 = vpop.f32.mrb[0].mxu0
        %v4460 = vadd.f32 %v4347, %v4459
        %v4461 = vpop.f32.mrb[0].mxu0
        %v4462 = vadd.f32 %v4349, %v4461
        %v4463 = vpop.f32.mrb[0].mxu0
        %v4464 = vadd.f32 %v4351, %v4463
        %4465 = vmatprep.mubr.bf16.mxu0 %v2025
        %4466 = vmatmul.mubr.bf16.gmra.mrb[0].mxu0 %v2024
        %v4467 = vpop.f32.mrb[0].mxu0
        %v4468 = vadd.f32 %v4355, %v4467
        %v4469 = vpop.f32.mrb[0].mxu0
        %v4470 = vadd.f32 %v4357, %v4469
        %v4471 = vpop.f32.mrb[0].mxu0
        %v4472 = vadd.f32 %v4359, %v4471
        %v4473 = vpop.f32.mrb[0].mxu0
        %v4474 = vadd.f32 %v4361, %v4473
        %4475 = vmatprep.mubr.bf16.mxu0 %v2033
        %4476 = vmatmul.mubr.bf16.gmra.mrb[0].mxu0 %v2032
        %v4477 = vpop.f32.mrb[0].mxu0
        %v4478 = vadd.f32 %v4365, %v4477
        %v4479 = vpop.f32.mrb[0].mxu0
        %v4480 = vadd.f32 %v4367, %v4479
        %v4481 = vpop.f32.mrb[0].mxu0
        %v4482 = vadd.f32 %v4369, %v4481
        %v4483 = vpop.f32.mrb[0].mxu0
        %v4484 = vadd.f32 %v4371, %v4483
        %4485 = vmatprep.mubr.bf16.mxu0 %v2041
        %4486 = vmatmul.mubr.bf16.gmra.mrb[0].mxu0 %v2040
        %v4487 = vpop.f32.mrb[0].mxu0
        %v4488 = vadd.f32 %v4375, %v4487
        %v4489 = vpop.f32.mrb[0].mxu0
        %v4490 = vadd.f32 %v4377, %v4489
        %v4491 = vpop.f32.mrb[0].mxu0
        %v4492 = vadd.f32 %v4379, %v4491
        %v4493 = vpop.f32.mrb[0].mxu0
        %v4494 = vadd.f32 %v4381, %v4493
        %4495 = vmatprep.mubr.bf16.mxu0 %v2049
        %4496 = vmatmul.mubr.bf16.gmra.mrb[0].mxu0 %v2048
        %v4497 = vpop.f32.mrb[0].mxu0
        %v4498 = vadd.f32 %v4385, %v4497
        %v4499 = vpop.f32.mrb[0].mxu0
        %v4500 = vadd.f32 %v4387, %v4499
        %v4501 = vpop.f32.mrb[0].mxu0
        %v4502 = vadd.f32 %v4389, %v4501
        %v4503 = vpop.f32.mrb[0].mxu0
        %v4504 = vadd.f32 %v4391, %v4503
        %4505 = vmatprep.mubr.bf16.mxu0 %v2057
        %4506 = vmatmul.mubr.bf16.gmra.mrb[0].mxu0 %v2056
        %v4507 = vpop.f32.mrb[0].mxu0
        %v4508 = vadd.f32 %v4395, %v4507
        %v4509 = vpop.f32.mrb[0].mxu0
        %v4510 = vadd.f32 %v4397, %v4509
        %v4511 = vpop.f32.mrb[0].mxu0
        %v4512 = vadd.f32 %v4399, %v4511
        %v4513 = vpop.f32.mrb[0].mxu0
        %v4514 = vadd.f32 %v4401, %v4513
        %4515 = vmatprep.mubr.bf16.mxu0 %v2065
        %4516 = vmatmul.mubr.bf16.gmra.mrb[0].mxu0 %v2064
        %v4517 = vpop.f32.mrb[0].mxu0
        %v4518 = vadd.f32 %v4405, %v4517
        %v4519 = vpop.f32.mrb[0].mxu0
        %v4520 = vadd.f32 %v4407, %v4519
        %v4521 = vpop.f32.mrb[0].mxu0
        %v4522 = vadd.f32 %v4409, %v4521
        %v4523 = vpop.f32.mrb[0].mxu0
        %v4524 = vadd.f32 %v4411, %v4523
        %4525 = vmatprep.mubr.bf16.mxu0 %v2073
        %4526 = vmatmul.mubr.bf16.gmra.mrb[0].mxu0 %v2072
        %v4527 = vpop.f32.mrb[0].mxu0
        %v4528 = vadd.f32 %v4415, %v4527
        %v4529 = vpop.f32.mrb[0].mxu0
        %v4530 = vadd.f32 %v4417, %v4529
        %v4531 = vpop.f32.mrb[0].mxu0
        %v4532 = vadd.f32 %v4419, %v4531
        %v4533 = vpop.f32.mrb[0].mxu0
        %v4534 = vadd.f32 %v4421, %v4533
        %4535 = vdwg.mxu0
        %v4536 = vmax.f32 %v4006, 0.0
        %v4537 = vmax.f32 %v4008, 0.0
        %v4538 = vmax.f32 %v4458, 0.0
        %v4539 = vmax.f32 %v4460, 0.0
        %v4540 = vmax.f32 %v4010, 0.0
        %v4541 = vmax.f32 %v4012, 0.0
        %v4542 = vmax.f32 %v4462, 0.0
        %v4543 = vmax.f32 %v4464, 0.0
        %v4544 = vmax.f32 %v4016, 0.0
        %v4545 = vmax.f32 %v4018, 0.0
        %v4546 = vmax.f32 %v4468, 0.0
        %v4547 = vmax.f32 %v4470, 0.0
        %v4548 = vmax.f32 %v4020, 0.0
        %v4549 = vmax.f32 %v4022, 0.0
        %v4550 = vmax.f32 %v4472, 0.0
        %v4551 = vmax.f32 %v4474, 0.0
        %v4552 = vmax.f32 %v4026, 0.0
        %v4553 = vmax.f32 %v4028, 0.0
        %v4554 = vmax.f32 %v4478, 0.0
        %v4555 = vmax.f32 %v4480, 0.0
        %v4556 = vmax.f32 %v4030, 0.0
        %v4557 = vmax.f32 %v4032, 0.0
        %v4558 = vmax.f32 %v4482, 0.0
        %v4559 = vmax.f32 %v4484, 0.0
        %v4560 = vmax.f32 %v4036, 0.0
        %v4561 = vmax.f32 %v4038, 0.0
        %v4562 = vmax.f32 %v4488, 0.0
        %v4563 = vmax.f32 %v4490, 0.0
        %v4564 = vmax.f32 %v4040, 0.0
        %v4565 = vmax.f32 %v4042, 0.0
        %v4566 = vmax.f32 %v4492, 0.0
        %v4567 = vmax.f32 %v4494, 0.0
        %v4568 = vmax.f32 %v4046, 0.0
        %v4569 = vmax.f32 %v4048, 0.0
        %v4570 = vmax.f32 %v4498, 0.0
        %v4571 = vmax.f32 %v4500, 0.0
        %v4572 = vmax.f32 %v4050, 0.0
        %v4573 = vmax.f32 %v4052, 0.0
        %v4574 = vmax.f32 %v4502, 0.0
        %v4575 = vmax.f32 %v4504, 0.0
        %v4576 = vmax.f32 %v4056, 0.0
        %v4577 = vmax.f32 %v4058, 0.0
        %v4578 = vmax.f32 %v4508, 0.0
        %v4579 = vmax.f32 %v4510, 0.0
        %v4580 = vmax.f32 %v4060, 0.0
        %v4581 = vmax.f32 %v4062, 0.0
        %v4582 = vmax.f32 %v4512, 0.0
        %v4583 = vmax.f32 %v4514, 0.0
        %v4584 = vmax.f32 %v4066, 0.0
        %v4585 = vmax.f32 %v4068, 0.0
        %v4586 = vmax.f32 %v4518, 0.0
        %v4587 = vmax.f32 %v4520, 0.0
        %v4588 = vmax.f32 %v4070, 0.0
        %v4589 = vmax.f32 %v4072, 0.0
        %v4590 = vmax.f32 %v4522, 0.0
        %v4591 = vmax.f32 %v4524, 0.0
        %v4592 = vmax.f32 %v4076, 0.0
        %v4593 = vmax.f32 %v4078, 0.0
        %v4594 = vmax.f32 %v4528, 0.0
        %v4595 = vmax.f32 %v4530, 0.0
        %v4596 = vmax.f32 %v4080, 0.0
        %v4597 = vmax.f32 %v4082, 0.0
        %v4598 = vmax.f32 %v4532, 0.0
        %v4599 = vmax.f32 %v4534, 0.0
        %v4600 = vpack.c.bf16 %v4540, %v4536
        %v4601 = vpack.c.bf16 %v4541, %v4537
        %v4602 = vpack.c.bf16 %v4542, %v4538
        %v4603 = vpack.c.bf16 %v4543, %v4539
        %v4604 = vpack.c.bf16 %v4548, %v4544
        %v4605 = vpack.c.bf16 %v4549, %v4545
        %v4606 = vpack.c.bf16 %v4550, %v4546
        %v4607 = vpack.c.bf16 %v4551, %v4547
        %v4608 = vpack.c.bf16 %v4556, %v4552
        %v4609 = vpack.c.bf16 %v4557, %v4553
        %v4610 = vpack.c.bf16 %v4558, %v4554
        %v4611 = vpack.c.bf16 %v4559, %v4555
        %v4612 = vpack.c.bf16 %v4564, %v4560
        %v4613 = vpack.c.bf16 %v4565, %v4561
        %v4614 = vpack.c.bf16 %v4566, %v4562
        %v4615 = vpack.c.bf16 %v4567, %v4563
        %v4616 = vpack.c.bf16 %v4572, %v4568
        %v4617 = vpack.c.bf16 %v4573, %v4569
        %v4618 = vpack.c.bf16 %v4574, %v4570
        %v4619 = vpack.c.bf16 %v4575, %v4571
        %v4620 = vpack.c.bf16 %v4580, %v4576
        %v4621 = vpack.c.bf16 %v4581, %v4577
        %v4622 = vpack.c.bf16 %v4582, %v4578
        %v4623 = vpack.c.bf16 %v4583, %v4579
        %v4624 = vpack.c.bf16 %v4588, %v4584
        %v4625 = vpack.c.bf16 %v4589, %v4585
        %v4626 = vpack.c.bf16 %v4590, %v4586
        %v4627 = vpack.c.bf16 %v4591, %v4587
        %v4628 = vpack.c.bf16 %v4596, %v4592
        %v4629 = vpack.c.bf16 %v4597, %v4593
        %v4630 = vpack.c.bf16 %v4598, %v4594
        %v4631 = vpack.c.bf16 %v4599, %v4595
        %v4632 = vld [vmem:[%s6] sm:$0xff]
        %v4633 = vld [vmem:[%s6 + $0x8] sm:$0xff]
        %v4634 = vld [vmem:[%s6 + $0x10] sm:$0xff]
        %v4635 = vld [vmem:[%s6 + $0x18] sm:$0xff]
        %v4636 = vld [vmem:[%s6 + $0x20] sm:$0xff]
        %v4637 = vld [vmem:[%s6 + $0x28] sm:$0xff]
        %v4638 = vld [vmem:[%s6 + $0x30] sm:$0xff]
        %v4639 = vld [vmem:[%s6 + $0x38] sm:$0xff]
        %v4640 = vld [vmem:[%s6 + $0x40] sm:$0xff]
        %v4641 = vld [vmem:[%s6 + $0x48] sm:$0xff]
        %v4642 = vld [vmem:[%s6 + $0x50] sm:$0xff]
        %v4643 = vld [vmem:[%s6 + $0x58] sm:$0xff]
        %v4644 = vld [vmem:[%s6 + $0x60] sm:$0xff]
        %v4645 = vld [vmem:[%s6 + $0x68] sm:$0xff]
        %v4646 = vld [vmem:[%s6 + $0x70] sm:$0xff]
        %v4647 = vld [vmem:[%s6 + $0x78] sm:$0xff]
        %v4648 = vld [vmem:[%s6 + $0x80] sm:$0xff]
        %v4649 = vld [vmem:[%s6 + $0x88] sm:$0xff]
        %v4650 = vld [vmem:[%s6 + $0x90] sm:$0xff]
        %v4651 = vld [vmem:[%s6 + $0x98] sm:$0xff]
        %v4652 = vld [vmem:[%s6 + $0xa0] sm:$0xff]
        %v4653 = vld [vmem:[%s6 + $0xa8] sm:$0xff]
        %v4654 = vld [vmem:[%s6 + $0xb0] sm:$0xff]
        %v4655 = vld [vmem:[%s6 + $0xb8] sm:$0xff]
        %v4656 = vld [vmem:[%s6 + $0xc0] sm:$0xff]
        %v4657 = vld [vmem:[%s6 + $0xc8] sm:$0xff]
        %v4658 = vld [vmem:[%s6 + $0xd0] sm:$0xff]
        %v4659 = vld [vmem:[%s6 + $0xd8] sm:$0xff]
        %v4660 = vld [vmem:[%s6 + $0xe0] sm:$0xff]
        %v4661 = vld [vmem:[%s6 + $0xe8] sm:$0xff]
        %v4662 = vld [vmem:[%s6 + $0xf0] sm:$0xff]
        %v4663 = vld [vmem:[%s6 + $0xf8] sm:$0xff]
        %v4664 = vld [vmem:[%s6 + $0x100] sm:$0xff]
        %v4665 = vld [vmem:[%s6 + $0x108] sm:$0xff]
        %v4666 = vld [vmem:[%s6 + $0x110] sm:$0xff]
        %v4667 = vld [vmem:[%s6 + $0x118] sm:$0xff]
        %v4668 = vld [vmem:[%s6 + $0x120] sm:$0xff]
        %v4669 = vld [vmem:[%s6 + $0x128] sm:$0xff]
        %v4670 = vld [vmem:[%s6 + $0x130] sm:$0xff]
        %v4671 = vld [vmem:[%s6 + $0x138] sm:$0xff]
        %v4672 = vld [vmem:[%s6 + $0x140] sm:$0xff]
        %v4673 = vld [vmem:[%s6 + $0x148] sm:$0xff]
        %v4674 = vld [vmem:[%s6 + $0x150] sm:$0xff]
        %v4675 = vld [vmem:[%s6 + $0x158] sm:$0xff]
        %v4676 = vld [vmem:[%s6 + $0x160] sm:$0xff]
        %v4677 = vld [vmem:[%s6 + $0x168] sm:$0xff]
        %v4678 = vld [vmem:[%s6 + $0x170] sm:$0xff]
        %v4679 = vld [vmem:[%s6 + $0x178] sm:$0xff]
        %v4680 = vld [vmem:[%s6 + $0x180] sm:$0xff]
        %v4681 = vld [vmem:[%s6 + $0x188] sm:$0xff]
        %v4682 = vld [vmem:[%s6 + $0x190] sm:$0xff]
        %v4683 = vld [vmem:[%s6 + $0x198] sm:$0xff]
        %v4684 = vld [vmem:[%s6 + $0x1a0] sm:$0xff]
        %v4685 = vld [vmem:[%s6 + $0x1a8] sm:$0xff]
        %v4686 = vld [vmem:[%s6 + $0x1b0] sm:$0xff]
        %v4687 = vld [vmem:[%s6 + $0x1b8] sm:$0xff]
        %v4688 = vld [vmem:[%s6 + $0x1c0] sm:$0xff]
        %v4689 = vld [vmem:[%s6 + $0x1c8] sm:$0xff]
        %v4690 = vld [vmem:[%s6 + $0x1d0] sm:$0xff]
        %v4691 = vld [vmem:[%s6 + $0x1d8] sm:$0xff]
        %v4692 = vld [vmem:[%s6 + $0x1e0] sm:$0xff]
        %v4693 = vld [vmem:[%s6 + $0x1e8] sm:$0xff]
        %v4694 = vld [vmem:[%s6 + $0x1f0] sm:$0xff]
        %v4695 = vld [vmem:[%s6 + $0x1f8] sm:$0xff]
        %v4696 = vld [vmem:[%s7] sm:$0x3]
        %v4698 = vlaneseq
        %v4699 = vshrl.u32 %v4698, 7
        %v4700 = vsub.s32 0, %v4699
        %v4701 = vrot.slane %v4696, %v4700
        %v4702 = vlaneseq
        %v4703 = vshrl.u32 %v4702, 7
        %v4704 = vsub.s32 1, %v4703
        %v4705 = vrot.slane %v4696, %v4704
        %v4772 = vunpack.c.l.b16 %v4632
        %v4773 = vunpack.c.h.b16 %v4632
        %v4774 = vunpack.c.l.b16 %v4633
        %v4775 = vunpack.c.h.b16 %v4633
        %v4776 = vunpack.c.l.b16 %v4634
        %v4777 = vunpack.c.h.b16 %v4634
        %v4778 = vunpack.c.l.b16 %v4635
        %v4779 = vunpack.c.h.b16 %v4635
        %v4780 = vunpack.c.l.b16 %v4636
        %v4781 = vunpack.c.h.b16 %v4636
        %v4782 = vunpack.c.l.b16 %v4637
        %v4783 = vunpack.c.h.b16 %v4637
        %v4784 = vunpack.c.l.b16 %v4638
        %v4785 = vunpack.c.h.b16 %v4638
        %v4786 = vunpack.c.l.b16 %v4639
        %v4787 = vunpack.c.h.b16 %v4639
        %v4788 = vunpack.c.l.b16 %v4640
        %v4789 = vunpack.c.h.b16 %v4640
        %v4790 = vunpack.c.l.b16 %v4641
        %v4791 = vunpack.c.h.b16 %v4641
        %v4792 = vunpack.c.l.b16 %v4642
        %v4793 = vunpack.c.h.b16 %v4642
        %v4794 = vunpack.c.l.b16 %v4643
        %v4795 = vunpack.c.h.b16 %v4643
        %v4796 = vunpack.c.l.b16 %v4644
        %v4797 = vunpack.c.h.b16 %v4644
        %v4798 = vunpack.c.l.b16 %v4645
        %v4799 = vunpack.c.h.b16 %v4645
        %v4800 = vunpack.c.l.b16 %v4646
        %v4801 = vunpack.c.h.b16 %v4646
        %v4802 = vunpack.c.l.b16 %v4647
        %v4803 = vunpack.c.h.b16 %v4647
        %v4804 = vunpack.c.l.b16 %v4648
        %v4805 = vunpack.c.h.b16 %v4648
        %v4806 = vunpack.c.l.b16 %v4649
        %v4807 = vunpack.c.h.b16 %v4649
        %v4808 = vunpack.c.l.b16 %v4650
        %v4809 = vunpack.c.h.b16 %v4650
        %v4810 = vunpack.c.l.b16 %v4651
        %v4811 = vunpack.c.h.b16 %v4651
        %v4812 = vunpack.c.l.b16 %v4652
        %v4813 = vunpack.c.h.b16 %v4652
        %v4814 = vunpack.c.l.b16 %v4653
        %v4815 = vunpack.c.h.b16 %v4653
        %v4816 = vunpack.c.l.b16 %v4654
        %v4817 = vunpack.c.h.b16 %v4654
        %v4818 = vunpack.c.l.b16 %v4655
        %v4819 = vunpack.c.h.b16 %v4655
        %v4820 = vunpack.c.l.b16 %v4656
        %v4821 = vunpack.c.h.b16 %v4656
        %v4822 = vunpack.c.l.b16 %v4657
        %v4823 = vunpack.c.h.b16 %v4657
        %v4824 = vunpack.c.l.b16 %v4658
        %v4825 = vunpack.c.h.b16 %v4658
        %v4826 = vunpack.c.l.b16 %v4659
        %v4827 = vunpack.c.h.b16 %v4659
        %v4828 = vunpack.c.l.b16 %v4660
        %v4829 = vunpack.c.h.b16 %v4660
        %v4830 = vunpack.c.l.b16 %v4661
        %v4831 = vunpack.c.h.b16 %v4661
        %v4832 = vunpack.c.l.b16 %v4662
        %v4833 = vunpack.c.h.b16 %v4662
        %v4834 = vunpack.c.l.b16 %v4663
        %v4835 = vunpack.c.h.b16 %v4663
        %v4836 = vunpack.c.l.b16 %v4664
        %v4837 = vunpack.c.h.b16 %v4664
        %v4838 = vunpack.c.l.b16 %v4665
        %v4839 = vunpack.c.h.b16 %v4665
        %v4840 = vunpack.c.l.b16 %v4666
        %v4841 = vunpack.c.h.b16 %v4666
        %v4842 = vunpack.c.l.b16 %v4667
        %v4843 = vunpack.c.h.b16 %v4667
        %v4844 = vunpack.c.l.b16 %v4668
        %v4845 = vunpack.c.h.b16 %v4668
        %v4846 = vunpack.c.l.b16 %v4669
        %v4847 = vunpack.c.h.b16 %v4669
        %v4848 = vunpack.c.l.b16 %v4670
        %v4849 = vunpack.c.h.b16 %v4670
        %v4850 = vunpack.c.l.b16 %v4671
        %v4851 = vunpack.c.h.b16 %v4671
        %v4852 = vunpack.c.l.b16 %v4672
        %v4853 = vunpack.c.h.b16 %v4672
        %v4854 = vunpack.c.l.b16 %v4673
        %v4855 = vunpack.c.h.b16 %v4673
        %v4856 = vunpack.c.l.b16 %v4674
        %v4857 = vunpack.c.h.b16 %v4674
        %v4858 = vunpack.c.l.b16 %v4675
        %v4859 = vunpack.c.h.b16 %v4675
        %v4860 = vunpack.c.l.b16 %v4676
        %v4861 = vunpack.c.h.b16 %v4676
        %v4862 = vunpack.c.l.b16 %v4677
        %v4863 = vunpack.c.h.b16 %v4677
        %v4864 = vunpack.c.l.b16 %v4678
        %v4865 = vunpack.c.h.b16 %v4678
        %v4866 = vunpack.c.l.b16 %v4679
        %v4867 = vunpack.c.h.b16 %v4679
        %v4868 = vunpack.c.l.b16 %v4680
        %v4869 = vunpack.c.h.b16 %v4680
        %v4870 = vunpack.c.l.b16 %v4681
        %v4871 = vunpack.c.h.b16 %v4681
        %v4872 = vunpack.c.l.b16 %v4682
        %v4873 = vunpack.c.h.b16 %v4682
        %v4874 = vunpack.c.l.b16 %v4683
        %v4875 = vunpack.c.h.b16 %v4683
        %v4876 = vunpack.c.l.b16 %v4684
        %v4877 = vunpack.c.h.b16 %v4684
        %v4878 = vunpack.c.l.b16 %v4685
        %v4879 = vunpack.c.h.b16 %v4685
        %v4880 = vunpack.c.l.b16 %v4686
        %v4881 = vunpack.c.h.b16 %v4686
        %v4882 = vunpack.c.l.b16 %v4687
        %v4883 = vunpack.c.h.b16 %v4687
        %v4884 = vunpack.c.l.b16 %v4688
        %v4885 = vunpack.c.h.b16 %v4688
        %v4886 = vunpack.c.l.b16 %v4689
        %v4887 = vunpack.c.h.b16 %v4689
        %v4888 = vunpack.c.l.b16 %v4690
        %v4889 = vunpack.c.h.b16 %v4690
        %v4890 = vunpack.c.l.b16 %v4691
        %v4891 = vunpack.c.h.b16 %v4691
        %v4892 = vunpack.c.l.b16 %v4692
        %v4893 = vunpack.c.h.b16 %v4692
        %v4894 = vunpack.c.l.b16 %v4693
        %v4895 = vunpack.c.h.b16 %v4693
        %v4896 = vunpack.c.l.b16 %v4694
        %v4897 = vunpack.c.h.b16 %v4694
        %v4898 = vunpack.c.l.b16 %v4695
        %v4899 = vunpack.c.h.b16 %v4695
        %v4900 = vpack.c.b16 %v4774, %v4772
        %v4901 = vpack.c.b16 %v4775, %v4773
        %v4902 = vpack.c.b16 %v4778, %v4776
        %v4903 = vpack.c.b16 %v4779, %v4777
        %v4904 = vpack.c.b16 %v4782, %v4780
        %v4905 = vpack.c.b16 %v4783, %v4781
        %v4906 = vpack.c.b16 %v4786, %v4784
        %v4907 = vpack.c.b16 %v4787, %v4785
        %v4908 = vpack.c.b16 %v4790, %v4788
        %v4909 = vpack.c.b16 %v4791, %v4789
        %v4910 = vpack.c.b16 %v4794, %v4792
        %v4911 = vpack.c.b16 %v4795, %v4793
        %v4912 = vpack.c.b16 %v4798, %v4796
        %v4913 = vpack.c.b16 %v4799, %v4797
        %v4914 = vpack.c.b16 %v4802, %v4800
        %v4915 = vpack.c.b16 %v4803, %v4801
        %v4916 = vpack.c.b16 %v4806, %v4804
        %v4917 = vpack.c.b16 %v4807, %v4805
        %v4918 = vpack.c.b16 %v4810, %v4808
        %v4919 = vpack.c.b16 %v4811, %v4809
        %v4920 = vpack.c.b16 %v4814, %v4812
        %v4921 = vpack.c.b16 %v4815, %v4813
        %v4922 = vpack.c.b16 %v4818, %v4816
        %v4923 = vpack.c.b16 %v4819, %v4817
        %v4924 = vpack.c.b16 %v4822, %v4820
        %v4925 = vpack.c.b16 %v4823, %v4821
        %v4926 = vpack.c.b16 %v4826, %v4824
        %v4927 = vpack.c.b16 %v4827, %v4825
        %v4928 = vpack.c.b16 %v4830, %v4828
        %v4929 = vpack.c.b16 %v4831, %v4829
        %v4930 = vpack.c.b16 %v4834, %v4832
        %v4931 = vpack.c.b16 %v4835, %v4833
        %v4932 = vpack.c.b16 %v4838, %v4836
        %v4933 = vpack.c.b16 %v4839, %v4837
        %v4934 = vpack.c.b16 %v4842, %v4840
        %v4935 = vpack.c.b16 %v4843, %v4841
        %v4936 = vpack.c.b16 %v4846, %v4844
        %v4937 = vpack.c.b16 %v4847, %v4845
        %v4938 = vpack.c.b16 %v4850, %v4848
        %v4939 = vpack.c.b16 %v4851, %v4849
        %v4940 = vpack.c.b16 %v4854, %v4852
        %v4941 = vpack.c.b16 %v4855, %v4853
        %v4942 = vpack.c.b16 %v4858, %v4856
        %v4943 = vpack.c.b16 %v4859, %v4857
        %v4944 = vpack.c.b16 %v4862, %v4860
        %v4945 = vpack.c.b16 %v4863, %v4861
        %v4946 = vpack.c.b16 %v4866, %v4864
        %v4947 = vpack.c.b16 %v4867, %v4865
        %v4948 = vpack.c.b16 %v4870, %v4868
        %v4949 = vpack.c.b16 %v4871, %v4869
        %v4950 = vpack.c.b16 %v4874, %v4872
        %v4951 = vpack.c.b16 %v4875, %v4873
        %v4952 = vpack.c.b16 %v4878, %v4876
        %v4953 = vpack.c.b16 %v4879, %v4877
        %v4954 = vpack.c.b16 %v4882, %v4880
        %v4955 = vpack.c.b16 %v4883, %v4881
        %v4956 = vpack.c.b16 %v4886, %v4884
        %v4957 = vpack.c.b16 %v4887, %v4885
        %v4958 = vpack.c.b16 %v4890, %v4888
        %v4959 = vpack.c.b16 %v4891, %v4889
        %v4960 = vpack.c.b16 %v4894, %v4892
        %v4961 = vpack.c.b16 %v4895, %v4893
        %v4962 = vpack.c.b16 %v4898, %v4896
        %v4963 = vpack.c.b16 %v4899, %v4897
        %5028 = vmatprep.subr.bf16.mxu0 %v4901
        %5029 = vmatpush1.bf16.msra.mxu0 %v4900
        %5030 = vmatprep.subr.bf16.mxu0 %v4903
        %5031 = vmatpush1.bf16.msra.mxu0 %v4902
        %5032 = vmatprep.subr.bf16.mxu0 %v4905
        %5033 = vmatpush1.bf16.msra.mxu0 %v4904
        %5034 = vmatprep.subr.bf16.mxu0 %v4907
        %5035 = vmatpush1.bf16.msra.mxu0 %v4906
        %5036 = vmatprep.subr.bf16.mxu0 %v4909
        %5037 = vmatpush1.bf16.msra.mxu0 %v4908
        %5038 = vmatprep.subr.bf16.mxu0 %v4911
        %5039 = vmatpush1.bf16.msra.mxu0 %v4910
        %5040 = vmatprep.subr.bf16.mxu0 %v4913
        %5041 = vmatpush1.bf16.msra.mxu0 %v4912
        %5042 = vmatprep.subr.bf16.mxu0 %v4915
        %5043 = vmatpush1.bf16.msra.mxu0 %v4914
        %5044 = vmatprep.subr.bf16.mxu0 %v4917
        %5045 = vmatpush1.bf16.msra.mxu0 %v4916
        %5046 = vmatprep.subr.bf16.mxu0 %v4919
        %5047 = vmatpush1.bf16.msra.mxu0 %v4918
        %5048 = vmatprep.subr.bf16.mxu0 %v4921
        %5049 = vmatpush1.bf16.msra.mxu0 %v4920
        %5050 = vmatprep.subr.bf16.mxu0 %v4923
        %5051 = vmatpush1.bf16.msra.mxu0 %v4922
        %5052 = vmatprep.subr.bf16.mxu0 %v4925
        %5053 = vmatpush1.bf16.msra.mxu0 %v4924
        %5054 = vmatprep.subr.bf16.mxu0 %v4927
        %5055 = vmatpush1.bf16.msra.mxu0 %v4926
        %5056 = vmatprep.subr.bf16.mxu0 %v4929
        %5057 = vmatpush1.bf16.msra.mxu0 %v4928
        %5058 = vmatprep.subr.bf16.mxu0 %v4931
        %5059 = vmatpush1.bf16.msra.mxu0 %v4930
        %5060 = vmatprep.mubr.bf16.mxu0 %v4601
        %5061 = vmatmul.mubr.bf16.gmra.mrb[0].mxu0 %v4600
        %v5062 = vpop.f32.mrb[0].mxu0
        %v5063 = vadd.f32 %v4701, %v5062
        %v5064 = vpop.f32.mrb[0].mxu0
        %v5065 = vadd.f32 %v4705, %v5064
        %v5066 = vpop.f32.mrb[0].mxu0
        %v5067 = vadd.f32 %v4701, %v5066
        %v5068 = vpop.f32.mrb[0].mxu0
        %v5069 = vadd.f32 %v4705, %v5068
        %5070 = vmatprep.mubr.bf16.mxu0 %v4605
        %5071 = vmatmul.mubr.bf16.gmra.mrb[0].mxu0 %v4604
        %v5072 = vpop.f32.mrb[0].mxu0
        %v5073 = vadd.f32 %v4701, %v5072
        %v5074 = vpop.f32.mrb[0].mxu0
        %v5075 = vadd.f32 %v4705, %v5074
        %v5076 = vpop.f32.mrb[0].mxu0
        %v5077 = vadd.f32 %v4701, %v5076
        %v5078 = vpop.f32.mrb[0].mxu0
        %v5079 = vadd.f32 %v4705, %v5078
        %5080 = vmatprep.mubr.bf16.mxu0 %v4609
        %5081 = vmatmul.mubr.bf16.gmra.mrb[0].mxu0 %v4608
        %v5082 = vpop.f32.mrb[0].mxu0
        %v5083 = vadd.f32 %v4701, %v5082
        %v5084 = vpop.f32.mrb[0].mxu0
        %v5085 = vadd.f32 %v4705, %v5084
        %v5086 = vpop.f32.mrb[0].mxu0
        %v5087 = vadd.f32 %v4701, %v5086
        %v5088 = vpop.f32.mrb[0].mxu0
        %v5089 = vadd.f32 %v4705, %v5088
        %5090 = vmatprep.mubr.bf16.mxu0 %v4613
        %5091 = vmatmul.mubr.bf16.gmra.mrb[0].mxu0 %v4612
        %v5092 = vpop.f32.mrb[0].mxu0
        %v5093 = vadd.f32 %v4701, %v5092
        %v5094 = vpop.f32.mrb[0].mxu0
        %v5095 = vadd.f32 %v4705, %v5094
        %v5096 = vpop.f32.mrb[0].mxu0
        %v5097 = vadd.f32 %v4701, %v5096
        %v5098 = vpop.f32.mrb[0].mxu0
        %v5099 = vadd.f32 %v4705, %v5098
        %5100 = vmatprep.mubr.bf16.mxu0 %v4617
        %5101 = vmatmul.mubr.bf16.gmra.mrb[0].mxu0 %v4616
        %v5102 = vpop.f32.mrb[0].mxu0
        %v5103 = vadd.f32 %v4701, %v5102
        %v5104 = vpop.f32.mrb[0].mxu0
        %v5105 = vadd.f32 %v4705, %v5104
        %v5106 = vpop.f32.mrb[0].mxu0
        %v5107 = vadd.f32 %v4701, %v5106
        %v5108 = vpop.f32.mrb[0].mxu0
        %v5109 = vadd.f32 %v4705, %v5108
        %5110 = vmatprep.mubr.bf16.mxu0 %v4621
        %5111 = vmatmul.mubr.bf16.gmra.mrb[0].mxu0 %v4620
        %v5112 = vpop.f32.mrb[0].mxu0
        %v5113 = vadd.f32 %v4701, %v5112
        %v5114 = vpop.f32.mrb[0].mxu0
        %v5115 = vadd.f32 %v4705, %v5114
        %v5116 = vpop.f32.mrb[0].mxu0
        %v5117 = vadd.f32 %v4701, %v5116
        %v5118 = vpop.f32.mrb[0].mxu0
        %v5119 = vadd.f32 %v4705, %v5118
        %5120 = vmatprep.mubr.bf16.mxu0 %v4625
        %5121 = vmatmul.mubr.bf16.gmra.mrb[0].mxu0 %v4624
        %v5122 = vpop.f32.mrb[0].mxu0
        %v5123 = vadd.f32 %v4701, %v5122
        %v5124 = vpop.f32.mrb[0].mxu0
        %v5125 = vadd.f32 %v4705, %v5124
        %v5126 = vpop.f32.mrb[0].mxu0
        %v5127 = vadd.f32 %v4701, %v5126
        %v5128 = vpop.f32.mrb[0].mxu0
        %v5129 = vadd.f32 %v4705, %v5128
        %5130 = vmatprep.mubr.bf16.mxu0 %v4629
        %5131 = vmatmul.mubr.bf16.gmra.mrb[0].mxu0 %v4628
        %v5132 = vpop.f32.mrb[0].mxu0
        %v5133 = vadd.f32 %v4701, %v5132
        %v5134 = vpop.f32.mrb[0].mxu0
        %v5135 = vadd.f32 %v4705, %v5134
        %v5136 = vpop.f32.mrb[0].mxu0
        %v5137 = vadd.f32 %v4701, %v5136
        %v5138 = vpop.f32.mrb[0].mxu0
        %v5139 = vadd.f32 %v4705, %v5138
        %5140 = vdwg.mxu0
        %5141 = vmatprep.subr.bf16.mxu0 %v4933
        %5142 = vmatpush1.bf16.msra.mxu0 %v4932
        %5143 = vmatprep.subr.bf16.mxu0 %v4935
        %5144 = vmatpush1.bf16.msra.mxu0 %v4934
        %5145 = vmatprep.subr.bf16.mxu0 %v4937
        %5146 = vmatpush1.bf16.msra.mxu0 %v4936
        %5147 = vmatprep.subr.bf16.mxu0 %v4939
        %5148 = vmatpush1.bf16.msra.mxu0 %v4938
        %5149 = vmatprep.subr.bf16.mxu0 %v4941
        %5150 = vmatpush1.bf16.msra.mxu0 %v4940
        %5151 = vmatprep.subr.bf16.mxu0 %v4943
        %5152 = vmatpush1.bf16.msra.mxu0 %v4942
        %5153 = vmatprep.subr.bf16.mxu0 %v4945
        %5154 = vmatpush1.bf16.msra.mxu0 %v4944
        %5155 = vmatprep.subr.bf16.mxu0 %v4947
        %5156 = vmatpush1.bf16.msra.mxu0 %v4946
        %5157 = vmatprep.subr.bf16.mxu0 %v4949
        %5158 = vmatpush1.bf16.msra.mxu0 %v4948
        %5159 = vmatprep.subr.bf16.mxu0 %v4951
        %5160 = vmatpush1.bf16.msra.mxu0 %v4950
        %5161 = vmatprep.subr.bf16.mxu0 %v4953
        %5162 = vmatpush1.bf16.msra.mxu0 %v4952
        %5163 = vmatprep.subr.bf16.mxu0 %v4955
        %5164 = vmatpush1.bf16.msra.mxu0 %v4954
        %5165 = vmatprep.subr.bf16.mxu0 %v4957
        %5166 = vmatpush1.bf16.msra.mxu0 %v4956
        %5167 = vmatprep.subr.bf16.mxu0 %v4959
        %5168 = vmatpush1.bf16.msra.mxu0 %v4958
        %5169 = vmatprep.subr.bf16.mxu0 %v4961
        %5170 = vmatpush1.bf16.msra.mxu0 %v4960
        %5171 = vmatprep.subr.bf16.mxu0 %v4963
        %5172 = vmatpush1.bf16.msra.mxu0 %v4962
        %5173 = vmatprep.mubr.bf16.mxu0 %v4603
        %5174 = vmatmul.mubr.bf16.gmra.mrb[0].mxu0 %v4602
        %v5175 = vpop.f32.mrb[0].mxu0
        %v5176 = vadd.f32 %v5063, %v5175
        %v5177 = vpop.f32.mrb[0].mxu0
        %v5178 = vadd.f32 %v5065, %v5177
        %v5179 = vpop.f32.mrb[0].mxu0
        %v5180 = vadd.f32 %v5067, %v5179
        %v5181 = vpop.f32.mrb[0].mxu0
        %v5182 = vadd.f32 %v5069, %v5181
        %5183 = vmatprep.mubr.bf16.mxu0 %v4607
        %5184 = vmatmul.mubr.bf16.gmra.mrb[0].mxu0 %v4606
        %v5185 = vpop.f32.mrb[0].mxu0
        %v5186 = vadd.f32 %v5073, %v5185
        %v5187 = vpop.f32.mrb[0].mxu0
        %v5188 = vadd.f32 %v5075, %v5187
        %v5189 = vpop.f32.mrb[0].mxu0
        %v5190 = vadd.f32 %v5077, %v5189
        %v5191 = vpop.f32.mrb[0].mxu0
        %v5192 = vadd.f32 %v5079, %v5191
        %5193 = vmatprep.mubr.bf16.mxu0 %v4611
        %5194 = vmatmul.mubr.bf16.gmra.mrb[0].mxu0 %v4610
        %v5195 = vpop.f32.mrb[0].mxu0
        %v5196 = vadd.f32 %v5083, %v5195
        %v5197 = vpop.f32.mrb[0].mxu0
        %v5198 = vadd.f32 %v5085, %v5197
        %v5199 = vpop.f32.mrb[0].mxu0
        %v5200 = vadd.f32 %v5087, %v5199
        %v5201 = vpop.f32.mrb[0].mxu0
        %v5202 = vadd.f32 %v5089, %v5201
        %5203 = vmatprep.mubr.bf16.mxu0 %v4615
        %5204 = vmatmul.mubr.bf16.gmra.mrb[0].mxu0 %v4614
        %v5205 = vpop.f32.mrb[0].mxu0
        %v5206 = vadd.f32 %v5093, %v5205
        %v5207 = vpop.f32.mrb[0].mxu0
        %v5208 = vadd.f32 %v5095, %v5207
        %v5209 = vpop.f32.mrb[0].mxu0
        %v5210 = vadd.f32 %v5097, %v5209
        %v5211 = vpop.f32.mrb[0].mxu0
        %v5212 = vadd.f32 %v5099, %v5211
        %5213 = vmatprep.mubr.bf16.mxu0 %v4619
        %5214 = vmatmul.mubr.bf16.gmra.mrb[0].mxu0 %v4618
        %v5215 = vpop.f32.mrb[0].mxu0
        %v5216 = vadd.f32 %v5103, %v5215
        %v5217 = vpop.f32.mrb[0].mxu0
        %v5218 = vadd.f32 %v5105, %v5217
        %v5219 = vpop.f32.mrb[0].mxu0
        %v5220 = vadd.f32 %v5107, %v5219
        %v5221 = vpop.f32.mrb[0].mxu0
        %v5222 = vadd.f32 %v5109, %v5221
        %5223 = vmatprep.mubr.bf16.mxu0 %v4623
        %5224 = vmatmul.mubr.bf16.gmra.mrb[0].mxu0 %v4622
        %v5225 = vpop.f32.mrb[0].mxu0
        %v5226 = vadd.f32 %v5113, %v5225
        %v5227 = vpop.f32.mrb[0].mxu0
        %v5228 = vadd.f32 %v5115, %v5227
        %v5229 = vpop.f32.mrb[0].mxu0
        %v5230 = vadd.f32 %v5117, %v5229
        %v5231 = vpop.f32.mrb[0].mxu0
        %v5232 = vadd.f32 %v5119, %v5231
        %5233 = vmatprep.mubr.bf16.mxu0 %v4627
        %5234 = vmatmul.mubr.bf16.gmra.mrb[0].mxu0 %v4626
        %v5235 = vpop.f32.mrb[0].mxu0
        %v5236 = vadd.f32 %v5123, %v5235
        %v5237 = vpop.f32.mrb[0].mxu0
        %v5238 = vadd.f32 %v5125, %v5237
        %v5239 = vpop.f32.mrb[0].mxu0
        %v5240 = vadd.f32 %v5127, %v5239
        %v5241 = vpop.f32.mrb[0].mxu0
        %v5242 = vadd.f32 %v5129, %v5241
        %5243 = vmatprep.mubr.bf16.mxu0 %v4631
        %5244 = vmatmul.mubr.bf16.gmra.mrb[0].mxu0 %v4630
        %v5245 = vpop.f32.mrb[0].mxu0
        %v5246 = vadd.f32 %v5133, %v5245
        %v5247 = vpop.f32.mrb[0].mxu0
        %v5248 = vadd.f32 %v5135, %v5247
        %v5249 = vpop.f32.mrb[0].mxu0
        %v5250 = vadd.f32 %v5137, %v5249
        %v5251 = vpop.f32.mrb[0].mxu0
        %v5252 = vadd.f32 %v5139, %v5251
        %5253 = vdwg.mxu0
        %v5254 = vmul.f32 %v5178, 0.5
        %v5255 = vmul.f32 %v5182, 0.5
        %v5256 = vmul.f32 %v5188, 0.5
        %v5257 = vmul.f32 %v5192, 0.5
        %v5258 = vmul.f32 %v5198, 0.5
        %v5259 = vmul.f32 %v5202, 0.5
        %v5260 = vmul.f32 %v5208, 0.5
        %v5261 = vmul.f32 %v5212, 0.5
        %v5262 = vmul.f32 %v5218, 0.5
        %v5263 = vmul.f32 %v5222, 0.5
        %v5264 = vmul.f32 %v5228, 0.5
        %v5265 = vmul.f32 %v5232, 0.5
        %v5266 = vmul.f32 %v5238, 0.5
        %v5267 = vmul.f32 %v5242, 0.5
        %v5268 = vmul.f32 %v5248, 0.5
        %v5269 = vmul.f32 %v5252, 0.5
        %v5270 = vmul.f32 %v5254, 1.442695
        %v5271 = vpow.pop %v5270
        %v5272 = vmul.f32 %v5255, 1.442695
        %v5273 = vpow.pop %v5272
        %v5274 = vmul.f32 %v5256, 1.442695
        %v5275 = vpow.pop %v5274
        %v5276 = vmul.f32 %v5257, 1.442695
        %v5277 = vpow.pop %v5276
        %v5278 = vmul.f32 %v5258, 1.442695
        %v5279 = vpow.pop %v5278
        %v5280 = vmul.f32 %v5259, 1.442695
        %v5281 = vpow.pop %v5280
        %v5282 = vmul.f32 %v5260, 1.442695
        %v5283 = vpow.pop %v5282
        %v5284 = vmul.f32 %v5261, 1.442695
        %v5285 = vpow.pop %v5284
        %v5286 = vmul.f32 %v5262, 1.442695
        %v5287 = vpow.pop %v5286
        %v5288 = vmul.f32 %v5263, 1.442695
        %v5289 = vpow.pop %v5288
        %v5290 = vmul.f32 %v5264, 1.442695
        %v5291 = vpow.pop %v5290
        %v5292 = vmul.f32 %v5265, 1.442695
        %v5293 = vpow.pop %v5292
        %v5294 = vmul.f32 %v5266, 1.442695
        %v5295 = vpow.pop %v5294
        %v5296 = vmul.f32 %v5267, 1.442695
        %v5297 = vpow.pop %v5296
        %v5298 = vmul.f32 %v5268, 1.442695
        %v5299 = vpow.pop %v5298
        %v5300 = vmul.f32 %v5269, 1.442695
        %v5301 = vpow.pop %v5300
        %v5302 = vld [vmem:[%s507] sm:$0xff]
        %v5303 = vld [vmem:[%s507 + $0x8] sm:$0xff]
        %v5304 = vld [vmem:[%s507 + $0x10] sm:$0xff]
        %v5305 = vld [vmem:[%s507 + $0x18] sm:$0xff]
        %v5306 = vld [vmem:[%s507 + $0x20] sm:$0xff]
        %v5307 = vld [vmem:[%s507 + $0x28] sm:$0xff]
        %v5308 = vld [vmem:[%s507 + $0x30] sm:$0xff]
        %v5309 = vld [vmem:[%s507 + $0x38] sm:$0xff]
        %v5310 = vld [vmem:[%s507 + $0x40] sm:$0xff]
        %v5311 = vld [vmem:[%s507 + $0x48] sm:$0xff]
        %v5312 = vld [vmem:[%s507 + $0x50] sm:$0xff]
        %v5313 = vld [vmem:[%s507 + $0x58] sm:$0xff]
        %v5314 = vld [vmem:[%s507 + $0x60] sm:$0xff]
        %v5315 = vld [vmem:[%s507 + $0x68] sm:$0xff]
        %v5316 = vld [vmem:[%s507 + $0x70] sm:$0xff]
        %v5317 = vld [vmem:[%s507 + $0x78] sm:$0xff]
        %v5318 = vmul.f32 %v5302, %v5271
        %v5319 = vmul.f32 %v5303, %v5273
        %v5320 = vmul.f32 %v5304, %v5275
        %v5321 = vmul.f32 %v5305, %v5277
        %v5322 = vmul.f32 %v5306, %v5279
        %v5323 = vmul.f32 %v5307, %v5281
        %v5324 = vmul.f32 %v5308, %v5283
        %v5325 = vmul.f32 %v5309, %v5285
        %v5326 = vmul.f32 %v5310, %v5287
        %v5327 = vmul.f32 %v5311, %v5289
        %v5328 = vmul.f32 %v5312, %v5291
        %v5329 = vmul.f32 %v5313, %v5293
        %v5330 = vmul.f32 %v5314, %v5295
        %v5331 = vmul.f32 %v5315, %v5297
        %v5332 = vmul.f32 %v5316, %v5299
        %v5333 = vmul.f32 %v5317, %v5301
        %v5334 = vadd.f32 %v5318, %v5176
        %v5335 = vadd.f32 %v5319, %v5180
        %v5336 = vadd.f32 %v5320, %v5186
        %v5337 = vadd.f32 %v5321, %v5190
        %v5338 = vadd.f32 %v5322, %v5196
        %v5339 = vadd.f32 %v5323, %v5200
        %v5340 = vadd.f32 %v5324, %v5206
        %v5341 = vadd.f32 %v5325, %v5210
        %v5342 = vadd.f32 %v5326, %v5216
        %v5343 = vadd.f32 %v5327, %v5220
        %v5344 = vadd.f32 %v5328, %v5226
        %v5345 = vadd.f32 %v5329, %v5230
        %v5346 = vadd.f32 %v5330, %v5236
        %v5347 = vadd.f32 %v5331, %v5240
        %v5348 = vadd.f32 %v5332, %v5246
        %v5349 = vadd.f32 %v5333, %v5250
        %v5350 = vpack.c.bf16 %v5335, %v5334
        %v5351 = vpack.c.bf16 %v5337, %v5336
        %v5352 = vpack.c.bf16 %v5339, %v5338
        %v5353 = vpack.c.bf16 %v5341, %v5340
        %v5354 = vpack.c.bf16 %v5343, %v5342
        %v5355 = vpack.c.bf16 %v5345, %v5344
        %v5356 = vpack.c.bf16 %v5347, %v5346
        %v5357 = vpack.c.bf16 %v5349, %v5348
        %v5358 = vld [vmem:[%s8] sm:$0xff]
        %v5359 = vld [vmem:[%s8 + $0x8] sm:$0xff]
        %v5360 = vld [vmem:[%s8 + $0x10] sm:$0xff]
        %v5361 = vld [vmem:[%s8 + $0x18] sm:$0xff]
        %v5362 = vld [vmem:[%s8 + $0x20] sm:$0xff]
        %v5363 = vld [vmem:[%s8 + $0x28] sm:$0xff]
        %v5364 = vld [vmem:[%s8 + $0x30] sm:$0xff]
        %v5365 = vld [vmem:[%s8 + $0x38] sm:$0xff]
        %v5366 = vld [vmem:[%s8 + $0x40] sm:$0xff]
        %v5367 = vld [vmem:[%s8 + $0x48] sm:$0xff]
        %v5368 = vld [vmem:[%s8 + $0x50] sm:$0xff]
        %v5369 = vld [vmem:[%s8 + $0x58] sm:$0xff]
        %v5370 = vld [vmem:[%s8 + $0x60] sm:$0xff]
        %v5371 = vld [vmem:[%s8 + $0x68] sm:$0xff]
        %v5372 = vld [vmem:[%s8 + $0x70] sm:$0xff]
        %v5373 = vld [vmem:[%s8 + $0x78] sm:$0xff]
        %v5374 = vld [vmem:[%s8 + $0x80] sm:$0xff]
        %v5375 = vld [vmem:[%s8 + $0x88] sm:$0xff]
        %v5376 = vld [vmem:[%s8 + $0x90] sm:$0xff]
        %v5377 = vld [vmem:[%s8 + $0x98] sm:$0xff]
        %v5378 = vld [vmem:[%s8 + $0xa0] sm:$0xff]
        %v5379 = vld [vmem:[%s8 + $0xa8] sm:$0xff]
        %v5380 = vld [vmem:[%s8 + $0xb0] sm:$0xff]
        %v5381 = vld [vmem:[%s8 + $0xb8] sm:$0xff]
        %v5382 = vld [vmem:[%s8 + $0xc0] sm:$0xff]
        %v5383 = vld [vmem:[%s8 + $0xc8] sm:$0xff]
        %v5384 = vld [vmem:[%s8 + $0xd0] sm:$0xff]
        %v5385 = vld [vmem:[%s8 + $0xd8] sm:$0xff]
        %v5386 = vld [vmem:[%s8 + $0xe0] sm:$0xff]
        %v5387 = vld [vmem:[%s8 + $0xe8] sm:$0xff]
        %v5388 = vld [vmem:[%s8 + $0xf0] sm:$0xff]
        %v5389 = vld [vmem:[%s8 + $0xf8] sm:$0xff]
        %v5390 = vld [vmem:[%s9] sm:$0xf]
        %v5392 = vlaneseq
        %v5393 = vshrl.u32 %v5392, 7
        %v5394 = vsub.s32 0, %v5393
        %v5395 = vrot.slane %v5390, %v5394
        %v5396 = vlaneseq
        %v5397 = vshrl.u32 %v5396, 7
        %v5398 = vsub.s32 1, %v5397
        %v5399 = vrot.slane %v5390, %v5398
        %v5400 = vlaneseq
        %v5401 = vshrl.u32 %v5400, 7
        %v5402 = vsub.s32 2, %v5401
        %v5403 = vrot.slane %v5390, %v5402
        %v5404 = vlaneseq
        %v5405 = vshrl.u32 %v5404, 7
        %v5406 = vsub.s32 3, %v5405
        %v5407 = vrot.slane %v5390, %v5406
        %v5444 = vunpack.c.l.b16 %v5358
        %v5445 = vunpack.c.h.b16 %v5358
        %v5446 = vunpack.c.l.b16 %v5359
        %v5447 = vunpack.c.h.b16 %v5359
        %v5448 = vunpack.c.l.b16 %v5360
        %v5449 = vunpack.c.h.b16 %v5360
        %v5450 = vunpack.c.l.b16 %v5361
        %v5451 = vunpack.c.h.b16 %v5361
        %v5452 = vunpack.c.l.b16 %v5362
        %v5453 = vunpack.c.h.b16 %v5362
        %v5454 = vunpack.c.l.b16 %v5363
        %v5455 = vunpack.c.h.b16 %v5363
        %v5456 = vunpack.c.l.b16 %v5364
        %v5457 = vunpack.c.h.b16 %v5364
        %v5458 = vunpack.c.l.b16 %v5365
        %v5459 = vunpack.c.h.b16 %v5365
        %v5460 = vunpack.c.l.b16 %v5366
        %v5461 = vunpack.c.h.b16 %v5366
        %v5462 = vunpack.c.l.b16 %v5367
        %v5463 = vunpack.c.h.b16 %v5367
        %v5464 = vunpack.c.l.b16 %v5368
        %v5465 = vunpack.c.h.b16 %v5368
        %v5466 = vunpack.c.l.b16 %v5369
        %v5467 = vunpack.c.h.b16 %v5369
        %v5468 = vunpack.c.l.b16 %v5370
        %v5469 = vunpack.c.h.b16 %v5370
        %v5470 = vunpack.c.l.b16 %v5371
        %v5471 = vunpack.c.h.b16 %v5371
        %v5472 = vunpack.c.l.b16 %v5372
        %v5473 = vunpack.c.h.b16 %v5372
        %v5474 = vunpack.c.l.b16 %v5373
        %v5475 = vunpack.c.h.b16 %v5373
        %v5476 = vunpack.c.l.b16 %v5374
        %v5477 = vunpack.c.h.b16 %v5374
        %v5478 = vunpack.c.l.b16 %v5375
        %v5479 = vunpack.c.h.b16 %v5375
        %v5480 = vunpack.c.l.b16 %v5376
        %v5481 = vunpack.c.h.b16 %v5376
        %v5482 = vunpack.c.l.b16 %v5377
        %v5483 = vunpack.c.h.b16 %v5377
        %v5484 = vunpack.c.l.b16 %v5378
        %v5485 = vunpack.c.h.b16 %v5378
        %v5486 = vunpack.c.l.b16 %v5379
        %v5487 = vunpack.c.h.b16 %v5379
        %v5488 = vunpack.c.l.b16 %v5380
        %v5489 = vunpack.c.h.b16 %v5380
        %v5490 = vunpack.c.l.b16 %v5381
        %v5491 = vunpack.c.h.b16 %v5381
        %v5492 = vunpack.c.l.b16 %v5382
        %v5493 = vunpack.c.h.b16 %v5382
        %v5494 = vunpack.c.l.b16 %v5383
        %v5495 = vunpack.c.h.b16 %v5383
        %v5496 = vunpack.c.l.b16 %v5384
        %v5497 = vunpack.c.h.b16 %v5384
        %v5498 = vunpack.c.l.b16 %v5385
        %v5499 = vunpack.c.h.b16 %v5385
        %v5500 = vunpack.c.l.b16 %v5386
        %v5501 = vunpack.c.h.b16 %v5386
        %v5502 = vunpack.c.l.b16 %v5387
        %v5503 = vunpack.c.h.b16 %v5387
        %v5504 = vunpack.c.l.b16 %v5388
        %v5505 = vunpack.c.h.b16 %v5388
        %v5506 = vunpack.c.l.b16 %v5389
        %v5507 = vunpack.c.h.b16 %v5389
        %v5508 = vpack.c.b16 %v5448, %v5444
        %v5509 = vpack.c.b16 %v5449, %v5445
        %v5510 = vpack.c.b16 %v5450, %v5446
        %v5511 = vpack.c.b16 %v5451, %v5447
        %v5512 = vpack.c.b16 %v5456, %v5452
        %v5513 = vpack.c.b16 %v5457, %v5453
        %v5514 = vpack.c.b16 %v5458, %v5454
        %v5515 = vpack.c.b16 %v5459, %v5455
        %v5516 = vpack.c.b16 %v5464, %v5460
        %v5517 = vpack.c.b16 %v5465, %v5461
        %v5518 = vpack.c.b16 %v5466, %v5462
        %v5519 = vpack.c.b16 %v5467, %v5463
        %v5520 = vpack.c.b16 %v5472, %v5468
        %v5521 = vpack.c.b16 %v5473, %v5469
        %v5522 = vpack.c.b16 %v5474, %v5470
        %v5523 = vpack.c.b16 %v5475, %v5471
        %v5524 = vpack.c.b16 %v5480, %v5476
        %v5525 = vpack.c.b16 %v5481, %v5477
        %v5526 = vpack.c.b16 %v5482, %v5478
        %v5527 = vpack.c.b16 %v5483, %v5479
        %v5528 = vpack.c.b16 %v5488, %v5484
        %v5529 = vpack.c.b16 %v5489, %v5485
        %v5530 = vpack.c.b16 %v5490, %v5486
        %v5531 = vpack.c.b16 %v5491, %v5487
        %v5532 = vpack.c.b16 %v5496, %v5492
        %v5533 = vpack.c.b16 %v5497, %v5493
        %v5534 = vpack.c.b16 %v5498, %v5494
        %v5535 = vpack.c.b16 %v5499, %v5495
        %v5536 = vpack.c.b16 %v5504, %v5500
        %v5537 = vpack.c.b16 %v5505, %v5501
        %v5538 = vpack.c.b16 %v5506, %v5502
        %v5539 = vpack.c.b16 %v5507, %v5503
        %5572 = vmatprep.subr.bf16.mxu0 %v5509
        %5573 = vmatpush1.bf16.msra.mxu0 %v5508
        %5574 = vmatprep.subr.bf16.mxu0 %v5513
        %5575 = vmatpush1.bf16.msra.mxu0 %v5512
        %5576 = vmatprep.subr.bf16.mxu0 %v5517
        %5577 = vmatpush1.bf16.msra.mxu0 %v5516
        %5578 = vmatprep.subr.bf16.mxu0 %v5521
        %5579 = vmatpush1.bf16.msra.mxu0 %v5520
        %5580 = vmatprep.subr.bf16.mxu0 %v5525
        %5581 = vmatpush1.bf16.msra.mxu0 %v5524
        %5582 = vmatprep.subr.bf16.mxu0 %v5529
        %5583 = vmatpush1.bf16.msra.mxu0 %v5528
        %5584 = vmatprep.subr.bf16.mxu0 %v5533
        %5585 = vmatpush1.bf16.msra.mxu0 %v5532
        %5586 = vmatprep.subr.bf16.mxu0 %v5537
        %5587 = vmatpush1.bf16.msra.mxu0 %v5536
        %5588 = vmatprep.subr.bf16.mxu0 0
        %5589 = vmatpush1.bf16.msra.mxu0 0
        %5590 = vmatprep.subr.bf16.mxu0 0
        %5591 = vmatpush1.bf16.msra.mxu0 0
        %5592 = vmatprep.subr.bf16.mxu0 0
        %5593 = vmatpush1.bf16.msra.mxu0 0
        %5594 = vmatprep.subr.bf16.mxu0 0
        %5595 = vmatpush1.bf16.msra.mxu0 0
        %5596 = vmatprep.subr.bf16.mxu0 0
        %5597 = vmatpush1.bf16.msra.mxu0 0
        %5598 = vmatprep.subr.bf16.mxu0 0
        %5599 = vmatpush1.bf16.msra.mxu0 0
        %5600 = vmatprep.subr.bf16.mxu0 0
        %5601 = vmatpush1.bf16.msra.mxu0 0
        %5602 = vmatprep.subr.bf16.mxu0 0
        %5603 = vmatpush1.bf16.msra.mxu0 0
        %5604 = vmatprep.mubr.bf16.mxu0 0
        %5605 = vmatmul.mubr.bf16.gmra.mrb[0].mxu0 %v5350
        %v5606 = vpop.f32.mrb[0].mxu0
        %v5607 = vadd.f32 %v5395, %v5606
        %v5608 = vpop.f32.mrb[0].mxu0
        %v5609 = vadd.f32 %v5399, %v5608
        %v5610 = vpop.f32.mrb[0].mxu0
        %v5611 = vadd.f32 %v5395, %v5610
        %v5612 = vpop.f32.mrb[0].mxu0
        %v5613 = vadd.f32 %v5399, %v5612
        %5614 = vmatprep.mubr.bf16.mxu0 0
        %5615 = vmatmul.mubr.bf16.gmra.mrb[0].mxu0 %v5351
        %v5616 = vpop.f32.mrb[0].mxu0
        %v5617 = vadd.f32 %v5395, %v5616
        %v5618 = vpop.f32.mrb[0].mxu0
        %v5619 = vadd.f32 %v5399, %v5618
        %v5620 = vpop.f32.mrb[0].mxu0
        %v5621 = vadd.f32 %v5395, %v5620
        %v5622 = vpop.f32.mrb[0].mxu0
        %v5623 = vadd.f32 %v5399, %v5622
        %5624 = vmatprep.mubr.bf16.mxu0 0
        %5625 = vmatmul.mubr.bf16.gmra.mrb[0].mxu0 %v5352
        %v5626 = vpop.f32.mrb[0].mxu0
        %v5627 = vadd.f32 %v5395, %v5626
        %v5628 = vpop.f32.mrb[0].mxu0
        %v5629 = vadd.f32 %v5399, %v5628
        %v5630 = vpop.f32.mrb[0].mxu0
        %v5631 = vadd.f32 %v5395, %v5630
        %v5632 = vpop.f32.mrb[0].mxu0
        %v5633 = vadd.f32 %v5399, %v5632
        %5634 = vmatprep.mubr.bf16.mxu0 0
        %5635 = vmatmul.mubr.bf16.gmra.mrb[0].mxu0 %v5353
        %v5636 = vpop.f32.mrb[0].mxu0
        %v5637 = vadd.f32 %v5395, %v5636
        %v5638 = vpop.f32.mrb[0].mxu0
        %v5639 = vadd.f32 %v5399, %v5638
        %v5640 = vpop.f32.mrb[0].mxu0
        %v5641 = vadd.f32 %v5395, %v5640
        %v5642 = vpop.f32.mrb[0].mxu0
        %v5643 = vadd.f32 %v5399, %v5642
        %5644 = vmatprep.mubr.bf16.mxu0 0
        %5645 = vmatmul.mubr.bf16.gmra.mrb[0].mxu0 %v5354
        %v5646 = vpop.f32.mrb[0].mxu0
        %v5647 = vadd.f32 %v5395, %v5646
        %v5648 = vpop.f32.mrb[0].mxu0
        %v5649 = vadd.f32 %v5399, %v5648
        %v5650 = vpop.f32.mrb[0].mxu0
        %v5651 = vadd.f32 %v5395, %v5650
        %v5652 = vpop.f32.mrb[0].mxu0
        %v5653 = vadd.f32 %v5399, %v5652
        %5654 = vmatprep.mubr.bf16.mxu0 0
        %5655 = vmatmul.mubr.bf16.gmra.mrb[0].mxu0 %v5355
        %v5656 = vpop.f32.mrb[0].mxu0
        %v5657 = vadd.f32 %v5395, %v5656
        %v5658 = vpop.f32.mrb[0].mxu0
        %v5659 = vadd.f32 %v5399, %v5658
        %v5660 = vpop.f32.mrb[0].mxu0
        %v5661 = vadd.f32 %v5395, %v5660
        %v5662 = vpop.f32.mrb[0].mxu0
        %v5663 = vadd.f32 %v5399, %v5662
        %5664 = vmatprep.mubr.bf16.mxu0 0
        %5665 = vmatmul.mubr.bf16.gmra.mrb[0].mxu0 %v5356
        %v5666 = vpop.f32.mrb[0].mxu0
        %v5667 = vadd.f32 %v5395, %v5666
        %v5668 = vpop.f32.mrb[0].mxu0
        %v5669 = vadd.f32 %v5399, %v5668
        %v5670 = vpop.f32.mrb[0].mxu0
        %v5671 = vadd.f32 %v5395, %v5670
        %v5672 = vpop.f32.mrb[0].mxu0
        %v5673 = vadd.f32 %v5399, %v5672
        %5674 = vmatprep.mubr.bf16.mxu0 0
        %5675 = vmatmul.mubr.bf16.gmra.mrb[0].mxu0 %v5357
        %v5676 = vpop.f32.mrb[0].mxu0
        %v5677 = vadd.f32 %v5395, %v5676
        %v5678 = vpop.f32.mrb[0].mxu0
        %v5679 = vadd.f32 %v5399, %v5678
        %v5680 = vpop.f32.mrb[0].mxu0
        %v5681 = vadd.f32 %v5395, %v5680
        %v5682 = vpop.f32.mrb[0].mxu0
        %v5683 = vadd.f32 %v5399, %v5682
        %5684 = vdwg.mxu0
        %5685 = vmatprep.subr.bf16.mxu0 %v5511
        %5686 = vmatpush1.bf16.msra.mxu0 %v5510
        %5687 = vmatprep.subr.bf16.mxu0 %v5515
        %5688 = vmatpush1.bf16.msra.mxu0 %v5514
        %5689 = vmatprep.subr.bf16.mxu0 %v5519
        %5690 = vmatpush1.bf16.msra.mxu0 %v5518
        %5691 = vmatprep.subr.bf16.mxu0 %v5523
        %5692 = vmatpush1.bf16.msra.mxu0 %v5522
        %5693 = vmatprep.subr.bf16.mxu0 %v5527
        %5694 = vmatpush1.bf16.msra.mxu0 %v5526
        %5695 = vmatprep.subr.bf16.mxu0 %v5531
        %5696 = vmatpush1.bf16.msra.mxu0 %v5530
        %5697 = vmatprep.subr.bf16.mxu0 %v5535
        %5698 = vmatpush1.bf16.msra.mxu0 %v5534
        %5699 = vmatprep.subr.bf16.mxu0 %v5539
        %5700 = vmatpush1.bf16.msra.mxu0 %v5538
        %5701 = vmatprep.subr.bf16.mxu0 0
        %5702 = vmatpush1.bf16.msra.mxu0 0
        %5703 = vmatprep.subr.bf16.mxu0 0
        %5704 = vmatpush1.bf16.msra.mxu0 0
        %5705 = vmatprep.subr.bf16.mxu0 0
        %5706 = vmatpush1.bf16.msra.mxu0 0
        %5707 = vmatprep.subr.bf16.mxu0 0
        %5708 = vmatpush1.bf16.msra.mxu0 0
        %5709 = vmatprep.subr.bf16.mxu0 0
        %5710 = vmatpush1.bf16.msra.mxu0 0
        %5711 = vmatprep.subr.bf16.mxu0 0
        %5712 = vmatpush1.bf16.msra.mxu0 0
        %5713 = vmatprep.subr.bf16.mxu0 0
        %5714 = vmatpush1.bf16.msra.mxu0 0
        %5715 = vmatprep.subr.bf16.mxu0 0
        %5716 = vmatpush1.bf16.msra.mxu0 0
        %5717 = vmatprep.mubr.bf16.mxu0 0
        %5718 = vmatmul.mubr.bf16.gmra.mrb[0].mxu0 %v5350
        %v5719 = vpop.f32.mrb[0].mxu0
        %v5720 = vadd.f32 %v5403, %v5719
        %v5721 = vpop.f32.mrb[0].mxu0
        %v5722 = vadd.f32 %v5407, %v5721
        %v5723 = vpop.f32.mrb[0].mxu0
        %v5724 = vadd.f32 %v5403, %v5723
        %v5725 = vpop.f32.mrb[0].mxu0
        %v5726 = vadd.f32 %v5407, %v5725
        %5727 = vmatprep.mubr.bf16.mxu0 0
        %5728 = vmatmul.mubr.bf16.gmra.mrb[0].mxu0 %v5351
        %v5729 = vpop.f32.mrb[0].mxu0
        %v5730 = vadd.f32 %v5403, %v5729
        %v5731 = vpop.f32.mrb[0].mxu0
        %v5732 = vadd.f32 %v5407, %v5731
        %v5733 = vpop.f32.mrb[0].mxu0
        %v5734 = vadd.f32 %v5403, %v5733
        %v5735 = vpop.f32.mrb[0].mxu0
        %v5736 = vadd.f32 %v5407, %v5735
        %5737 = vmatprep.mubr.bf16.mxu0 0
        %5738 = vmatmul.mubr.bf16.gmra.mrb[0].mxu0 %v5352
        %v5739 = vpop.f32.mrb[0].mxu0
        %v5740 = vadd.f32 %v5403, %v5739
        %v5741 = vpop.f32.mrb[0].mxu0
        %v5742 = vadd.f32 %v5407, %v5741
        %v5743 = vpop.f32.mrb[0].mxu0
        %v5744 = vadd.f32 %v5403, %v5743
        %v5745 = vpop.f32.mrb[0].mxu0
        %v5746 = vadd.f32 %v5407, %v5745
        %5747 = vmatprep.mubr.bf16.mxu0 0
        %5748 = vmatmul.mubr.bf16.gmra.mrb[0].mxu0 %v5353
        %v5749 = vpop.f32.mrb[0].mxu0
        %v5750 = vadd.f32 %v5403, %v5749
        %v5751 = vpop.f32.mrb[0].mxu0
        %v5752 = vadd.f32 %v5407, %v5751
        %v5753 = vpop.f32.mrb[0].mxu0
        %v5754 = vadd.f32 %v5403, %v5753
        %v5755 = vpop.f32.mrb[0].mxu0
        %v5756 = vadd.f32 %v5407, %v5755
        %5757 = vmatprep.mubr.bf16.mxu0 0
        %5758 = vmatmul.mubr.bf16.gmra.mrb[0].mxu0 %v5354
        %v5759 = vpop.f32.mrb[0].mxu0
        %v5760 = vadd.f32 %v5403, %v5759
        %v5761 = vpop.f32.mrb[0].mxu0
        %v5762 = vadd.f32 %v5407, %v5761
        %v5763 = vpop.f32.mrb[0].mxu0
        %v5764 = vadd.f32 %v5403, %v5763
        %v5765 = vpop.f32.mrb[0].mxu0
        %v5766 = vadd.f32 %v5407, %v5765
        %5767 = vmatprep.mubr.bf16.mxu0 0
        %5768 = vmatmul.mubr.bf16.gmra.mrb[0].mxu0 %v5355
        %v5769 = vpop.f32.mrb[0].mxu0
        %v5770 = vadd.f32 %v5403, %v5769
        %v5771 = vpop.f32.mrb[0].mxu0
        %v5772 = vadd.f32 %v5407, %v5771
        %v5773 = vpop.f32.mrb[0].mxu0
        %v5774 = vadd.f32 %v5403, %v5773
        %v5775 = vpop.f32.mrb[0].mxu0
        %v5776 = vadd.f32 %v5407, %v5775
        %5777 = vmatprep.mubr.bf16.mxu0 0
        %5778 = vmatmul.mubr.bf16.gmra.mrb[0].mxu0 %v5356
        %v5779 = vpop.f32.mrb[0].mxu0
        %v5780 = vadd.f32 %v5403, %v5779
        %v5781 = vpop.f32.mrb[0].mxu0
        %v5782 = vadd.f32 %v5407, %v5781
        %v5783 = vpop.f32.mrb[0].mxu0
        %v5784 = vadd.f32 %v5403, %v5783
        %v5785 = vpop.f32.mrb[0].mxu0
        %v5786 = vadd.f32 %v5407, %v5785
        %5787 = vmatprep.mubr.bf16.mxu0 0
        %5788 = vmatmul.mubr.bf16.gmra.mrb[0].mxu0 %v5357
        %v5789 = vpop.f32.mrb[0].mxu0
        %v5790 = vadd.f32 %v5403, %v5789
        %v5791 = vpop.f32.mrb[0].mxu0
        %v5792 = vadd.f32 %v5407, %v5791
        %v5793 = vpop.f32.mrb[0].mxu0
        %v5794 = vadd.f32 %v5403, %v5793
        %v5795 = vpop.f32.mrb[0].mxu0
        %v5796 = vadd.f32 %v5407, %v5795
        %5797 = vdwg.mxu0
        %v5798 = vmax.f32 %v5607, 0.0
        %v5799 = vmax.f32 %v5609, 0.0
        %v5800 = vmax.f32 %v5720, 0.0
        %v5801 = vmax.f32 %v5722, 0.0
        %v5802 = vmax.f32 %v5611, 0.0
        %v5803 = vmax.f32 %v5613, 0.0
        %v5804 = vmax.f32 %v5724, 0.0
        %v5805 = vmax.f32 %v5726, 0.0
        %v5806 = vmax.f32 %v5617, 0.0
        %v5807 = vmax.f32 %v5619, 0.0
        %v5808 = vmax.f32 %v5730, 0.0
        %v5809 = vmax.f32 %v5732, 0.0
        %v5810 = vmax.f32 %v5621, 0.0
        %v5811 = vmax.f32 %v5623, 0.0
        %v5812 = vmax.f32 %v5734, 0.0
        %v5813 = vmax.f32 %v5736, 0.0
        %v5814 = vmax.f32 %v5627, 0.0
        %v5815 = vmax.f32 %v5629, 0.0
        %v5816 = vmax.f32 %v5740, 0.0
        %v5817 = vmax.f32 %v5742, 0.0
        %v5818 = vmax.f32 %v5631, 0.0
        %v5819 = vmax.f32 %v5633, 0.0
        %v5820 = vmax.f32 %v5744, 0.0
        %v5821 = vmax.f32 %v5746, 0.0
        %v5822 = vmax.f32 %v5637, 0.0
        %v5823 = vmax.f32 %v5639, 0.0
        %v5824 = vmax.f32 %v5750, 0.0
        %v5825 = vmax.f32 %v5752, 0.0
        %v5826 = vmax.f32 %v5641, 0.0
        %v5827 = vmax.f32 %v5643, 0.0
        %v5828 = vmax.f32 %v5754, 0.0
        %v5829 = vmax.f32 %v5756, 0.0
        %v5830 = vmax.f32 %v5647, 0.0
        %v5831 = vmax.f32 %v5649, 0.0
        %v5832 = vmax.f32 %v5760, 0.0
        %v5833 = vmax.f32 %v5762, 0.0
        %v5834 = vmax.f32 %v5651, 0.0
        %v5835 = vmax.f32 %v5653, 0.0
        %v5836 = vmax.f32 %v5764, 0.0
        %v5837 = vmax.f32 %v5766, 0.0
        %v5838 = vmax.f32 %v5657, 0.0
        %v5839 = vmax.f32 %v5659, 0.0
        %v5840 = vmax.f32 %v5770, 0.0
        %v5841 = vmax.f32 %v5772, 0.0
        %v5842 = vmax.f32 %v5661, 0.0
        %v5843 = vmax.f32 %v5663, 0.0
        %v5844 = vmax.f32 %v5774, 0.0
        %v5845 = vmax.f32 %v5776, 0.0
        %v5846 = vmax.f32 %v5667, 0.0
        %v5847 = vmax.f32 %v5669, 0.0
        %v5848 = vmax.f32 %v5780, 0.0
        %v5849 = vmax.f32 %v5782, 0.0
        %v5850 = vmax.f32 %v5671, 0.0
        %v5851 = vmax.f32 %v5673, 0.0
        %v5852 = vmax.f32 %v5784, 0.0
        %v5853 = vmax.f32 %v5786, 0.0
        %v5854 = vmax.f32 %v5677, 0.0
        %v5855 = vmax.f32 %v5679, 0.0
        %v5856 = vmax.f32 %v5790, 0.0
        %v5857 = vmax.f32 %v5792, 0.0
        %v5858 = vmax.f32 %v5681, 0.0
        %v5859 = vmax.f32 %v5683, 0.0
        %v5860 = vmax.f32 %v5794, 0.0
        %v5861 = vmax.f32 %v5796, 0.0
        %v5862 = vpack.c.bf16 %v5802, %v5798
        %v5863 = vpack.c.bf16 %v5803, %v5799
        %v5864 = vpack.c.bf16 %v5804, %v5800
        %v5865 = vpack.c.bf16 %v5805, %v5801
        %v5866 = vpack.c.bf16 %v5810, %v5806
        %v5867 = vpack.c.bf16 %v5811, %v5807
        %v5868 = vpack.c.bf16 %v5812, %v5808
        %v5869 = vpack.c.bf16 %v5813, %v5809
        %v5870 = vpack.c.bf16 %v5818, %v5814
        %v5871 = vpack.c.bf16 %v5819, %v5815
        %v5872 = vpack.c.bf16 %v5820, %v5816
        %v5873 = vpack.c.bf16 %v5821, %v5817
        %v5874 = vpack.c.bf16 %v5826, %v5822
        %v5875 = vpack.c.bf16 %v5827, %v5823
        %v5876 = vpack.c.bf16 %v5828, %v5824
        %v5877 = vpack.c.bf16 %v5829, %v5825
        %v5878 = vpack.c.bf16 %v5834, %v5830
        %v5879 = vpack.c.bf16 %v5835, %v5831
        %v5880 = vpack.c.bf16 %v5836, %v5832
        %v5881 = vpack.c.bf16 %v5837, %v5833
        %v5882 = vpack.c.bf16 %v5842, %v5838
        %v5883 = vpack.c.bf16 %v5843, %v5839
        %v5884 = vpack.c.bf16 %v5844, %v5840
        %v5885 = vpack.c.bf16 %v5845, %v5841
        %v5886 = vpack.c.bf16 %v5850, %v5846
        %v5887 = vpack.c.bf16 %v5851, %v5847
        %v5888 = vpack.c.bf16 %v5852, %v5848
        %v5889 = vpack.c.bf16 %v5853, %v5849
        %v5890 = vpack.c.bf16 %v5858, %v5854
        %v5891 = vpack.c.bf16 %v5859, %v5855
        %v5892 = vpack.c.bf16 %v5860, %v5856
        %v5893 = vpack.c.bf16 %v5861, %v5857
        %v5894 = vld [vmem:[%s10] sm:$0xff]
        %v5895 = vld [vmem:[%s10 + $0x8] sm:$0xff]
        %v5896 = vld [vmem:[%s10 + $0x10] sm:$0xff]
        %v5897 = vld [vmem:[%s10 + $0x18] sm:$0xff]
        %v5898 = vld [vmem:[%s10 + $0x20] sm:$0xff]
        %v5899 = vld [vmem:[%s10 + $0x28] sm:$0xff]
        %v5900 = vld [vmem:[%s10 + $0x30] sm:$0xff]
        %v5901 = vld [vmem:[%s10 + $0x38] sm:$0xff]
        %v5902 = vld [vmem:[%s10 + $0x40] sm:$0xff]
        %v5903 = vld [vmem:[%s10 + $0x48] sm:$0xff]
        %v5904 = vld [vmem:[%s10 + $0x50] sm:$0xff]
        %v5905 = vld [vmem:[%s10 + $0x58] sm:$0xff]
        %v5906 = vld [vmem:[%s10 + $0x60] sm:$0xff]
        %v5907 = vld [vmem:[%s10 + $0x68] sm:$0xff]
        %v5908 = vld [vmem:[%s10 + $0x70] sm:$0xff]
        %v5909 = vld [vmem:[%s10 + $0x78] sm:$0xff]
        %v5910 = vld [vmem:[%s10 + $0x80] sm:$0xff]
        %v5911 = vld [vmem:[%s10 + $0x88] sm:$0xff]
        %v5912 = vld [vmem:[%s10 + $0x90] sm:$0xff]
        %v5913 = vld [vmem:[%s10 + $0x98] sm:$0xff]
        %v5914 = vld [vmem:[%s10 + $0xa0] sm:$0xff]
        %v5915 = vld [vmem:[%s10 + $0xa8] sm:$0xff]
        %v5916 = vld [vmem:[%s10 + $0xb0] sm:$0xff]
        %v5917 = vld [vmem:[%s10 + $0xb8] sm:$0xff]
        %v5918 = vld [vmem:[%s10 + $0xc0] sm:$0xff]
        %v5919 = vld [vmem:[%s10 + $0xc8] sm:$0xff]
        %v5920 = vld [vmem:[%s10 + $0xd0] sm:$0xff]
        %v5921 = vld [vmem:[%s10 + $0xd8] sm:$0xff]
        %v5922 = vld [vmem:[%s10 + $0xe0] sm:$0xff]
        %v5923 = vld [vmem:[%s10 + $0xe8] sm:$0xff]
        %v5924 = vld [vmem:[%s10 + $0xf0] sm:$0xff]
        %v5925 = vld [vmem:[%s10 + $0xf8] sm:$0xff]
        %v5926 = vld [vmem:[%s10 + $0x100] sm:$0xff]
        %v5927 = vld [vmem:[%s10 + $0x108] sm:$0xff]
        %v5928 = vld [vmem:[%s10 + $0x110] sm:$0xff]
        %v5929 = vld [vmem:[%s10 + $0x118] sm:$0xff]
        %v5930 = vld [vmem:[%s10 + $0x120] sm:$0xff]
        %v5931 = vld [vmem:[%s10 + $0x128] sm:$0xff]
        %v5932 = vld [vmem:[%s10 + $0x130] sm:$0xff]
        %v5933 = vld [vmem:[%s10 + $0x138] sm:$0xff]
        %v5934 = vld [vmem:[%s10 + $0x140] sm:$0xff]
        %v5935 = vld [vmem:[%s10 + $0x148] sm:$0xff]
        %v5936 = vld [vmem:[%s10 + $0x150] sm:$0xff]
        %v5937 = vld [vmem:[%s10 + $0x158] sm:$0xff]
        %v5938 = vld [vmem:[%s10 + $0x160] sm:$0xff]
        %v5939 = vld [vmem:[%s10 + $0x168] sm:$0xff]
        %v5940 = vld [vmem:[%s10 + $0x170] sm:$0xff]
        %v5941 = vld [vmem:[%s10 + $0x178] sm:$0xff]
        %v5942 = vld [vmem:[%s10 + $0x180] sm:$0xff]
        %v5943 = vld [vmem:[%s10 + $0x188] sm:$0xff]
        %v5944 = vld [vmem:[%s10 + $0x190] sm:$0xff]
        %v5945 = vld [vmem:[%s10 + $0x198] sm:$0xff]
        %v5946 = vld [vmem:[%s10 + $0x1a0] sm:$0xff]
        %v5947 = vld [vmem:[%s10 + $0x1a8] sm:$0xff]
        %v5948 = vld [vmem:[%s10 + $0x1b0] sm:$0xff]
        %v5949 = vld [vmem:[%s10 + $0x1b8] sm:$0xff]
        %v5950 = vld [vmem:[%s10 + $0x1c0] sm:$0xff]
        %v5951 = vld [vmem:[%s10 + $0x1c8] sm:$0xff]
        %v5952 = vld [vmem:[%s10 + $0x1d0] sm:$0xff]
        %v5953 = vld [vmem:[%s10 + $0x1d8] sm:$0xff]
        %v5954 = vld [vmem:[%s10 + $0x1e0] sm:$0xff]
        %v5955 = vld [vmem:[%s10 + $0x1e8] sm:$0xff]
        %v5956 = vld [vmem:[%s10 + $0x1f0] sm:$0xff]
        %v5957 = vld [vmem:[%s10 + $0x1f8] sm:$0xff]
        %v5958 = vld [vmem:[%s11] sm:$0x3]
        %v5960 = vlaneseq
        %v5961 = vshrl.u32 %v5960, 7
        %v5962 = vsub.s32 0, %v5961
        %v5963 = vrot.slane %v5958, %v5962
        %v5964 = vlaneseq
        %v5965 = vshrl.u32 %v5964, 7
        %v5966 = vsub.s32 1, %v5965
        %v5967 = vrot.slane %v5958, %v5966
        %v6034 = vunpack.c.l.b16 %v5894
        %v6035 = vunpack.c.h.b16 %v5894
        %v6036 = vunpack.c.l.b16 %v5895
        %v6037 = vunpack.c.h.b16 %v5895
        %v6038 = vunpack.c.l.b16 %v5896
        %v6039 = vunpack.c.h.b16 %v5896
        %v6040 = vunpack.c.l.b16 %v5897
        %v6041 = vunpack.c.h.b16 %v5897
        %v6042 = vunpack.c.l.b16 %v5898
        %v6043 = vunpack.c.h.b16 %v5898
        %v6044 = vunpack.c.l.b16 %v5899
        %v6045 = vunpack.c.h.b16 %v5899
        %v6046 = vunpack.c.l.b16 %v5900
        %v6047 = vunpack.c.h.b16 %v5900
        %v6048 = vunpack.c.l.b16 %v5901
        %v6049 = vunpack.c.h.b16 %v5901
        %v6050 = vunpack.c.l.b16 %v5902
        %v6051 = vunpack.c.h.b16 %v5902
        %v6052 = vunpack.c.l.b16 %v5903
        %v6053 = vunpack.c.h.b16 %v5903
        %v6054 = vunpack.c.l.b16 %v5904
        %v6055 = vunpack.c.h.b16 %v5904
        %v6056 = vunpack.c.l.b16 %v5905
        %v6057 = vunpack.c.h.b16 %v5905
        %v6058 = vunpack.c.l.b16 %v5906
        %v6059 = vunpack.c.h.b16 %v5906
        %v6060 = vunpack.c.l.b16 %v5907
        %v6061 = vunpack.c.h.b16 %v5907
        %v6062 = vunpack.c.l.b16 %v5908
        %v6063 = vunpack.c.h.b16 %v5908
        %v6064 = vunpack.c.l.b16 %v5909
        %v6065 = vunpack.c.h.b16 %v5909
        %v6066 = vunpack.c.l.b16 %v5910
        %v6067 = vunpack.c.h.b16 %v5910
        %v6068 = vunpack.c.l.b16 %v5911
        %v6069 = vunpack.c.h.b16 %v5911
        %v6070 = vunpack.c.l.b16 %v5912
        %v6071 = vunpack.c.h.b16 %v5912
        %v6072 = vunpack.c.l.b16 %v5913
        %v6073 = vunpack.c.h.b16 %v5913
        %v6074 = vunpack.c.l.b16 %v5914
        %v6075 = vunpack.c.h.b16 %v5914
        %v6076 = vunpack.c.l.b16 %v5915
        %v6077 = vunpack.c.h.b16 %v5915
        %v6078 = vunpack.c.l.b16 %v5916
        %v6079 = vunpack.c.h.b16 %v5916
        %v6080 = vunpack.c.l.b16 %v5917
        %v6081 = vunpack.c.h.b16 %v5917
        %v6082 = vunpack.c.l.b16 %v5918
        %v6083 = vunpack.c.h.b16 %v5918
        %v6084 = vunpack.c.l.b16 %v5919
        %v6085 = vunpack.c.h.b16 %v5919
        %v6086 = vunpack.c.l.b16 %v5920
        %v6087 = vunpack.c.h.b16 %v5920
        %v6088 = vunpack.c.l.b16 %v5921
        %v6089 = vunpack.c.h.b16 %v5921
        %v6090 = vunpack.c.l.b16 %v5922
        %v6091 = vunpack.c.h.b16 %v5922
        %v6092 = vunpack.c.l.b16 %v5923
        %v6093 = vunpack.c.h.b16 %v5923
        %v6094 = vunpack.c.l.b16 %v5924
        %v6095 = vunpack.c.h.b16 %v5924
        %v6096 = vunpack.c.l.b16 %v5925
        %v6097 = vunpack.c.h.b16 %v5925
        %v6098 = vunpack.c.l.b16 %v5926
        %v6099 = vunpack.c.h.b16 %v5926
        %v6100 = vunpack.c.l.b16 %v5927
        %v6101 = vunpack.c.h.b16 %v5927
        %v6102 = vunpack.c.l.b16 %v5928
        %v6103 = vunpack.c.h.b16 %v5928
        %v6104 = vunpack.c.l.b16 %v5929
        %v6105 = vunpack.c.h.b16 %v5929
        %v6106 = vunpack.c.l.b16 %v5930
        %v6107 = vunpack.c.h.b16 %v5930
        %v6108 = vunpack.c.l.b16 %v5931
        %v6109 = vunpack.c.h.b16 %v5931
        %v6110 = vunpack.c.l.b16 %v5932
        %v6111 = vunpack.c.h.b16 %v5932
        %v6112 = vunpack.c.l.b16 %v5933
        %v6113 = vunpack.c.h.b16 %v5933
        %v6114 = vunpack.c.l.b16 %v5934
        %v6115 = vunpack.c.h.b16 %v5934
        %v6116 = vunpack.c.l.b16 %v5935
        %v6117 = vunpack.c.h.b16 %v5935
        %v6118 = vunpack.c.l.b16 %v5936
        %v6119 = vunpack.c.h.b16 %v5936
        %v6120 = vunpack.c.l.b16 %v5937
        %v6121 = vunpack.c.h.b16 %v5937
        %v6122 = vunpack.c.l.b16 %v5938
        %v6123 = vunpack.c.h.b16 %v5938
        %v6124 = vunpack.c.l.b16 %v5939
        %v6125 = vunpack.c.h.b16 %v5939
        %v6126 = vunpack.c.l.b16 %v5940
        %v6127 = vunpack.c.h.b16 %v5940
        %v6128 = vunpack.c.l.b16 %v5941
        %v6129 = vunpack.c.h.b16 %v5941
        %v6130 = vunpack.c.l.b16 %v5942
        %v6131 = vunpack.c.h.b16 %v5942
        %v6132 = vunpack.c.l.b16 %v5943
        %v6133 = vunpack.c.h.b16 %v5943
        %v6134 = vunpack.c.l.b16 %v5944
        %v6135 = vunpack.c.h.b16 %v5944
        %v6136 = vunpack.c.l.b16 %v5945
        %v6137 = vunpack.c.h.b16 %v5945
        %v6138 = vunpack.c.l.b16 %v5946
        %v6139 = vunpack.c.h.b16 %v5946
        %v6140 = vunpack.c.l.b16 %v5947
        %v6141 = vunpack.c.h.b16 %v5947
        %v6142 = vunpack.c.l.b16 %v5948
        %v6143 = vunpack.c.h.b16 %v5948
        %v6144 = vunpack.c.l.b16 %v5949
        %v6145 = vunpack.c.h.b16 %v5949
        %v6146 = vunpack.c.l.b16 %v5950
        %v6147 = vunpack.c.h.b16 %v5950
        %v6148 = vunpack.c.l.b16 %v5951
        %v6149 = vunpack.c.h.b16 %v5951
        %v6150 = vunpack.c.l.b16 %v5952
        %v6151 = vunpack.c.h.b16 %v5952
        %v6152 = vunpack.c.l.b16 %v5953
        %v6153 = vunpack.c.h.b16 %v5953
        %v6154 = vunpack.c.l.b16 %v5954
        %v6155 = vunpack.c.h.b16 %v5954
        %v6156 = vunpack.c.l.b16 %v5955
        %v6157 = vunpack.c.h.b16 %v5955
        %v6158 = vunpack.c.l.b16 %v5956
        %v6159 = vunpack.c.h.b16 %v5956
        %v6160 = vunpack.c.l.b16 %v5957
        %v6161 = vunpack.c.h.b16 %v5957
        %v6162 = vpack.c.b16 %v6036, %v6034
        %v6163 = vpack.c.b16 %v6037, %v6035
        %v6164 = vpack.c.b16 %v6040, %v6038
        %v6165 = vpack.c.b16 %v6041, %v6039
        %v6166 = vpack.c.b16 %v6044, %v6042
        %v6167 = vpack.c.b16 %v6045, %v6043
        %v6168 = vpack.c.b16 %v6048, %v6046
        %v6169 = vpack.c.b16 %v6049, %v6047
        %v6170 = vpack.c.b16 %v6052, %v6050
        %v6171 = vpack.c.b16 %v6053, %v6051
        %v6172 = vpack.c.b16 %v6056, %v6054
        %v6173 = vpack.c.b16 %v6057, %v6055
        %v6174 = vpack.c.b16 %v6060, %v6058
        %v6175 = vpack.c.b16 %v6061, %v6059
        %v6176 = vpack.c.b16 %v6064, %v6062
        %v6177 = vpack.c.b16 %v6065, %v6063
        %v6178 = vpack.c.b16 %v6068, %v6066
        %v6179 = vpack.c.b16 %v6069, %v6067
        %v6180 = vpack.c.b16 %v6072, %v6070
        %v6181 = vpack.c.b16 %v6073, %v6071
        %v6182 = vpack.c.b16 %v6076, %v6074
        %v6183 = vpack.c.b16 %v6077, %v6075
        %v6184 = vpack.c.b16 %v6080, %v6078
        %v6185 = vpack.c.b16 %v6081, %v6079
        %v6186 = vpack.c.b16 %v6084, %v6082
        %v6187 = vpack.c.b16 %v6085, %v6083
        %v6188 = vpack.c.b16 %v6088, %v6086
        %v6189 = vpack.c.b16 %v6089, %v6087
        %v6190 = vpack.c.b16 %v6092, %v6090
        %v6191 = vpack.c.b16 %v6093, %v6091
        %v6192 = vpack.c.b16 %v6096, %v6094
        %v6193 = vpack.c.b16 %v6097, %v6095
        %v6194 = vpack.c.b16 %v6100, %v6098
        %v6195 = vpack.c.b16 %v6101, %v6099
        %v6196 = vpack.c.b16 %v6104, %v6102
        %v6197 = vpack.c.b16 %v6105, %v6103
        %v6198 = vpack.c.b16 %v6108, %v6106
        %v6199 = vpack.c.b16 %v6109, %v6107
        %v6200 = vpack.c.b16 %v6112, %v6110
        %v6201 = vpack.c.b16 %v6113, %v6111
        %v6202 = vpack.c.b16 %v6116, %v6114
        %v6203 = vpack.c.b16 %v6117, %v6115
        %v6204 = vpack.c.b16 %v6120, %v6118
        %v6205 = vpack.c.b16 %v6121, %v6119
        %v6206 = vpack.c.b16 %v6124, %v6122
        %v6207 = vpack.c.b16 %v6125, %v6123
        %v6208 = vpack.c.b16 %v6128, %v6126
        %v6209 = vpack.c.b16 %v6129, %v6127
        %v6210 = vpack.c.b16 %v6132, %v6130
        %v6211 = vpack.c.b16 %v6133, %v6131
        %v6212 = vpack.c.b16 %v6136, %v6134
        %v6213 = vpack.c.b16 %v6137, %v6135
        %v6214 = vpack.c.b16 %v6140, %v6138
        %v6215 = vpack.c.b16 %v6141, %v6139
        %v6216 = vpack.c.b16 %v6144, %v6142
        %v6217 = vpack.c.b16 %v6145, %v6143
        %v6218 = vpack.c.b16 %v6148, %v6146
        %v6219 = vpack.c.b16 %v6149, %v6147
        %v6220 = vpack.c.b16 %v6152, %v6150
        %v6221 = vpack.c.b16 %v6153, %v6151
        %v6222 = vpack.c.b16 %v6156, %v6154
        %v6223 = vpack.c.b16 %v6157, %v6155
        %v6224 = vpack.c.b16 %v6160, %v6158
        %v6225 = vpack.c.b16 %v6161, %v6159
        %6290 = vmatprep.subr.bf16.mxu0 %v6163
        %6291 = vmatpush1.bf16.msra.mxu0 %v6162
        %6292 = vmatprep.subr.bf16.mxu0 %v6165
        %6293 = vmatpush1.bf16.msra.mxu0 %v6164
        %6294 = vmatprep.subr.bf16.mxu0 %v6167
        %6295 = vmatpush1.bf16.msra.mxu0 %v6166
        %6296 = vmatprep.subr.bf16.mxu0 %v6169
        %6297 = vmatpush1.bf16.msra.mxu0 %v6168
        %6298 = vmatprep.subr.bf16.mxu0 %v6171
        %6299 = vmatpush1.bf16.msra.mxu0 %v6170
        %6300 = vmatprep.subr.bf16.mxu0 %v6173
        %6301 = vmatpush1.bf16.msra.mxu0 %v6172
        %6302 = vmatprep.subr.bf16.mxu0 %v6175
        %6303 = vmatpush1.bf16.msra.mxu0 %v6174
        %6304 = vmatprep.subr.bf16.mxu0 %v6177
        %6305 = vmatpush1.bf16.msra.mxu0 %v6176
        %6306 = vmatprep.subr.bf16.mxu0 %v6179
        %6307 = vmatpush1.bf16.msra.mxu0 %v6178
        %6308 = vmatprep.subr.bf16.mxu0 %v6181
        %6309 = vmatpush1.bf16.msra.mxu0 %v6180
        %6310 = vmatprep.subr.bf16.mxu0 %v6183
        %6311 = vmatpush1.bf16.msra.mxu0 %v6182
        %6312 = vmatprep.subr.bf16.mxu0 %v6185
        %6313 = vmatpush1.bf16.msra.mxu0 %v6184
        %6314 = vmatprep.subr.bf16.mxu0 %v6187
        %6315 = vmatpush1.bf16.msra.mxu0 %v6186
        %6316 = vmatprep.subr.bf16.mxu0 %v6189
        %6317 = vmatpush1.bf16.msra.mxu0 %v6188
        %6318 = vmatprep.subr.bf16.mxu0 %v6191
        %6319 = vmatpush1.bf16.msra.mxu0 %v6190
        %6320 = vmatprep.subr.bf16.mxu0 %v6193
        %6321 = vmatpush1.bf16.msra.mxu0 %v6192
        %6322 = vmatprep.mubr.bf16.mxu0 %v5863
        %6323 = vmatmul.mubr.bf16.gmra.mrb[0].mxu0 %v5862
        %v6324 = vpop.f32.mrb[0].mxu0
        %v6325 = vadd.f32 %v5963, %v6324
        %v6326 = vpop.f32.mrb[0].mxu0
        %v6327 = vadd.f32 %v5967, %v6326
        %v6328 = vpop.f32.mrb[0].mxu0
        %v6329 = vadd.f32 %v5963, %v6328
        %v6330 = vpop.f32.mrb[0].mxu0
        %v6331 = vadd.f32 %v5967, %v6330
        %6332 = vmatprep.mubr.bf16.mxu0 %v5867
        %6333 = vmatmul.mubr.bf16.gmra.mrb[0].mxu0 %v5866
        %v6334 = vpop.f32.mrb[0].mxu0
        %v6335 = vadd.f32 %v5963, %v6334
        %v6336 = vpop.f32.mrb[0].mxu0
        %v6337 = vadd.f32 %v5967, %v6336
        %v6338 = vpop.f32.mrb[0].mxu0
        %v6339 = vadd.f32 %v5963, %v6338
        %v6340 = vpop.f32.mrb[0].mxu0
        %v6341 = vadd.f32 %v5967, %v6340
        %6342 = vmatprep.mubr.bf16.mxu0 %v5871
        %6343 = vmatmul.mubr.bf16.gmra.mrb[0].mxu0 %v5870
        %v6344 = vpop.f32.mrb[0].mxu0
        %v6345 = vadd.f32 %v5963, %v6344
        %v6346 = vpop.f32.mrb[0].mxu0
        %v6347 = vadd.f32 %v5967, %v6346
        %v6348 = vpop.f32.mrb[0].mxu0
        %v6349 = vadd.f32 %v5963, %v6348
        %v6350 = vpop.f32.mrb[0].mxu0
        %v6351 = vadd.f32 %v5967, %v6350
        %6352 = vmatprep.mubr.bf16.mxu0 %v5875
        %6353 = vmatmul.mubr.bf16.gmra.mrb[0].mxu0 %v5874
        %v6354 = vpop.f32.mrb[0].mxu0
        %v6355 = vadd.f32 %v5963, %v6354
        %v6356 = vpop.f32.mrb[0].mxu0
        %v6357 = vadd.f32 %v5967, %v6356
        %v6358 = vpop.f32.mrb[0].mxu0
        %v6359 = vadd.f32 %v5963, %v6358
        %v6360 = vpop.f32.mrb[0].mxu0
        %v6361 = vadd.f32 %v5967, %v6360
        %6362 = vmatprep.mubr.bf16.mxu0 %v5879
        %6363 = vmatmul.mubr.bf16.gmra.mrb[0].mxu0 %v5878
        %v6364 = vpop.f32.mrb[0].mxu0
        %v6365 = vadd.f32 %v5963, %v6364
        %v6366 = vpop.f32.mrb[0].mxu0
        %v6367 = vadd.f32 %v5967, %v6366
        %v6368 = vpop.f32.mrb[0].mxu0
        %v6369 = vadd.f32 %v5963, %v6368
        %v6370 = vpop.f32.mrb[0].mxu0
        %v6371 = vadd.f32 %v5967, %v6370
        %6372 = vmatprep.mubr.bf16.mxu0 %v5883
        %6373 = vmatmul.mubr.bf16.gmra.mrb[0].mxu0 %v5882
        %v6374 = vpop.f32.mrb[0].mxu0
        %v6375 = vadd.f32 %v5963, %v6374
        %v6376 = vpop.f32.mrb[0].mxu0
        %v6377 = vadd.f32 %v5967, %v6376
        %v6378 = vpop.f32.mrb[0].mxu0
        %v6379 = vadd.f32 %v5963, %v6378
        %v6380 = vpop.f32.mrb[0].mxu0
        %v6381 = vadd.f32 %v5967, %v6380
        %6382 = vmatprep.mubr.bf16.mxu0 %v5887
        %6383 = vmatmul.mubr.bf16.gmra.mrb[0].mxu0 %v5886
        %v6384 = vpop.f32.mrb[0].mxu0
        %v6385 = vadd.f32 %v5963, %v6384
        %v6386 = vpop.f32.mrb[0].mxu0
        %v6387 = vadd.f32 %v5967, %v6386
        %v6388 = vpop.f32.mrb[0].mxu0
        %v6389 = vadd.f32 %v5963, %v6388
        %v6390 = vpop.f32.mrb[0].mxu0
        %v6391 = vadd.f32 %v5967, %v6390
        %6392 = vmatprep.mubr.bf16.mxu0 %v5891
        %6393 = vmatmul.mubr.bf16.gmra.mrb[0].mxu0 %v5890
        %v6394 = vpop.f32.mrb[0].mxu0
        %v6395 = vadd.f32 %v5963, %v6394
        %v6396 = vpop.f32.mrb[0].mxu0
        %v6397 = vadd.f32 %v5967, %v6396
        %v6398 = vpop.f32.mrb[0].mxu0
        %v6399 = vadd.f32 %v5963, %v6398
        %v6400 = vpop.f32.mrb[0].mxu0
        %v6401 = vadd.f32 %v5967, %v6400
        %6402 = vdwg.mxu0
        %6403 = vmatprep.subr.bf16.mxu0 %v6195
        %6404 = vmatpush1.bf16.msra.mxu0 %v6194
        %6405 = vmatprep.subr.bf16.mxu0 %v6197
        %6406 = vmatpush1.bf16.msra.mxu0 %v6196
        %6407 = vmatprep.subr.bf16.mxu0 %v6199
        %6408 = vmatpush1.bf16.msra.mxu0 %v6198
        %6409 = vmatprep.subr.bf16.mxu0 %v6201
        %6410 = vmatpush1.bf16.msra.mxu0 %v6200
        %6411 = vmatprep.subr.bf16.mxu0 %v6203
        %6412 = vmatpush1.bf16.msra.mxu0 %v6202
        %6413 = vmatprep.subr.bf16.mxu0 %v6205
        %6414 = vmatpush1.bf16.msra.mxu0 %v6204
        %6415 = vmatprep.subr.bf16.mxu0 %v6207
        %6416 = vmatpush1.bf16.msra.mxu0 %v6206
        %6417 = vmatprep.subr.bf16.mxu0 %v6209
        %6418 = vmatpush1.bf16.msra.mxu0 %v6208
        %6419 = vmatprep.subr.bf16.mxu0 %v6211
        %6420 = vmatpush1.bf16.msra.mxu0 %v6210
        %6421 = vmatprep.subr.bf16.mxu0 %v6213
        %6422 = vmatpush1.bf16.msra.mxu0 %v6212
        %6423 = vmatprep.subr.bf16.mxu0 %v6215
        %6424 = vmatpush1.bf16.msra.mxu0 %v6214
        %6425 = vmatprep.subr.bf16.mxu0 %v6217
        %6426 = vmatpush1.bf16.msra.mxu0 %v6216
        %6427 = vmatprep.subr.bf16.mxu0 %v6219
        %6428 = vmatpush1.bf16.msra.mxu0 %v6218
        %6429 = vmatprep.subr.bf16.mxu0 %v6221
        %6430 = vmatpush1.bf16.msra.mxu0 %v6220
        %6431 = vmatprep.subr.bf16.mxu0 %v6223
        %6432 = vmatpush1.bf16.msra.mxu0 %v6222
        %6433 = vmatprep.subr.bf16.mxu0 %v6225
        %6434 = vmatpush1.bf16.msra.mxu0 %v6224
        %6435 = vmatprep.mubr.bf16.mxu0 %v5865
        %6436 = vmatmul.mubr.bf16.gmra.mrb[0].mxu0 %v5864
        %v6437 = vpop.f32.mrb[0].mxu0
        %v6438 = vadd.f32 %v6325, %v6437
        %v6439 = vpop.f32.mrb[0].mxu0
        %v6440 = vadd.f32 %v6327, %v6439
        %v6441 = vpop.f32.mrb[0].mxu0
        %v6442 = vadd.f32 %v6329, %v6441
        %v6443 = vpop.f32.mrb[0].mxu0
        %v6444 = vadd.f32 %v6331, %v6443
        %6445 = vmatprep.mubr.bf16.mxu0 %v5869
        %6446 = vmatmul.mubr.bf16.gmra.mrb[0].mxu0 %v5868
        %v6447 = vpop.f32.mrb[0].mxu0
        %v6448 = vadd.f32 %v6335, %v6447
        %v6449 = vpop.f32.mrb[0].mxu0
        %v6450 = vadd.f32 %v6337, %v6449
        %v6451 = vpop.f32.mrb[0].mxu0
        %v6452 = vadd.f32 %v6339, %v6451
        %v6453 = vpop.f32.mrb[0].mxu0
        %v6454 = vadd.f32 %v6341, %v6453
        %6455 = vmatprep.mubr.bf16.mxu0 %v5873
        %6456 = vmatmul.mubr.bf16.gmra.mrb[0].mxu0 %v5872
        %v6457 = vpop.f32.mrb[0].mxu0
        %v6458 = vadd.f32 %v6345, %v6457
        %v6459 = vpop.f32.mrb[0].mxu0
        %v6460 = vadd.f32 %v6347, %v6459
        %v6461 = vpop.f32.mrb[0].mxu0
        %v6462 = vadd.f32 %v6349, %v6461
        %v6463 = vpop.f32.mrb[0].mxu0
        %v6464 = vadd.f32 %v6351, %v6463
        %6465 = vmatprep.mubr.bf16.mxu0 %v5877
        %6466 = vmatmul.mubr.bf16.gmra.mrb[0].mxu0 %v5876
        %v6467 = vpop.f32.mrb[0].mxu0
        %v6468 = vadd.f32 %v6355, %v6467
        %v6469 = vpop.f32.mrb[0].mxu0
        %v6470 = vadd.f32 %v6357, %v6469
        %v6471 = vpop.f32.mrb[0].mxu0
        %v6472 = vadd.f32 %v6359, %v6471
        %v6473 = vpop.f32.mrb[0].mxu0
        %v6474 = vadd.f32 %v6361, %v6473
        %6475 = vmatprep.mubr.bf16.mxu0 %v5881
        %6476 = vmatmul.mubr.bf16.gmra.mrb[0].mxu0 %v5880
        %v6477 = vpop.f32.mrb[0].mxu0
        %v6478 = vadd.f32 %v6365, %v6477
        %v6479 = vpop.f32.mrb[0].mxu0
        %v6480 = vadd.f32 %v6367, %v6479
        %v6481 = vpop.f32.mrb[0].mxu0
        %v6482 = vadd.f32 %v6369, %v6481
        %v6483 = vpop.f32.mrb[0].mxu0
        %v6484 = vadd.f32 %v6371, %v6483
        %6485 = vmatprep.mubr.bf16.mxu0 %v5885
        %6486 = vmatmul.mubr.bf16.gmra.mrb[0].mxu0 %v5884
        %v6487 = vpop.f32.mrb[0].mxu0
        %v6488 = vadd.f32 %v6375, %v6487
        %v6489 = vpop.f32.mrb[0].mxu0
        %v6490 = vadd.f32 %v6377, %v6489
        %v6491 = vpop.f32.mrb[0].mxu0
        %v6492 = vadd.f32 %v6379, %v6491
        %v6493 = vpop.f32.mrb[0].mxu0
        %v6494 = vadd.f32 %v6381, %v6493
        %6495 = vmatprep.mubr.bf16.mxu0 %v5889
        %6496 = vmatmul.mubr.bf16.gmra.mrb[0].mxu0 %v5888
        %v6497 = vpop.f32.mrb[0].mxu0
        %v6498 = vadd.f32 %v6385, %v6497
        %v6499 = vpop.f32.mrb[0].mxu0
        %v6500 = vadd.f32 %v6387, %v6499
        %v6501 = vpop.f32.mrb[0].mxu0
        %v6502 = vadd.f32 %v6389, %v6501
        %v6503 = vpop.f32.mrb[0].mxu0
        %v6504 = vadd.f32 %v6391, %v6503
        %6505 = vmatprep.mubr.bf16.mxu0 %v5893
        %6506 = vmatmul.mubr.bf16.gmra.mrb[0].mxu0 %v5892
        %v6507 = vpop.f32.mrb[0].mxu0
        %v6508 = vadd.f32 %v6395, %v6507
        %v6509 = vpop.f32.mrb[0].mxu0
        %v6510 = vadd.f32 %v6397, %v6509
        %v6511 = vpop.f32.mrb[0].mxu0
        %v6512 = vadd.f32 %v6399, %v6511
        %v6513 = vpop.f32.mrb[0].mxu0
        %v6514 = vadd.f32 %v6401, %v6513
        %6515 = vdwg.mxu0
        %v6516 = vmax.f32 %v6438, 0.0
        %v6517 = vmax.f32 %v6440, 0.0
        %v6518 = vmax.f32 %v6442, 0.0
        %v6519 = vmax.f32 %v6444, 0.0
        %v6520 = vmax.f32 %v6448, 0.0
        %v6521 = vmax.f32 %v6450, 0.0
        %v6522 = vmax.f32 %v6452, 0.0
        %v6523 = vmax.f32 %v6454, 0.0
        %v6524 = vmax.f32 %v6458, 0.0
        %v6525 = vmax.f32 %v6460, 0.0
        %v6526 = vmax.f32 %v6462, 0.0
        %v6527 = vmax.f32 %v6464, 0.0
        %v6528 = vmax.f32 %v6468, 0.0
        %v6529 = vmax.f32 %v6470, 0.0
        %v6530 = vmax.f32 %v6472, 0.0
        %v6531 = vmax.f32 %v6474, 0.0
        %v6532 = vmax.f32 %v6478, 0.0
        %v6533 = vmax.f32 %v6480, 0.0
        %v6534 = vmax.f32 %v6482, 0.0
        %v6535 = vmax.f32 %v6484, 0.0
        %v6536 = vmax.f32 %v6488, 0.0
        %v6537 = vmax.f32 %v6490, 0.0
        %v6538 = vmax.f32 %v6492, 0.0
        %v6539 = vmax.f32 %v6494, 0.0
        %v6540 = vmax.f32 %v6498, 0.0
        %v6541 = vmax.f32 %v6500, 0.0
        %v6542 = vmax.f32 %v6502, 0.0
        %v6543 = vmax.f32 %v6504, 0.0
        %v6544 = vmax.f32 %v6508, 0.0
        %v6545 = vmax.f32 %v6510, 0.0
        %v6546 = vmax.f32 %v6512, 0.0
        %v6547 = vmax.f32 %v6514, 0.0
        %6548 = vst [vmem:[%s513] sm:$0xff] %v5334
        %6549 = vst [vmem:[%s513 + $0x8] sm:$0xff] %v5335
        %6550 = vst [vmem:[%s513 + $0x10] sm:$0xff] %v5336
        %6551 = vst [vmem:[%s513 + $0x18] sm:$0xff] %v5337
        %6552 = vst [vmem:[%s513 + $0x20] sm:$0xff] %v5338
        %6553 = vst [vmem:[%s513 + $0x28] sm:$0xff] %v5339
        %6554 = vst [vmem:[%s513 + $0x30] sm:$0xff] %v5340
        %6555 = vst [vmem:[%s513 + $0x38] sm:$0xff] %v5341
        %6556 = vst [vmem:[%s513 + $0x40] sm:$0xff] %v5342
        %6557 = vst [vmem:[%s513 + $0x48] sm:$0xff] %v5343
        %6558 = vst [vmem:[%s513 + $0x50] sm:$0xff] %v5344
        %6559 = vst [vmem:[%s513 + $0x58] sm:$0xff] %v5345
        %6560 = vst [vmem:[%s513 + $0x60] sm:$0xff] %v5346
        %6561 = vst [vmem:[%s513 + $0x68] sm:$0xff] %v5347
        %6562 = vst [vmem:[%s513 + $0x70] sm:$0xff] %v5348
        %6563 = vst [vmem:[%s513 + $0x78] sm:$0xff] %v5349
        %6564 = vst [vmem:[%s487] sm:$0xff] %v6516
        %6565 = vst [vmem:[%s487 + $0x8] sm:$0xff] %v6517
        %6566 = vst [vmem:[%s487 + $0x10] sm:$0xff] %v6518
        %6567 = vst [vmem:[%s487 + $0x18] sm:$0xff] %v6519
        %6568 = vst [vmem:[%s487 + $0x20] sm:$0xff] %v6520
        %6569 = vst [vmem:[%s487 + $0x28] sm:$0xff] %v6521
        %6570 = vst [vmem:[%s487 + $0x30] sm:$0xff] %v6522
        %6571 = vst [vmem:[%s487 + $0x38] sm:$0xff] %v6523
        %6572 = vst [vmem:[%s487 + $0x40] sm:$0xff] %v6524
        %6573 = vst [vmem:[%s487 + $0x48] sm:$0xff] %v6525
        %6574 = vst [vmem:[%s487 + $0x50] sm:$0xff] %v6526
        %6575 = vst [vmem:[%s487 + $0x58] sm:$0xff] %v6527
        %6576 = vst [vmem:[%s487 + $0x60] sm:$0xff] %v6528
        %6577 = vst [vmem:[%s487 + $0x68] sm:$0xff] %v6529
        %6578 = vst [vmem:[%s487 + $0x70] sm:$0xff] %v6530
        %6579 = vst [vmem:[%s487 + $0x78] sm:$0xff] %v6531
        %6580 = vst [vmem:[%s487 + $0x80] sm:$0xff] %v6532
        %6581 = vst [vmem:[%s487 + $0x88] sm:$0xff] %v6533
        %6582 = vst [vmem:[%s487 + $0x90] sm:$0xff] %v6534
        %6583 = vst [vmem:[%s487 + $0x98] sm:$0xff] %v6535
        %6584 = vst [vmem:[%s487 + $0xa0] sm:$0xff] %v6536
        %6585 = vst [vmem:[%s487 + $0xa8] sm:$0xff] %v6537
        %6586 = vst [vmem:[%s487 + $0xb0] sm:$0xff] %v6538
        %6587 = vst [vmem:[%s487 + $0xb8] sm:$0xff] %v6539
        %6588 = vst [vmem:[%s487 + $0xc0] sm:$0xff] %v6540
        %6589 = vst [vmem:[%s487 + $0xc8] sm:$0xff] %v6541
        %6590 = vst [vmem:[%s487 + $0xd0] sm:$0xff] %v6542
        %6591 = vst [vmem:[%s487 + $0xd8] sm:$0xff] %v6543
        %6592 = vst [vmem:[%s487 + $0xe0] sm:$0xff] %v6544
        %6593 = vst [vmem:[%s487 + $0xe8] sm:$0xff] %v6545
        %6594 = vst [vmem:[%s487 + $0xf0] sm:$0xff] %v6546
        %6595 = vst [vmem:[%s487 + $0xf8] sm:$0xff] %v6547
        %6596 = vst [vmem:[%s521] sm:$0xff] %v5176
        %6597 = vst [vmem:[%s521 + $0x8] sm:$0xff] %v5178
        %6598 = vst [vmem:[%s521 + $0x10] sm:$0xff] %v5180
        %6599 = vst [vmem:[%s521 + $0x18] sm:$0xff] %v5182
        %6600 = vst [vmem:[%s521 + $0x20] sm:$0xff] %v5186
        %6601 = vst [vmem:[%s521 + $0x28] sm:$0xff] %v5188
        %6602 = vst [vmem:[%s521 + $0x30] sm:$0xff] %v5190
        %6603 = vst [vmem:[%s521 + $0x38] sm:$0xff] %v5192
        %6604 = vst [vmem:[%s521 + $0x40] sm:$0xff] %v5196
        %6605 = vst [vmem:[%s521 + $0x48] sm:$0xff] %v5198
        %6606 = vst [vmem:[%s521 + $0x50] sm:$0xff] %v5200
        %6607 = vst [vmem:[%s521 + $0x58] sm:$0xff] %v5202
        %6608 = vst [vmem:[%s521 + $0x60] sm:$0xff] %v5206
        %6609 = vst [vmem:[%s521 + $0x68] sm:$0xff] %v5208
        %6610 = vst [vmem:[%s521 + $0x70] sm:$0xff] %v5210
        %6611 = vst [vmem:[%s521 + $0x78] sm:$0xff] %v5212
        %6612 = vst [vmem:[%s521 + $0x80] sm:$0xff] %v5216
        %6613 = vst [vmem:[%s521 + $0x88] sm:$0xff] %v5218
        %6614 = vst [vmem:[%s521 + $0x90] sm:$0xff] %v5220
        %6615 = vst [vmem:[%s521 + $0x98] sm:$0xff] %v5222
        %6616 = vst [vmem:[%s521 + $0xa0] sm:$0xff] %v5226
        %6617 = vst [vmem:[%s521 + $0xa8] sm:$0xff] %v5228
        %6618 = vst [vmem:[%s521 + $0xb0] sm:$0xff] %v5230
        %6619 = vst [vmem:[%s521 + $0xb8] sm:$0xff] %v5232
        %6620 = vst [vmem:[%s521 + $0xc0] sm:$0xff] %v5236
        %6621 = vst [vmem:[%s521 + $0xc8] sm:$0xff] %v5238
        %6622 = vst [vmem:[%s521 + $0xd0] sm:$0xff] %v5240
        %6623 = vst [vmem:[%s521 + $0xd8] sm:$0xff] %v5242
        %6624 = vst [vmem:[%s521 + $0xe0] sm:$0xff] %v5246
        %6625 = vst [vmem:[%s521 + $0xe8] sm:$0xff] %v5248
        %6626 = vst [vmem:[%s521 + $0xf0] sm:$0xff] %v5250
        %6627 = vst [vmem:[%s521 + $0xf8] sm:$0xff] %v5252
        %s6628 = smul.u32 16, %s29
        %p6629 = scmp.lt.s32.totalorder %s6628, 31
        %s6630 = scalar_select %p6629, %s6628, 31
        %s6631 = smul.addr %s6630, 8
        %s6632 = scalar_lea.vmem %s12, %s6631
        %s6633 = sand.u32 %s325, 1
        %s6634 = scalar_lea.sflag [#allocation3], %s6633
        %s6635 = sand.u32 %s325, 1
        %s6636 = smul.addr %s6635, 256
        %s6637 = scalar_lea.vmem [#allocation2], %s6636
        %s6638 = smul.u32 16, %s29
        %p6639 = scmp.lt.s32.totalorder %s6638, 31
        %s6640 = scalar_select %p6639, %s6638, 31
        %s6641 = smul.addr %s6640, 2
        %s6642 = smul.addr %s6641, 8
        %s6643 = scalar_lea.vmem %s14, %s6642
        // Predicated region
        $region69: #{vae_forward.1} parent=67 // pred_check
          %p6644 = pneg %p309
        $region70: #{vae_forward.1} parent=67 // pred_check_branch
          %6646 = sbr.rel (%p6644) target = $region72
        $region71: #{vae_forward.1} parent=67 // pred_region
          %s6647 = smul.u32 16, %s29
        $region72: #{vae_forward.1} parent=67 // pred_fallthru
          _
        // Predicated region
        $region73: #{vae_forward.1} parent=67 // pred_check
          %p6648 = pneg %p335
        $region74: #{vae_forward.1} parent=67 // pred_check_branch
          %6650 = sbr.rel (%p6648) target = $region76
        $region75: #{vae_forward.1} parent=67 // pred_region
          %s6651 = smul.u32 16, %s29
          %s6653 = ssub.s32 4096, 4096
          %6654 = vsyncadd %s6634, %s6653
          %s6655 = smul.addr %s6651, 2
          %s6656 = smul.addr %s6655, 128
          %s6657 = scalar_lea.hbm %s13, %s6656
          %s6658 = sshll.u32 %s6637, 4
          %s6659 = int_to_ptr.vmem [resolvable:$true] %s6658
          %6664 = dma.vmem_to_hbm [thread:$0]  %s6659, 4096, %s6657, %s6634, 256, 256, 16
        $region76: #{vae_forward.1} parent=67 // pred_fallthru
          _
        // Predicated region
        $region77: #{vae_forward.1} parent=67 // pred_check
          %p6665 = pneg %p361
        $region78: #{vae_forward.1} parent=67 // pred_check_branch
          %6667 = sbr.rel (%p6665) target = $region80
        $region79: #{vae_forward.1} parent=67 // pred_region
          %s6668 = smul.u32 16, %s29
        $region80: #{vae_forward.1} parent=67 // pred_fallthru
          _
      $region68: #{vae_forward.1} parent=5 // pred_fallthru
        _
      %p6669 = scmp.le.s32.totalorder 2, %s24
      // Predicated region
      $region81: #{vae_forward.1} parent=5 // pred_check
        %p6670 = pneg %p6669
      $region82: #{vae_forward.1} parent=5 // pred_check_branch
        %6672 = sbr.rel (%p6670) target = $region84
      $region83: #{vae_forward.1} parent=5 // pred_region
        %s6673 = ssub.s32 %s24, 2
        // Predicated region
        $region85: #{vae_forward.1} parent=83 // pred_check
          %p6674 = pneg %p315
        $region86: #{vae_forward.1} parent=83 // pred_check_branch
          %6676 = sbr.rel (%p6674) target = $region88
        $region87: #{vae_forward.1} parent=83 // pred_region
          %s6677 = smul.u32 16, %s30
          %p6678 = scmp.lt.s32.totalorder %s6677, 31
          %s6679 = scalar_select %p6678, %s6677, 31
          %s6680 = smul.addr %s6679, 8
          %s6681 = scalar_lea.vmem %s12, %s6680
        $region88: #{vae_forward.1} parent=83 // pred_fallthru
          _
        // Predicated region
        $region89: #{vae_forward.1} parent=83 // pred_check
          %p6682 = pneg %p341
        $region90: #{vae_forward.1} parent=83 // pred_check_branch
          %6684 = sbr.rel (%p6682) target = $region92
        $region91: #{vae_forward.1} parent=83 // pred_region
          %s6685 = sand.u32 %s326, 1
          %s6686 = scalar_lea.sflag [#allocation3], %s6685
          %s6687 = sand.u32 %s326, 1
          %s6688 = smul.addr %s6687, 256
          %s6689 = scalar_lea.vmem [#allocation2], %s6688
          %6690 = dma.done %s6686, 4096
        $region92: #{vae_forward.1} parent=83 // pred_fallthru
          _
        // Predicated region
        $region93: #{vae_forward.1} parent=83 // pred_check
          %p6691 = pneg %p367
        $region94: #{vae_forward.1} parent=83 // pred_check_branch
          %6693 = sbr.rel (%p6691) target = $region96
        $region95: #{vae_forward.1} parent=83 // pred_region
          %s6694 = smul.u32 16, %s30
          %p6695 = scmp.lt.s32.totalorder %s6694, 31
          %s6696 = scalar_select %p6695, %s6694, 31
          %s6697 = smul.addr %s6696, 2
          %s6698 = smul.addr %s6697, 8
          %s6699 = scalar_lea.vmem %s14, %s6698
        $region96: #{vae_forward.1} parent=83 // pred_fallthru
          _
      $region84: #{vae_forward.1} parent=5 // pred_fallthru
        _
    $region6: #{vae_forward.1} parent=1 // loop_footer
      %s28 = sadd.s32 1, %s24
    $region7: #{vae_forward.1} parent=1 // loop_footer_branch
      %23 = sbr.rel target = $region3
    $region8: #{vae_forward.1} parent=1 // loop_exit
      _
    %6700 = vsyncpa [#allocation3], 1
    %s6701 = scalar_lea.sflag [#allocation3], 1
    %6702 = vsyncpa %s6701, 1

</llo_original>
